<compile_context>
chip_gen: v6e
topology: v6e:2x2x1
jax: 0.10.0
libtpu: 0.0.40
codegen_flags: <defaults>
</compile_context>

<pallas_src>
import functools

import jax
import jax.numpy as jnp
import numpy as np
from jax.experimental import pallas as pl
from jax.experimental.pallas import tpu as pltpu

BN_EPS = 1e-5
LANE = 128
MXU_K = 256          # native contraction depth on v6e/v7x (two passes on v5e)


def _round_up(x, m):
    return (x + m - 1) // m * m


def _vmem_limit_bytes():
    """Generation-aware scoped-VMEM request (leave pipeline headroom)."""
    mib = 1024 * 1024
    try:
        cap = pltpu.get_tpu_info().vmem_capacity_bytes
    except Exception:
        cap = 64 * mib                       # conservative fallback
    if cap >= 96 * mib:                      # v5e / v6e class (128 MiB per core)
        return 96 * mib
    return int(cap * 3 // 4)                 # v7x class (64 MiB) -> 48 MiB


# --------------------------------------------------------------------------- #
# Pallas kernel: conv1 (per-tap-pair dots) + BN1 + ReLU
#                + conv2 (per-tap-pair dots from bf16 scratch) + BN2
#                + shortcut (identity or 1x1 conv + BN) + add + ReLU
# --------------------------------------------------------------------------- #
def _residual_block_kernel(stride, Ho, Wo, Cin_p, Cout_p, has_projection, *refs):
    if has_projection:
        (x_ref, w1_ref, shift1_ref, w2_ref, shift2_ref,
         ws_ref, shift_s_ref, out_ref, y1pad_ref) = refs
    else:
        (x_ref, w1_ref, shift1_ref, w2_ref, shift2_ref,
         out_ref, y1pad_ref) = refs

    s = stride
    M = Ho * Wo

    def conv3x3(load_tap, w_ref, k_p):
        """sum_t tap_t @ w[t*k_p:(t+1)*k_p] via tap-group accumulating MXU dots.

        Groups taps so each dot has K = MXU_K when k_p divides it (tap pairs of
        K=256 for k_p=128 -> native v6e/v7x depth); otherwise one tap per dot.
        No (M, 9*k_p) patch buffer is ever materialized.
        """
        group = max(1, MXU_K // k_p) if MXU_K % k_p == 0 else 1
        acc = None
        t = 0
        while t < 9:
            g = min(group, 9 - t)
            parts = [load_tap(t + u) for u in range(g)]
            lhs = parts[0] if g == 1 else jnp.concatenate(parts, axis=-1)
            rhs = w_ref[t * k_p:(t + g) * k_p, :]
            d = jnp.dot(lhs, rhs, preferred_element_type=jnp.float32)
            acc = d if acc is None else acc + d
            t += g
        return acc

    # ---- conv1 (3x3, stride s) + BN1 + ReLU ---------------------------------
    # Taps are bf16 windows sliced straight out of the stride-phase block
    # (odd column offsets cost only an XLU sublane repack on loads).
    def tap1(t):
        kh, kw = divmod(t, 3)
        ph = (kh % s) * s + (kw % s)
        r0, c0 = kh // s, kw // s
        return x_ref[ph, r0:r0 + Ho, c0:c0 + Wo, :].reshape(M, Cin_p)

    acc1 = conv3x3(tap1, w1_ref, Cin_p)
    y1 = jnp.maximum(acc1 + shift1_ref[...], 0.0)                    # f32 (M, Cout_p)
    y1 = y1.reshape(Ho, Wo, Cout_p).astype(jnp.bfloat16)

    # ---- stage y1 in the zero-padded bf16 scratch ---------------------------
    # Scratch layout (Ho+2, Wo+4, C): y1 lives at rows [1, Ho+1), cols [2, Wo+2)
    # so every bf16 store lands on an even sublane offset with an even size.
    # Halo is re-zeroed every step (see header note on megacore correctness).
    zrow = jnp.zeros((1, Wo + 4, Cout_p), jnp.bfloat16)
    zcol = jnp.zeros((Ho, 2, Cout_p), jnp.bfloat16)
    y1pad_ref[0:1, :, :] = zrow
    y1pad_ref[Ho + 1:Ho + 2, :, :] = zrow
    y1pad_ref[1:Ho + 1, 0:2, :] = zcol
    y1pad_ref[1:Ho + 1, Wo + 2:Wo + 4, :] = zcol
    y1pad_ref[1:Ho + 1, 2:Wo + 2, :] = y1

    # ---- conv2 (3x3, stride 1, pad 1) + BN2 ---------------------------------
    def tap2(t):
        kh, kw = divmod(t, 3)
        return y1pad_ref[kh:kh + Ho, kw + 1:kw + 1 + Wo, :].reshape(M, Cout_p)

    y2 = conv3x3(tap2, w2_ref, Cout_p) + shift2_ref[...]             # f32 (M, Cout_p)

    # ---- shortcut ------------------------------------------------------------
    if has_projection:
        ci, r0 = 1 % s, 1 // s
        xc = x_ref[ci * s + ci, r0:r0 + Ho, r0:r0 + Wo, :].reshape(M, Cin_p)
        sc = jnp.dot(xc, ws_ref[...], preferred_element_type=jnp.float32)
        sc = sc + shift_s_ref[...]
    else:
        # identity (s == 1, Cin == Cout): center tap of the padded input;
        # only this one slice is widened to f32.
        sc = x_ref[0, 1:1 + Ho, 1:1 + Wo, :].reshape(M, Cout_p).astype(jnp.float32)

    out = jnp.maximum(y2 + sc, 0.0).reshape(Ho, Wo, Cout_p)
    out_ref[0] = out.astype(jnp.bfloat16)


# --------------------------------------------------------------------------- #
# Plain-JAX glue: BN folding, phase decomposition, pallas_call
# --------------------------------------------------------------------------- #
def _bn_fold(conv_bias, bn):
    scale = bn['gamma'] / jnp.sqrt(bn['var'] + BN_EPS)
    shift = (conv_bias - bn['mean']) * scale + bn['beta']
    return scale, shift


def residual_block_nhwc(x_nhwc, p, stride):
    """x_nhwc: (N, H, W, Cin_p) bf16, channels already zero-padded to 128 lanes.

    Returns (N, Ho, Wo, Cout_p) bf16 in the same layout, so blocks chain with no
    NCHW transposes / channel un-padding between them.
    """
    N, H, W, Cin_p = x_nhwc.shape
    Cin, Cout = p['cin'], p['cout']
    s = stride
    assert Cin_p == _round_up(Cin, LANE)
    has_projection = (s != 1) or (Cin != Cout)

    Cout_p = _round_up(Cout, LANE)
    Ho = (H + 2 - 3) // s + 1
    Wo = (W + 2 - 3) // s + 1

    # Spatial pad=1, then decompose by the conv1 stride (space-to-batch): the
    # kernel sees all s*s phases of one image per grid step and slices its nine
    # conv taps out of them -- no 9x im2col blow-up in HBM or VMEM.
    xpad = jnp.pad(x_nhwc, ((0, 0), (1, 1), (1, 1), (0, 0)))
    Hp, Wp = H + 2, W + 2
    Hph, Wph = -(-Hp // s), -(-Wp // s)
    xpad = jnp.pad(xpad, ((0, 0), (0, Hph * s - Hp), (0, Wph * s - Wp), (0, 0)))
    xph = (xpad.reshape(N, Hph, s, Wph, s, Cin_p)
               .transpose(0, 2, 4, 1, 3, 5)
               .reshape(N * s * s, Hph, Wph, Cin_p))

    # BN folded into the conv weights host-side; bf16 weights, f32 shifts.
    sc1, shift1 = _bn_fold(p['b1'], p['bn1'])
    w1 = jnp.transpose(p['w1'], (2, 3, 1, 0)) * sc1                    # (3,3,Cin,Cout)
    w1 = jnp.pad(w1, ((0, 0), (0, 0), (0, Cin_p - Cin), (0, Cout_p - Cout)))
    w1 = w1.reshape(9 * Cin_p, Cout_p).astype(jnp.bfloat16)
    shift1 = jnp.pad(shift1, (0, Cout_p - Cout)).reshape(1, Cout_p).astype(jnp.float32)

    sc2, shift2 = _bn_fold(p['b2'], p['bn2'])
    w2 = jnp.transpose(p['w2'], (2, 3, 1, 0)) * sc2                    # (3,3,Cout,Cout)
    w2 = jnp.pad(w2, ((0, 0), (0, 0), (0, Cout_p - Cout), (0, Cout_p - Cout)))
    w2 = w2.reshape(9 * Cout_p, Cout_p).astype(jnp.bfloat16)
    shift2 = jnp.pad(shift2, (0, Cout_p - Cout)).reshape(1, Cout_p).astype(jnp.float32)

    args = [xph, w1, shift1, w2, shift2]
    in_specs = [
        pl.BlockSpec((s * s, Hph, Wph, Cin_p), lambda n: (n, 0, 0, 0)),
        pl.BlockSpec((9 * Cin_p, Cout_p), lambda n: (0, 0)),
        pl.BlockSpec((1, Cout_p), lambda n: (0, 0)),
        pl.BlockSpec((9 * Cout_p, Cout_p), lambda n: (0, 0)),
        pl.BlockSpec((1, Cout_p), lambda n: (0, 0)),
    ]
    if has_projection:
        scs, shift_s = _bn_fold(p['bs'], p['bns'])
        ws = jnp.transpose(p['ws'].reshape(Cout, Cin), (1, 0)) * scs   # (Cin, Cout)
        ws = jnp.pad(ws, ((0, Cin_p - Cin), (0, Cout_p - Cout))).astype(jnp.bfloat16)
        shift_s = (jnp.pad(shift_s, (0, Cout_p - Cout))
                   .reshape(1, Cout_p).astype(jnp.float32))
        args += [ws, shift_s]
        in_specs += [
            pl.BlockSpec((Cin_p, Cout_p), lambda n: (0, 0)),
            pl.BlockSpec((1, Cout_p), lambda n: (0, 0)),
        ]

    kernel = functools.partial(_residual_block_kernel,
                               s, Ho, Wo, Cin_p, Cout_p, has_projection)

    return pl.pallas_call(
        kernel,
        grid=(N,),
        out_shape=jax.ShapeDtypeStruct((N, Ho, Wo, Cout_p), jnp.bfloat16),
        in_specs=in_specs,
        out_specs=pl.BlockSpec((1, Ho, Wo, Cout_p), lambda n: (n, 0, 0, 0)),
        scratch_shapes=[pltpu.VMEM((Ho + 2, Wo + 4, Cout_p), jnp.bfloat16)],
        compiler_params=pltpu.CompilerParams(
            dimension_semantics=("parallel",),          # megacore on v7x
            vmem_limit_bytes=_vmem_limit_bytes()),
    )(*args)


# --------------------------------------------------------------------------- #
# NCHW boundary helpers (only used at the ends of a block stack)
# --------------------------------------------------------------------------- #
def nchw_to_lane_padded_nhwc(x_nchw):
    N, C, H, W = x_nchw.shape
    c_p = _round_up(C, LANE)
    x = jnp.transpose(x_nchw, (0, 2, 3, 1))
    x = jnp.pad(x, ((0, 0), (0, 0), (0, 0), (0, c_p - C)))
    return x.astype(jnp.bfloat16)


def lane_padded_nhwc_to_nchw(x_nhwc, cout):
    return jnp.transpose(x_nhwc[..., :cout].astype(jnp.float32), (0, 3, 1, 2))


def residual_block(x_nchw, p, stride):
    """Standalone NCHW-in / NCHW-out wrapper matching the PyTorch module."""
    x = nchw_to_lane_padded_nhwc(x_nchw)
    y = residual_block_nhwc(x, p, stride)
    return lane_padded_nhwc_to_nchw(y, p['cout'])


# --------------------------------------------------------------------------- #
# Deterministic parameter init (shapes follow the PyTorch module's __init__)
# --------------------------------------------------------------------------- #
def init_params(key, cin, cout, stride):
    def bn_params(k):
        kg, kb, km, kv = jax.random.split(k, 4)
        return dict(gamma=1.0 + 0.1 * jax.random.normal(kg, (cout,), jnp.float32),
                    beta=0.1 * jax.random.normal(kb, (cout,), jnp.float32),
                    mean=0.05 * jax.random.normal(km, (cout,), jnp.float32),
                    var=1.0 + 0.2 * jax.random.uniform(kv, (cout,), jnp.float32))

    ks = jax.random.split(key, 7)
    p = dict(
        w1=0.1 * jax.random.normal(ks[0], (cout, cin, 3, 3), jnp.float32),
        b1=0.1 * jax.random.normal(ks[1], (cout,), jnp.float32),
        bn1=bn_params(ks[2]),
        w2=0.1 * jax.random.normal(ks[3], (cout, cout, 3, 3), jnp.float32),
        b2=0.1 * jax.random.normal(ks[4], (cout,), jnp.float32),
        bn2=bn_params(ks[5]),
        cin=cin, cout=cout,
    )
    if stride != 1 or cin != cout:
        ks2 = jax.random.split(ks[6], 3)
        p['ws'] = 0.1 * jax.random.normal(ks2[0], (cout, cin, 1, 1), jnp.float32)
        p['bs'] = 0.1 * jax.random.normal(ks2[1], (cout,), jnp.float32)
        p['bns'] = bn_params(ks2[2])
    return p


# --------------------------------------------------------------------------- #
# Pure-JAX reference (lax.conv, f32) for correctness checking
# --------------------------------------------------------------------------- #
def _ref_forward(x, p, stride):
    def conv(x, w, b, s, pad):
        y = jax.lax.conv_general_dilated(
            x, w, window_strides=(s, s), padding=[(pad, pad), (pad, pad)],
            dimension_numbers=('NCHW', 'OIHW', 'NCHW'),
            precision=jax.lax.Precision.HIGHEST)
        return y + b[None, :, None, None]

    def bn(x, b):
        return ((x - b['mean'][None, :, None, None])
                / jnp.sqrt(b['var'][None, :, None, None] + BN_EPS)
                * b['gamma'][None, :, None, None]
                + b['beta'][None, :, None, None])

    left = jnp.maximum(bn(conv(x, p['w1'], p['b1'], stride, 1), p['bn1']), 0.0)
    left = bn(conv(left, p['w2'], p['b2'], 1, 1), p['bn2'])
    if 'ws' in p:
        sc = bn(conv(x, p['ws'], p['bs'], stride, 0), p['bns'])
    else:
        sc = x
    return jnp.maximum(left + sc, 0.0)


if __name__ == "__main__":
    key = jax.random.PRNGKey(0)
    kx, k1, k2 = jax.random.split(key, 3)

    # NCHW input, like the PyTorch module
    x = jax.random.normal(kx, (2, 4, 16, 16), jnp.float32)

    # Block 1: in=4, out=8, stride=2  -> projection (1x1 conv + BN) shortcut
    params1 = init_params(k1, 4, 8, stride=2)
    # Block 2: in=8, out=8, stride=1  -> identity shortcut
    params2 = init_params(k2, 8, 8, stride=1)

    # Chain the blocks in the kernel's native layout (bf16 NHWC, lane-padded):
    # no NCHW transpose / un-pad HBM round trip between blocks.
    h0 = nchw_to_lane_padded_nhwc(x)
    h1 = residual_block_nhwc(h0, params1, stride=2)      # (2, 8, 8, 128) bf16
    h2 = residual_block_nhwc(h1, params2, stride=1)      # (2, 8, 8, 128) bf16
    jax.block_until_ready(h2)

    out1 = lane_padded_nhwc_to_nchw(h1, 8)               # (2, 8, 8, 8) f32
    out2 = lane_padded_nhwc_to_nchw(h2, 8)

    ref1 = _ref_forward(x, params1, 2)
    ref2_chain = _ref_forward(ref1, params2, 1)          # fully-f32 chained ref
    ref2_local = _ref_forward(out1, params2, 1)          # isolates block-2 error

    # bf16 activations/weights with f32 accumulation vs f32 reference.
    np.testing.assert_allclose(np.asarray(out1), np.asarray(ref1),
                               rtol=5e-2, atol=5e-2)
    np.testing.assert_allclose(np.asarray(out2), np.asarray(ref2_local),
                               rtol=5e-2, atol=5e-2)
    np.testing.assert_allclose(np.asarray(out2), np.asarray(ref2_chain),
                               rtol=1e-1, atol=1e-1)

    print("KERNEL_OK")
</pallas_src>

<mosaic_0001>
module attributes {stable_mosaic.version = 11 : i64} {
  func.func @_residual_block_kernel(%arg0: i32, %arg1: memref<4x9x9x128xbf16, #tpu.memory_space<vmem>>, %arg2: memref<1152x128xbf16, #tpu.memory_space<vmem>>, %arg3: memref<1x128xf32, #tpu.memory_space<vmem>>, %arg4: memref<1152x128xbf16, #tpu.memory_space<vmem>>, %arg5: memref<1x128xf32, #tpu.memory_space<vmem>>, %arg6: memref<128x128xbf16, #tpu.memory_space<vmem>>, %arg7: memref<1x128xf32, #tpu.memory_space<vmem>>, %arg8: memref<1x8x8x128xbf16, #tpu.memory_space<vmem>>, %arg9: memref<10x12x128xbf16, #tpu.memory_space<vmem>>) attributes {dimension_semantics = [#tpu.dimension_semantics<parallel>], iteration_bounds = array<i64: 2>, scalar_prefetch = 0 : i64, scratch_operands = 1 : i64, tpu.core_type = #tpu.core_type<tc>, window_params = [{transform_indices = @transform_0, window_bounds = array<i64: 4, 9, 9, 128>}, {pipeline_mode = #tpu.pipeline_mode<synchronous>, transform_indices = @transform_1, window_bounds = array<i64: 1152, 128>}, {pipeline_mode = #tpu.pipeline_mode<synchronous>, transform_indices = @transform_2, window_bounds = array<i64: 1, 128>}, {pipeline_mode = #tpu.pipeline_mode<synchronous>, transform_indices = @transform_3, window_bounds = array<i64: 1152, 128>}, {pipeline_mode = #tpu.pipeline_mode<synchronous>, transform_indices = @transform_4, window_bounds = array<i64: 1, 128>}, {pipeline_mode = #tpu.pipeline_mode<synchronous>, transform_indices = @transform_5, window_bounds = array<i64: 128, 128>}, {pipeline_mode = #tpu.pipeline_mode<synchronous>, transform_indices = @transform_6, window_bounds = array<i64: 1, 128>}, {transform_indices = @transform_7, window_bounds = array<i64: 1, 8, 8, 128>}]} {
    %c0 = arith.constant 0 : index
    %c0_0 = arith.constant 0 : index
    %c0_1 = arith.constant 0 : index
    %c0_2 = arith.constant 0 : index
    %0 = vector.load %arg1[%c0, %c0_0, %c0_1, %c0_2] : memref<4x9x9x128xbf16, #tpu.memory_space<vmem>>, vector<1x8x8x128xbf16>
    %1 = vector.shape_cast %0 : vector<1x8x8x128xbf16> to vector<8x8x128xbf16>
    %2 = vector.shape_cast %1 : vector<8x8x128xbf16> to vector<64x128xbf16>
    %c1 = arith.constant 1 : index
    %c0_3 = arith.constant 0 : index
    %c0_4 = arith.constant 0 : index
    %c0_5 = arith.constant 0 : index
    %3 = vector.load %arg1[%c1, %c0_3, %c0_4, %c0_5] : memref<4x9x9x128xbf16, #tpu.memory_space<vmem>>, vector<1x8x8x128xbf16>
    %4 = vector.shape_cast %3 : vector<1x8x8x128xbf16> to vector<8x8x128xbf16>
    %5 = vector.shape_cast %4 : vector<8x8x128xbf16> to vector<64x128xbf16>
    %6 = tpu.concatenate %2, %5 in 1 : vector<64x128xbf16>, vector<64x128xbf16> -> vector<64x256xbf16>
    %c0_6 = arith.constant 0 : index
    %c0_7 = arith.constant 0 : index
    %7 = vector.load %arg2[%c0_6, %c0_7] : memref<1152x128xbf16, #tpu.memory_space<vmem>>, vector<256x128xbf16>
    %cst = arith.constant dense<0.000000e+00> : vector<64x128xf32>
    %8 = tpu.matmul %6, %7, %cst {dimension_numbers = #tpu.dot_dimension_numbers<[1], [0], [0], [1], [0, 0, 1, 1], [], []>} : vector<64x256xbf16>, vector<256x128xbf16>, vector<64x128xf32> -> vector<64x128xf32>
    %c0_8 = arith.constant 0 : index
    %c0_9 = arith.constant 0 : index
    %c1_10 = arith.constant 1 : index
    %c0_11 = arith.constant 0 : index
    %9 = vector.load %arg1[%c0_8, %c0_9, %c1_10, %c0_11] : memref<4x9x9x128xbf16, #tpu.memory_space<vmem>>, vector<1x8x8x128xbf16>
    %10 = vector.shape_cast %9 : vector<1x8x8x128xbf16> to vector<8x8x128xbf16>
    %11 = vector.shape_cast %10 : vector<8x8x128xbf16> to vector<64x128xbf16>
    %c2 = arith.constant 2 : index
    %c0_12 = arith.constant 0 : index
    %c0_13 = arith.constant 0 : index
    %c0_14 = arith.constant 0 : index
    %12 = vector.load %arg1[%c2, %c0_12, %c0_13, %c0_14] : memref<4x9x9x128xbf16, #tpu.memory_space<vmem>>, vector<1x8x8x128xbf16>
    %13 = vector.shape_cast %12 : vector<1x8x8x128xbf16> to vector<8x8x128xbf16>
    %14 = vector.shape_cast %13 : vector<8x8x128xbf16> to vector<64x128xbf16>
    %15 = tpu.concatenate %11, %14 in 1 : vector<64x128xbf16>, vector<64x128xbf16> -> vector<64x256xbf16>
    %c256 = arith.constant 256 : index
    %c0_15 = arith.constant 0 : index
    %16 = vector.load %arg2[%c256, %c0_15] : memref<1152x128xbf16, #tpu.memory_space<vmem>>, vector<256x128xbf16>
    %cst_16 = arith.constant dense<0.000000e+00> : vector<64x128xf32>
    %17 = tpu.matmul %15, %16, %cst_16 {dimension_numbers = #tpu.dot_dimension_numbers<[1], [0], [0], [1], [0, 0, 1, 1], [], []>} : vector<64x256xbf16>, vector<256x128xbf16>, vector<64x128xf32> -> vector<64x128xf32>
    %18 = arith.addf %8, %17 : vector<64x128xf32>
    %c3 = arith.constant 3 : index
    %c0_17 = arith.constant 0 : index
    %c0_18 = arith.constant 0 : index
    %c0_19 = arith.constant 0 : index
    %19 = vector.load %arg1[%c3, %c0_17, %c0_18, %c0_19] : memref<4x9x9x128xbf16, #tpu.memory_space<vmem>>, vector<1x8x8x128xbf16>
    %20 = vector.shape_cast %19 : vector<1x8x8x128xbf16> to vector<8x8x128xbf16>
    %21 = vector.shape_cast %20 : vector<8x8x128xbf16> to vector<64x128xbf16>
    %c2_20 = arith.constant 2 : index
    %c0_21 = arith.constant 0 : index
    %c1_22 = arith.constant 1 : index
    %c0_23 = arith.constant 0 : index
    %22 = vector.load %arg1[%c2_20, %c0_21, %c1_22, %c0_23] : memref<4x9x9x128xbf16, #tpu.memory_space<vmem>>, vector<1x8x8x128xbf16>
    %23 = vector.shape_cast %22 : vector<1x8x8x128xbf16> to vector<8x8x128xbf16>
    %24 = vector.shape_cast %23 : vector<8x8x128xbf16> to vector<64x128xbf16>
    %25 = tpu.concatenate %21, %24 in 1 : vector<64x128xbf16>, vector<64x128xbf16> -> vector<64x256xbf16>
    %c512 = arith.constant 512 : index
    %c0_24 = arith.constant 0 : index
    %26 = vector.load %arg2[%c512, %c0_24] : memref<1152x128xbf16, #tpu.memory_space<vmem>>, vector<256x128xbf16>
    %cst_25 = arith.constant dense<0.000000e+00> : vector<64x128xf32>
    %27 = tpu.matmul %25, %26, %cst_25 {dimension_numbers = #tpu.dot_dimension_numbers<[1], [0], [0], [1], [0, 0, 1, 1], [], []>} : vector<64x256xbf16>, vector<256x128xbf16>, vector<64x128xf32> -> vector<64x128xf32>
    %28 = arith.addf %18, %27 : vector<64x128xf32>
    %c0_26 = arith.constant 0 : index
    %c1_27 = arith.constant 1 : index
    %c0_28 = arith.constant 0 : index
    %c0_29 = arith.constant 0 : index
    %29 = vector.load %arg1[%c0_26, %c1_27, %c0_28, %c0_29] : memref<4x9x9x128xbf16, #tpu.memory_space<vmem>>, vector<1x8x8x128xbf16>
    %30 = vector.shape_cast %29 : vector<1x8x8x128xbf16> to vector<8x8x128xbf16>
    %31 = vector.shape_cast %30 : vector<8x8x128xbf16> to vector<64x128xbf16>
    %c1_30 = arith.constant 1 : index
    %c1_31 = arith.constant 1 : index
    %c0_32 = arith.constant 0 : index
    %c0_33 = arith.constant 0 : index
    %32 = vector.load %arg1[%c1_30, %c1_31, %c0_32, %c0_33] : memref<4x9x9x128xbf16, #tpu.memory_space<vmem>>, vector<1x8x8x128xbf16>
    %33 = vector.shape_cast %32 : vector<1x8x8x128xbf16> to vector<8x8x128xbf16>
    %34 = vector.shape_cast %33 : vector<8x8x128xbf16> to vector<64x128xbf16>
    %35 = tpu.concatenate %31, %34 in 1 : vector<64x128xbf16>, vector<64x128xbf16> -> vector<64x256xbf16>
    %c768 = arith.constant 768 : index
    %c0_34 = arith.constant 0 : index
    %36 = vector.load %arg2[%c768, %c0_34] : memref<1152x128xbf16, #tpu.memory_space<vmem>>, vector<256x128xbf16>
    %cst_35 = arith.constant dense<0.000000e+00> : vector<64x128xf32>
    %37 = tpu.matmul %35, %36, %cst_35 {dimension_numbers = #tpu.dot_dimension_numbers<[1], [0], [0], [1], [0, 0, 1, 1], [], []>} : vector<64x256xbf16>, vector<256x128xbf16>, vector<64x128xf32> -> vector<64x128xf32>
    %38 = arith.addf %28, %37 : vector<64x128xf32>
    %c0_36 = arith.constant 0 : index
    %c1_37 = arith.constant 1 : index
    %c1_38 = arith.constant 1 : index
    %c0_39 = arith.constant 0 : index
    %39 = vector.load %arg1[%c0_36, %c1_37, %c1_38, %c0_39] : memref<4x9x9x128xbf16, #tpu.memory_space<vmem>>, vector<1x8x8x128xbf16>
    %40 = vector.shape_cast %39 : vector<1x8x8x128xbf16> to vector<8x8x128xbf16>
    %41 = vector.shape_cast %40 : vector<8x8x128xbf16> to vector<64x128xbf16>
    %c1024 = arith.constant 1024 : index
    %c0_40 = arith.constant 0 : index
    %42 = vector.load %arg2[%c1024, %c0_40] : memref<1152x128xbf16, #tpu.memory_space<vmem>>, vector<128x128xbf16>
    %cst_41 = arith.constant dense<0.000000e+00> : vector<64x128xf32>
    %43 = tpu.matmul %41, %42, %cst_41 {dimension_numbers = #tpu.dot_dimension_numbers<[1], [0], [0], [1], [0, 0, 1, 1], [], []>} : vector<64x128xbf16>, vector<128x128xbf16>, vector<64x128xf32> -> vector<64x128xf32>
    %44 = arith.addf %38, %43 : vector<64x128xf32>
    %c0_42 = arith.constant 0 : index
    %c0_43 = arith.constant 0 : index
    %45 = vector.load %arg3[%c0_42, %c0_43] : memref<1x128xf32, #tpu.memory_space<vmem>>, vector<1x128xf32>
    %46 = vector.broadcast %45 : vector<1x128xf32> to vector<64x128xf32>
    %47 = arith.addf %44, %46 : vector<64x128xf32>
    %cst_44 = arith.constant 0.000000e+00 : f32
    %48 = vector.broadcast %cst_44 : f32 to vector<64x128xf32>
    %49 = arith.maximumf %47, %48 : vector<64x128xf32>
    %50 = vector.shape_cast %49 : vector<64x128xf32> to vector<8x8x128xf32>
    %51 = arith.truncf %50 : vector<8x8x128xf32> to vector<8x8x128xbf16>
    %cst_45 = arith.constant 0.000000e+00 : bf16
    %52 = vector.broadcast %cst_45 : bf16 to vector<1x12x128xbf16>
    %cst_46 = arith.constant 0.000000e+00 : bf16
    %53 = vector.broadcast %cst_46 : bf16 to vector<8x2x128xbf16>
    %c0_47 = arith.constant 0 : index
    %c0_48 = arith.constant 0 : index
    %c0_49 = arith.constant 0 : index
    %54 = vector.load %arg9[%c0_47, %c0_48, %c0_49] : memref<10x12x128xbf16, #tpu.memory_space<vmem>>, vector<1x12x128xbf16>
    tpu.vector_store %arg9[%c0_47, %c0_48, %c0_49], %52 {strides = array<i32>} : memref<10x12x128xbf16, #tpu.memory_space<vmem>>, vector<1x12x128xbf16>,
    %c9 = arith.constant 9 : index
    %c0_50 = arith.constant 0 : index
    %c0_51 = arith.constant 0 : index
    %55 = vector.load %arg9[%c9, %c0_50, %c0_51] : memref<10x12x128xbf16, #tpu.memory_space<vmem>>, vector<1x12x128xbf16>
    tpu.vector_store %arg9[%c9, %c0_50, %c0_51], %52 {strides = array<i32>} : memref<10x12x128xbf16, #tpu.memory_space<vmem>>, vector<1x12x128xbf16>,
    %c1_52 = arith.constant 1 : index
    %c0_53 = arith.constant 0 : index
    %c0_54 = arith.constant 0 : index
    %56 = vector.load %arg9[%c1_52, %c0_53, %c0_54] : memref<10x12x128xbf16, #tpu.memory_space<vmem>>, vector<8x2x128xbf16>
    tpu.vector_store %arg9[%c1_52, %c0_53, %c0_54], %53 {strides = array<i32>} : memref<10x12x128xbf16, #tpu.memory_space<vmem>>, vector<8x2x128xbf16>,
    %c1_55 = arith.constant 1 : index
    %c10 = arith.constant 10 : index
    %c0_56 = arith.constant 0 : index
    %57 = vector.load %arg9[%c1_55, %c10, %c0_56] : memref<10x12x128xbf16, #tpu.memory_space<vmem>>, vector<8x2x128xbf16>
    tpu.vector_store %arg9[%c1_55, %c10, %c0_56], %53 {strides = array<i32>} : memref<10x12x128xbf16, #tpu.memory_space<vmem>>, vector<8x2x128xbf16>,
    %c1_57 = arith.constant 1 : index
    %c2_58 = arith.constant 2 : index
    %c0_59 = arith.constant 0 : index
    %58 = vector.load %arg9[%c1_57, %c2_58, %c0_59] : memref<10x12x128xbf16, #tpu.memory_space<vmem>>, vector<8x8x128xbf16>
    tpu.vector_store %arg9[%c1_57, %c2_58, %c0_59], %51 {strides = array<i32>} : memref<10x12x128xbf16, #tpu.memory_space<vmem>>, vector<8x8x128xbf16>,
    %c0_60 = arith.constant 0 : index
    %c1_61 = arith.constant 1 : index
    %c0_62 = arith.constant 0 : index
    %59 = vector.load %arg9[%c0_60, %c1_61, %c0_62] : memref<10x12x128xbf16, #tpu.memory_space<vmem>>, vector<8x8x128xbf16>
    %60 = vector.shape_cast %59 : vector<8x8x128xbf16> to vector<64x128xbf16>
    %c0_63 = arith.constant 0 : index
    %c2_64 = arith.constant 2 : index
    %c0_65 = arith.constant 0 : index
    %61 = vector.load %arg9[%c0_63, %c2_64, %c0_65] : memref<10x12x128xbf16, #tpu.memory_space<vmem>>, vector<8x8x128xbf16>
    %62 = vector.shape_cast %61 : vector<8x8x128xbf16> to vector<64x128xbf16>
    %63 = tpu.concatenate %60, %62 in 1 : vector<64x128xbf16>, vector<64x128xbf16> -> vector<64x256xbf16>
    %c0_66 = arith.constant 0 : index
    %c0_67 = arith.constant 0 : index
    %64 = vector.load %arg4[%c0_66, %c0_67] : memref<1152x128xbf16, #tpu.memory_space<vmem>>, vector<256x128xbf16>
    %cst_68 = arith.constant dense<0.000000e+00> : vector<64x128xf32>
    %65 = tpu.matmul %63, %64, %cst_68 {dimension_numbers = #tpu.dot_dimension_numbers<[1], [0], [0], [1], [0, 0, 1, 1], [], []>} : vector<64x256xbf16>, vector<256x128xbf16>, vector<64x128xf32> -> vector<64x128xf32>
    %c0_69 = arith.constant 0 : index
    %c3_70 = arith.constant 3 : index
    %c0_71 = arith.constant 0 : index
    %66 = vector.load %arg9[%c0_69, %c3_70, %c0_71] : memref<10x12x128xbf16, #tpu.memory_space<vmem>>, vector<8x8x128xbf16>
    %67 = vector.shape_cast %66 : vector<8x8x128xbf16> to vector<64x128xbf16>
    %c1_72 = arith.constant 1 : index
    %c1_73 = arith.constant 1 : index
    %c0_74 = arith.constant 0 : index
    %68 = vector.load %arg9[%c1_72, %c1_73, %c0_74] : memref<10x12x128xbf16, #tpu.memory_space<vmem>>, vector<8x8x128xbf16>
    %69 = vector.shape_cast %68 : vector<8x8x128xbf16> to vector<64x128xbf16>
    %70 = tpu.concatenate %67, %69 in 1 : vector<64x128xbf16>, vector<64x128xbf16> -> vector<64x256xbf16>
    %c256_75 = arith.constant 256 : index
    %c0_76 = arith.constant 0 : index
    %71 = vector.load %arg4[%c256_75, %c0_76] : memref<1152x128xbf16, #tpu.memory_space<vmem>>, vector<256x128xbf16>
    %cst_77 = arith.constant dense<0.000000e+00> : vector<64x128xf32>
    %72 = tpu.matmul %70, %71, %cst_77 {dimension_numbers = #tpu.dot_dimension_numbers<[1], [0], [0], [1], [0, 0, 1, 1], [], []>} : vector<64x256xbf16>, vector<256x128xbf16>, vector<64x128xf32> -> vector<64x128xf32>
    %73 = arith.addf %65, %72 : vector<64x128xf32>
    %c1_78 = arith.constant 1 : index
    %c2_79 = arith.constant 2 : index
    %c0_80 = arith.constant 0 : index
    %74 = vector.load %arg9[%c1_78, %c2_79, %c0_80] : memref<10x12x128xbf16, #tpu.memory_space<vmem>>, vector<8x8x128xbf16>
    %75 = vector.shape_cast %74 : vector<8x8x128xbf16> to vector<64x128xbf16>
    %c1_81 = arith.constant 1 : index
    %c3_82 = arith.constant 3 : index
    %c0_83 = arith.constant 0 : index
    %76 = vector.load %arg9[%c1_81, %c3_82, %c0_83] : memref<10x12x128xbf16, #tpu.memory_space<vmem>>, vector<8x8x128xbf16>
    %77 = vector.shape_cast %76 : vector<8x8x128xbf16> to vector<64x128xbf16>
    %78 = tpu.concatenate %75, %77 in 1 : vector<64x128xbf16>, vector<64x128xbf16> -> vector<64x256xbf16>
    %c512_84 = arith.constant 512 : index
    %c0_85 = arith.constant 0 : index
    %79 = vector.load %arg4[%c512_84, %c0_85] : memref<1152x128xbf16, #tpu.memory_space<vmem>>, vector<256x128xbf16>
    %cst_86 = arith.constant dense<0.000000e+00> : vector<64x128xf32>
    %80 = tpu.matmul %78, %79, %cst_86 {dimension_numbers = #tpu.dot_dimension_numbers<[1], [0], [0], [1], [0, 0, 1, 1], [], []>} : vector<64x256xbf16>, vector<256x128xbf16>, vector<64x128xf32> -> vector<64x128xf32>
    %81 = arith.addf %73, %80 : vector<64x128xf32>
    %c2_87 = arith.constant 2 : index
    %c1_88 = arith.constant 1 : index
    %c0_89 = arith.constant 0 : index
    %82 = vector.load %arg9[%c2_87, %c1_88, %c0_89] : memref<10x12x128xbf16, #tpu.memory_space<vmem>>, vector<8x8x128xbf16>
    %83 = vector.shape_cast %82 : vector<8x8x128xbf16> to vector<64x128xbf16>
    %c2_90 = arith.constant 2 : index
    %c2_91 = arith.constant 2 : index
    %c0_92 = arith.constant 0 : index
    %84 = vector.load %arg9[%c2_90, %c2_91, %c0_92] : memref<10x12x128xbf16, #tpu.memory_space<vmem>>, vector<8x8x128xbf16>
    %85 = vector.shape_cast %84 : vector<8x8x128xbf16> to vector<64x128xbf16>
    %86 = tpu.concatenate %83, %85 in 1 : vector<64x128xbf16>, vector<64x128xbf16> -> vector<64x256xbf16>
    %c768_93 = arith.constant 768 : index
    %c0_94 = arith.constant 0 : index
    %87 = vector.load %arg4[%c768_93, %c0_94] : memref<1152x128xbf16, #tpu.memory_space<vmem>>, vector<256x128xbf16>
    %cst_95 = arith.constant dense<0.000000e+00> : vector<64x128xf32>
    %88 = tpu.matmul %86, %87, %cst_95 {dimension_numbers = #tpu.dot_dimension_numbers<[1], [0], [0], [1], [0, 0, 1, 1], [], []>} : vector<64x256xbf16>, vector<256x128xbf16>, vector<64x128xf32> -> vector<64x128xf32>
    %89 = arith.addf %81, %88 : vector<64x128xf32>
    %c2_96 = arith.constant 2 : index
    %c3_97 = arith.constant 3 : index
    %c0_98 = arith.constant 0 : index
    %90 = vector.load %arg9[%c2_96, %c3_97, %c0_98] : memref<10x12x128xbf16, #tpu.memory_space<vmem>>, vector<8x8x128xbf16>
    %91 = vector.shape_cast %90 : vector<8x8x128xbf16> to vector<64x128xbf16>
    %c1024_99 = arith.constant 1024 : index
    %c0_100 = arith.constant 0 : index
    %92 = vector.load %arg4[%c1024_99, %c0_100] : memref<1152x128xbf16, #tpu.memory_space<vmem>>, vector<128x128xbf16>
    %cst_101 = arith.constant dense<0.000000e+00> : vector<64x128xf32>
    %93 = tpu.matmul %91, %92, %cst_101 {dimension_numbers = #tpu.dot_dimension_numbers<[1], [0], [0], [1], [0, 0, 1, 1], [], []>} : vector<64x128xbf16>, vector<128x128xbf16>, vector<64x128xf32> -> vector<64x128xf32>
    %94 = arith.addf %89, %93 : vector<64x128xf32>
    %c0_102 = arith.constant 0 : index
    %c0_103 = arith.constant 0 : index
    %95 = vector.load %arg5[%c0_102, %c0_103] : memref<1x128xf32, #tpu.memory_space<vmem>>, vector<1x128xf32>
    %96 = vector.broadcast %95 : vector<1x128xf32> to vector<64x128xf32>
    %97 = arith.addf %94, %96 : vector<64x128xf32>
    %c3_104 = arith.constant 3 : index
    %c0_105 = arith.constant 0 : index
    %c0_106 = arith.constant 0 : index
    %c0_107 = arith.constant 0 : index
    %98 = vector.load %arg1[%c3_104, %c0_105, %c0_106, %c0_107] : memref<4x9x9x128xbf16, #tpu.memory_space<vmem>>, vector<1x8x8x128xbf16>
    %99 = vector.shape_cast %98 : vector<1x8x8x128xbf16> to vector<8x8x128xbf16>
    %100 = vector.shape_cast %99 : vector<8x8x128xbf16> to vector<64x128xbf16>
    %c0_108 = arith.constant 0 : index
    %c0_109 = arith.constant 0 : index
    %101 = vector.load %arg6[%c0_108, %c0_109] : memref<128x128xbf16, #tpu.memory_space<vmem>>, vector<128x128xbf16>
    %cst_110 = arith.constant dense<0.000000e+00> : vector<64x128xf32>
    %102 = tpu.matmul %100, %101, %cst_110 {dimension_numbers = #tpu.dot_dimension_numbers<[1], [0], [0], [1], [0, 0, 1, 1], [], []>} : vector<64x128xbf16>, vector<128x128xbf16>, vector<64x128xf32> -> vector<64x128xf32>
    %c0_111 = arith.constant 0 : index
    %c0_112 = arith.constant 0 : index
    %103 = vector.load %arg7[%c0_111, %c0_112] : memref<1x128xf32, #tpu.memory_space<vmem>>, vector<1x128xf32>
    %104 = vector.broadcast %103 : vector<1x128xf32> to vector<64x128xf32>
    %105 = arith.addf %102, %104 : vector<64x128xf32>
    %106 = arith.addf %97, %105 : vector<64x128xf32>
    %cst_113 = arith.constant 0.000000e+00 : f32
    %107 = vector.broadcast %cst_113 : f32 to vector<64x128xf32>
    %108 = arith.maximumf %106, %107 : vector<64x128xf32>
    %109 = vector.shape_cast %108 : vector<64x128xf32> to vector<8x8x128xf32>
    %110 = arith.truncf %109 : vector<8x8x128xf32> to vector<8x8x128xbf16>
    %c0_114 = arith.constant 0 : index
    %c0_115 = arith.constant 0 : index
    %c0_116 = arith.constant 0 : index
    %c0_117 = arith.constant 0 : index
    %111 = vector.load %arg8[%c0_114, %c0_115, %c0_116, %c0_117] : memref<1x8x8x128xbf16, #tpu.memory_space<vmem>>, vector<1x8x8x128xbf16>
    %112 = vector.shape_cast %111 : vector<1x8x8x128xbf16> to vector<8x8x128xbf16>
    %113 = vector.shape_cast %110 : vector<8x8x128xbf16> to vector<1x8x8x128xbf16>
    tpu.vector_store %arg8[%c0_114, %c0_115, %c0_116, %c0_117], %113 {strides = array<i32>} : memref<1x8x8x128xbf16, #tpu.memory_space<vmem>>, vector<1x8x8x128xbf16>,
    return
  }
  func.func @transform_0(%arg0: i32) -> (i32, i32, i32, i32) {
    %c0_i32 = arith.constant 0 : i32
    %c0_i32_0 = arith.constant 0 : i32
    %c0_i32_1 = arith.constant 0 : i32
    %c0_i32_2 = arith.constant 0 : i32
    return %arg0, %c0_i32, %c0_i32_0, %c0_i32_1 : i32, i32, i32, i32
  }
  func.func @transform_1(%arg0: i32) -> (i32, i32) {
    %c0_i32 = arith.constant 0 : i32
    %c0_i32_0 = arith.constant 0 : i32
    %c0_i32_1 = arith.constant 0 : i32
    return %c0_i32, %c0_i32_0 : i32, i32
  }
  func.func @transform_2(%arg0: i32) -> (i32, i32) {
    %c0_i32 = arith.constant 0 : i32
    %c0_i32_0 = arith.constant 0 : i32
    %c0_i32_1 = arith.constant 0 : i32
    return %c0_i32, %c0_i32_0 : i32, i32
  }
  func.func @transform_3(%arg0: i32) -> (i32, i32) {
    %c0_i32 = arith.constant 0 : i32
    %c0_i32_0 = arith.constant 0 : i32
    %c0_i32_1 = arith.constant 0 : i32
    return %c0_i32, %c0_i32_0 : i32, i32
  }
  func.func @transform_4(%arg0: i32) -> (i32, i32) {
    %c0_i32 = arith.constant 0 : i32
    %c0_i32_0 = arith.constant 0 : i32
    %c0_i32_1 = arith.constant 0 : i32
    return %c0_i32, %c0_i32_0 : i32, i32
  }
  func.func @transform_5(%arg0: i32) -> (i32, i32) {
    %c0_i32 = arith.constant 0 : i32
    %c0_i32_0 = arith.constant 0 : i32
    %c0_i32_1 = arith.constant 0 : i32
    return %c0_i32, %c0_i32_0 : i32, i32
  }
  func.func @transform_6(%arg0: i32) -> (i32, i32) {
    %c0_i32 = arith.constant 0 : i32
    %c0_i32_0 = arith.constant 0 : i32
    %c0_i32_1 = arith.constant 0 : i32
    return %c0_i32, %c0_i32_0 : i32, i32
  }
  func.func @transform_7(%arg0: i32) -> (i32, i32, i32, i32) {
    %c0_i32 = arith.constant 0 : i32
    %c0_i32_0 = arith.constant 0 : i32
    %c0_i32_1 = arith.constant 0 : i32
    %c0_i32_2 = arith.constant 0 : i32
    return %arg0, %c0_i32, %c0_i32_0, %c0_i32_1 : i32, i32, i32, i32
  }
}

</mosaic_0001>

<llo_original>
// kernel: tpu_custom_call.1
$region0: #{tpu_custom_call.1}
  #allocation0 [shape = 'u32[]', space=smem, size = 0x4, offset = 0x4, fixed_abs, tag = 'smem constant byte address 0x4 - core index']
  #allocation1 [shape = 'u32[144,128]{1,0:T(1,128)}', space=vmem, size = 0x12000, scoped, tag = 'internal scratch']
  #allocation2 [shape = 'bf16[10,12,128]{2,1,0:T(8,128)(2,1)}', space=vmem, size = 0xa000, scoped, tag = 'scratch operand']
  %s0 = inlined_call_operand.vmem [shape: bf16[8,9,9,128], index: 0, kind: input, shape index: {}]
  %s1 = inlined_call_operand.vmem [shape: bf16[1152,128], index: 1, kind: input, shape index: {}]
  %s2 = inlined_call_operand.vmem [shape: f32[1,128], index: 2, kind: input, shape index: {}]
  %s3 = inlined_call_operand.hbm [shape: bf16[1152,128], index: 3, kind: input, shape index: {}]
  %s4 = inlined_call_operand.vmem [shape: f32[1,128], index: 4, kind: input, shape index: {}]
  %s5 = inlined_call_operand.vmem [shape: bf16[128,128], index: 5, kind: input, shape index: {}]
  %s6 = inlined_call_operand.vmem [shape: f32[1,128], index: 6, kind: input, shape index: {}]
  %s7 = inlined_call_operand.hbm [shape: bf16[2,8,8,128], index: 7, kind: output, shape index: {}]
  %s8 = sld [smem:[#allocation0]]
  $region65: #{tpu_custom_call.1} parent=0
    _
  %s10 = ssub.s32 1, %s8
  %s11 = scalar_select 0, %s10, %s8
  $region1: #{tpu_custom_call.1} parent=0
    #allocation3 [shape = 'u8[294912]{0}', space=vmem, size = 0x48000, scoped, tag = 'input window, operand 3, single buffered']
    #allocation4 [shape = 's32[2]{0}', space=sflag, size = 0x8, scoped, tag = 'scoped memory for tpu_custom_call.1']
    #allocation5 [shape = 's32[2]{0}', space=sflag, size = 0x8, scoped, tag = 'scoped memory for tpu_custom_call.1']
    #allocation6 [shape = 'u8[32768]{0}', space=vmem, size = 0x8000, scoped, tag = 'output window, operand 0']
    %12 = vsyncpa [#allocation4], 0
    %13 = vsyncpa [#allocation5], 0
    %s14 = scalar_lea.sflag [#allocation5], 1
    %15 = vsyncpa %s14, 0
    loop: start=0, step=1, limit=4
    $region2: #{tpu_custom_call.1} parent=1 // loop_pre_header
      _
    $region3: #{tpu_custom_call.1} parent=1 // loop_header
      %s17 = sphi 0, %s21
      %p18 = scmp.ge.s32.totalorder %s17, 4
      %s27 = sphi 0, %s29
      %s30 = sphi 0, %s27
      %s31 = sphi 0, %s30
      %s47 = sphi 0, %s31
      %s51 = sphi 0, %s51
      %s53 = sphi 0, %s51
      %s54 = sphi 0, %s53
      %s68 = sphi 0, %s54
      %s72 = sphi 0, %s72
      %s74 = sphi 0, %s72
      %s75 = sphi 0, %s74
      %s89 = sphi 0, %s75
      %s93 = sphi 0, %s93
      %s95 = sphi 0, %s93
      %s96 = sphi 0, %s95
      %s110 = sphi 0, %s96
      %s114 = sphi 0, %s114
      %s116 = sphi 0, %s114
      %s117 = sphi 0, %s116
      %s131 = sphi 0, %s117
      %s135 = sphi 0, %s135
      %s137 = sphi 0, %s135
      %s138 = sphi 0, %s137
      %s152 = sphi 0, %s138
      %s156 = sphi 0, %s156
      %s158 = sphi 0, %s156
      %s159 = sphi 0, %s158
      %s173 = sphi 0, %s159
      %s179 = sphi 0, %s181
      %s182 = sphi 0, %s179
      %s183 = sphi 0, %s182
      %s199 = sphi 0, %s183
    $region4: #{tpu_custom_call.1} parent=1 // loop_header_branch
      %20 = sbr.rel (%p18) target = $region8
    $region5: #{tpu_custom_call.1} parent=1 // loop_body
      %s22 = ssub.s32 %s17, 1
      %s23 = ssub.s32 %s17, 2
      %s24 = sadd.s32 %s17, 1
      %s25 = ssub.s32 %s17, %s24
      %p26 = scmp.eq.s32.totalorder %s25, 0
      %s28 = sadd.s32 %s27, 1
      %s29 = scalar_select %p26, %s27, %s28
      %p32 = pneg %p26
      %p33 = scmp.eq.s32.totalorder %s17, 1
      %p34 = por %p32, %p33
      %p35 = scmp.ne.s32.totalorder %s27, %s30
      %p36 = scmp.eq.s32.totalorder %s17, 0
      %p37 = por %p35, %p36
      %p38 = scmp.ne.s32.totalorder %s27, %s30
      %p39 = scmp.eq.s32.totalorder %s22, 1
      %p40 = por %p38, %p39
      %p41 = scmp.ne.s32.totalorder %s30, %s31
      %p42 = scmp.eq.s32.totalorder %s22, 0
      %p43 = por %p41, %p42
      %p44 = scmp.ne.s32.totalorder %s30, %s31
      %p45 = scmp.eq.s32.totalorder %s23, 1
      %p46 = por %p44, %p45
      %p48 = scmp.ne.s32.totalorder %s31, %s47
      %p49 = scmp.eq.s32.totalorder %s23, 0
      %p50 = por %p48, %p49
      %s52 = sadd.s32 %s51, 1
      %p55 = scmp.eq.s32.totalorder %s17, 1
      %p56 = scmp.ne.s32.totalorder %s51, %s53
      %p57 = scmp.eq.s32.totalorder %s17, 0
      %p58 = por %p56, %p57
      %p59 = scmp.ne.s32.totalorder %s51, %s53
      %p60 = scmp.eq.s32.totalorder %s22, 1
      %p61 = por %p59, %p60
      %p62 = scmp.ne.s32.totalorder %s53, %s54
      %p63 = scmp.eq.s32.totalorder %s22, 0
      %p64 = por %p62, %p63
      %p65 = scmp.ne.s32.totalorder %s53, %s54
      %p66 = scmp.eq.s32.totalorder %s23, 1
      %p67 = por %p65, %p66
      %p69 = scmp.ne.s32.totalorder %s54, %s68
      %p70 = scmp.eq.s32.totalorder %s23, 0
      %p71 = por %p69, %p70
      %s73 = sadd.s32 %s72, 1
      %p76 = scmp.eq.s32.totalorder %s17, 1
      %p77 = scmp.ne.s32.totalorder %s72, %s74
      %p78 = scmp.eq.s32.totalorder %s17, 0
      %p79 = por %p77, %p78
      %p80 = scmp.ne.s32.totalorder %s72, %s74
      %p81 = scmp.eq.s32.totalorder %s22, 1
      %p82 = por %p80, %p81
      %p83 = scmp.ne.s32.totalorder %s74, %s75
      %p84 = scmp.eq.s32.totalorder %s22, 0
      %p85 = por %p83, %p84
      %p86 = scmp.ne.s32.totalorder %s74, %s75
      %p87 = scmp.eq.s32.totalorder %s23, 1
      %p88 = por %p86, %p87
      %p90 = scmp.ne.s32.totalorder %s75, %s89
      %p91 = scmp.eq.s32.totalorder %s23, 0
      %p92 = por %p90, %p91
      %s94 = sadd.s32 %s93, 1
      %p97 = scmp.eq.s32.totalorder %s17, 1
      %p98 = scmp.ne.s32.totalorder %s93, %s95
      %p99 = scmp.eq.s32.totalorder %s17, 0
      %p100 = por %p98, %p99
      %p101 = scmp.ne.s32.totalorder %s93, %s95
      %p102 = scmp.eq.s32.totalorder %s22, 1
      %p103 = por %p101, %p102
      %p104 = scmp.ne.s32.totalorder %s95, %s96
      %p105 = scmp.eq.s32.totalorder %s22, 0
      %p106 = por %p104, %p105
      %p107 = scmp.ne.s32.totalorder %s95, %s96
      %p108 = scmp.eq.s32.totalorder %s23, 1
      %p109 = por %p107, %p108
      %p111 = scmp.ne.s32.totalorder %s96, %s110
      %p112 = scmp.eq.s32.totalorder %s23, 0
      %p113 = por %p111, %p112
      %s115 = sadd.s32 %s114, 1
      %p118 = scmp.eq.s32.totalorder %s17, 1
      %p119 = scmp.ne.s32.totalorder %s114, %s116
      %p120 = scmp.eq.s32.totalorder %s17, 0
      %p121 = por %p119, %p120
      %p122 = scmp.ne.s32.totalorder %s114, %s116
      %p123 = scmp.eq.s32.totalorder %s22, 1
      %p124 = por %p122, %p123
      %p125 = scmp.ne.s32.totalorder %s116, %s117
      %p126 = scmp.eq.s32.totalorder %s22, 0
      %p127 = por %p125, %p126
      %p128 = scmp.ne.s32.totalorder %s116, %s117
      %p129 = scmp.eq.s32.totalorder %s23, 1
      %p130 = por %p128, %p129
      %p132 = scmp.ne.s32.totalorder %s117, %s131
      %p133 = scmp.eq.s32.totalorder %s23, 0
      %p134 = por %p132, %p133
      %s136 = sadd.s32 %s135, 1
      %p139 = scmp.eq.s32.totalorder %s17, 1
      %p140 = scmp.ne.s32.totalorder %s135, %s137
      %p141 = scmp.eq.s32.totalorder %s17, 0
      %p142 = por %p140, %p141
      %p143 = scmp.ne.s32.totalorder %s135, %s137
      %p144 = scmp.eq.s32.totalorder %s22, 1
      %p145 = por %p143, %p144
      %p146 = scmp.ne.s32.totalorder %s137, %s138
      %p147 = scmp.eq.s32.totalorder %s22, 0
      %p148 = por %p146, %p147
      %p149 = scmp.ne.s32.totalorder %s137, %s138
      %p150 = scmp.eq.s32.totalorder %s23, 1
      %p151 = por %p149, %p150
      %p153 = scmp.ne.s32.totalorder %s138, %s152
      %p154 = scmp.eq.s32.totalorder %s23, 0
      %p155 = por %p153, %p154
      %s157 = sadd.s32 %s156, 1
      %p160 = scmp.eq.s32.totalorder %s17, 1
      %p161 = scmp.ne.s32.totalorder %s156, %s158
      %p162 = scmp.eq.s32.totalorder %s17, 0
      %p163 = por %p161, %p162
      %p164 = scmp.ne.s32.totalorder %s156, %s158
      %p165 = scmp.eq.s32.totalorder %s22, 1
      %p166 = por %p164, %p165
      %p167 = scmp.ne.s32.totalorder %s158, %s159
      %p168 = scmp.eq.s32.totalorder %s22, 0
      %p169 = por %p167, %p168
      %p170 = scmp.ne.s32.totalorder %s158, %s159
      %p171 = scmp.eq.s32.totalorder %s23, 1
      %p172 = por %p170, %p171
      %p174 = scmp.ne.s32.totalorder %s159, %s173
      %p175 = scmp.eq.s32.totalorder %s23, 0
      %p176 = por %p174, %p175
      %s177 = ssub.s32 %s17, %s24
      %p178 = scmp.eq.s32.totalorder %s177, 0
      %s180 = sadd.s32 %s179, 1
      %s181 = scalar_select %p178, %s179, %s180
      %p184 = pneg %p178
      %p185 = scmp.eq.s32.totalorder %s17, 1
      %p186 = por %p184, %p185
      %p187 = scmp.ne.s32.totalorder %s179, %s182
      %p188 = scmp.eq.s32.totalorder %s17, 0
      %p189 = por %p187, %p188
      %p190 = scmp.ne.s32.totalorder %s179, %s182
      %p191 = scmp.eq.s32.totalorder %s22, 1
      %p192 = por %p190, %p191
      %p193 = scmp.ne.s32.totalorder %s182, %s183
      %p194 = scmp.eq.s32.totalorder %s22, 0
      %p195 = por %p193, %p194
      %p196 = scmp.ne.s32.totalorder %s182, %s183
      %p197 = scmp.eq.s32.totalorder %s23, 1
      %p198 = por %p196, %p197
      %p200 = scmp.ne.s32.totalorder %s183, %s199
      %p201 = scmp.eq.s32.totalorder %s23, 0
      %p202 = por %p200, %p201
      %p203 = scmp.le.s32.totalorder 1, %s17
      %p204 = scmp.lt.s32.totalorder %s17, 3
      %p205 = pnand %p203, %p204
      %p206 = pneg %p205
      // Predicated region
      $region9: #{tpu_custom_call.1} parent=5 // pred_check
        _
      $region10: #{tpu_custom_call.1} parent=5 // pred_check_branch
        %208 = sbr.rel (%p205) target = $region12
      $region11: #{tpu_custom_call.1} parent=5 // pred_region
        %s209 = ssub.s32 %s17, 1
        // Predicated region
        $region13: #{tpu_custom_call.1} parent=11 // pred_check
          %p210 = pneg %p64
        $region14: #{tpu_custom_call.1} parent=11 // pred_check_branch
          %212 = sbr.rel (%p210) target = $region16
        $region15: #{tpu_custom_call.1} parent=11 // pred_region
          _
        $region16: #{tpu_custom_call.1} parent=11 // pred_fallthru
          _
        // Predicated region
        $region17: #{tpu_custom_call.1} parent=11 // pred_check
          %p213 = pneg %p85
        $region18: #{tpu_custom_call.1} parent=11 // pred_check_branch
          %215 = sbr.rel (%p213) target = $region20
        $region19: #{tpu_custom_call.1} parent=11 // pred_region
          _
        $region20: #{tpu_custom_call.1} parent=11 // pred_fallthru
          _
        // Predicated region
        $region21: #{tpu_custom_call.1} parent=11 // pred_check
          %p216 = pneg %p106
        $region22: #{tpu_custom_call.1} parent=11 // pred_check_branch
          %218 = sbr.rel (%p216) target = $region24
        $region23: #{tpu_custom_call.1} parent=11 // pred_region
          %s220 = ssub.s32 9216, 9216
          %221 = vsyncadd [#allocation4], %s220
          %s222 = sshll.u32 [#allocation3], 4
          %s223 = int_to_ptr.vmem [resolvable:$true] %s222
          %228 = dma.hbm_to_vmem [thread:$0]  %s3, 9216, %s223, [#allocation4], 64, 64, 4
        $region24: #{tpu_custom_call.1} parent=11 // pred_fallthru
          _
        // Predicated region
        $region25: #{tpu_custom_call.1} parent=11 // pred_check
          %p229 = pneg %p127
        $region26: #{tpu_custom_call.1} parent=11 // pred_check_branch
          %231 = sbr.rel (%p229) target = $region28
        $region27: #{tpu_custom_call.1} parent=11 // pred_region
          _
        $region28: #{tpu_custom_call.1} parent=11 // pred_fallthru
          _
        // Predicated region
        $region29: #{tpu_custom_call.1} parent=11 // pred_check
          %p232 = pneg %p148
        $region30: #{tpu_custom_call.1} parent=11 // pred_check_branch
          %234 = sbr.rel (%p232) target = $region32
        $region31: #{tpu_custom_call.1} parent=11 // pred_region
          _
        $region32: #{tpu_custom_call.1} parent=11 // pred_fallthru
          _
        // Predicated region
        $region33: #{tpu_custom_call.1} parent=11 // pred_check
          %p235 = pneg %p169
        $region34: #{tpu_custom_call.1} parent=11 // pred_check_branch
          %237 = sbr.rel (%p235) target = $region36
        $region35: #{tpu_custom_call.1} parent=11 // pred_region
          _
        $region36: #{tpu_custom_call.1} parent=11 // pred_fallthru
          _
      $region12: #{tpu_custom_call.1} parent=5 // pred_fallthru
        _
      %p238 = scmp.lt.s32.totalorder %s17, 2
      // Predicated region
      $region37: #{tpu_custom_call.1} parent=5 // pred_check
        %p239 = pneg %p238
      $region38: #{tpu_custom_call.1} parent=5 // pred_check_branch
        %241 = sbr.rel (%p239) target = $region40
      $region39: #{tpu_custom_call.1} parent=5 // pred_region
        // Predicated region
        $region41: #{tpu_custom_call.1} parent=39 // pred_check
          %p242 = pneg %p37
        $region42: #{tpu_custom_call.1} parent=39 // pred_check_branch
          %244 = sbr.rel (%p242) target = $region44
        $region43: #{tpu_custom_call.1} parent=39 // pred_region
          %s245 = smul.u32 4, %s17
          %p246 = scmp.lt.s32.totalorder %s245, 7
          %s247 = scalar_select %p246, %s245, 7
          %s248 = smul.addr %s247, 18
          %s249 = smul.addr %s248, 4
          %s250 = scalar_lea.vmem %s0, %s249
          %s251 = smul.u32 4, %s17
        $region44: #{tpu_custom_call.1} parent=39 // pred_fallthru
          _
      $region40: #{tpu_custom_call.1} parent=5 // pred_fallthru
        _
      %p252 = scmp.le.s32.totalorder 1, %s17
      %p253 = scmp.lt.s32.totalorder %s17, 3
      %p254 = pnand %p252, %p253
      %p255 = pneg %p254
      // Predicated region
      $region45: #{tpu_custom_call.1} parent=5 // pred_check
        _
      $region46: #{tpu_custom_call.1} parent=5 // pred_check_branch
        %257 = sbr.rel (%p254) target = $region48
      $region47: #{tpu_custom_call.1} parent=5 // pred_region
        %s258 = ssub.s32 %s17, 1
        // Predicated region
        $region49: #{tpu_custom_call.1} parent=47 // pred_check
          %p259 = pneg %p106
        $region50: #{tpu_custom_call.1} parent=47 // pred_check_branch
          %261 = sbr.rel (%p259) target = $region52
        $region51: #{tpu_custom_call.1} parent=47 // pred_region
          %262 = dma.done [#allocation4], 9216
        $region52: #{tpu_custom_call.1} parent=47 // pred_fallthru
          _
        %s263 = smul.u32 4, %s22
        %p264 = scmp.lt.s32.totalorder %s263, 7
        %s265 = scalar_select %p264, %s263, 7
        %s266 = smul.addr %s265, 18
        %s267 = smul.addr %s266, 4
        %s268 = scalar_lea.vmem %s0, %s267
        %p269 = pneg %p43
        %p270 = pneg %p40
        %p271 = pneg %p64
        %p272 = pneg %p61
        %p273 = pneg %p85
        %p274 = pneg %p82
        %p275 = pneg %p106
        %p276 = pneg %p103
        %p277 = pneg %p127
        %p278 = pneg %p124
        %p279 = pneg %p148
        %p280 = pneg %p145
        %p281 = pneg %p169
        %p282 = pneg %p166
        %p283 = pneg %p195
        %p284 = pneg %p192
        %s285 = sand.u32 %s182, 1
        %s286 = scalar_lea.sflag [#allocation5], %s285
        %s287 = sand.u32 %s182, 1
        %s288 = smul.addr %s287, 32
        %s289 = scalar_lea.vmem [#allocation6], %s288
        %s290 = smul.u32 4, %s22
        %p291 = scmp.lt.s32.totalorder %s290, 7
        %s292 = scalar_select %p291, %s290, 7
        %s293 = smul.addr %s292, 18
        %s294 = smul.addr %s293, 4
        %s295 = scalar_lea.vmem %s0, %s294
        %s296 = smul.u32 4, %s22
        %v298 = vld [vmem:[%s295] sm:$0xf]
        %v299 = vld [vmem:[%s295 + $0x8] sm:$0xf]
        %v300 = vld [vmem:[%s295 + $0x10] sm:$0xf]
        %v301 = vld [vmem:[%s295 + $0x18] sm:$0xf]
        %v302 = vld [vmem:[%s295 + $0x20] sm:$0xf]
        %v303 = vld [vmem:[%s295 + $0x28] sm:$0xf]
        %v304 = vld [vmem:[%s295 + $0x30] sm:$0xf]
        %v305 = vld [vmem:[%s295 + $0x38] sm:$0xf]
        %s306 = scalar_lea.vmem %s295, 72
        %v307 = vld [vmem:[%s306] sm:$0xf]
        %v308 = vld [vmem:[%s306 + $0x8] sm:$0xf]
        %v309 = vld [vmem:[%s306 + $0x10] sm:$0xf]
        %v310 = vld [vmem:[%s306 + $0x18] sm:$0xf]
        %v311 = vld [vmem:[%s306 + $0x20] sm:$0xf]
        %v312 = vld [vmem:[%s306 + $0x28] sm:$0xf]
        %v313 = vld [vmem:[%s306 + $0x30] sm:$0xf]
        %v314 = vld [vmem:[%s306 + $0x38] sm:$0xf]
        %v323 = vunpack.c.l.b16 %v298
        %v324 = vunpack.c.l.b16 %v299
        %v325 = vunpack.c.l.b16 %v300
        %v326 = vunpack.c.l.b16 %v301
        %v327 = vunpack.c.l.b16 %v302
        %v328 = vunpack.c.l.b16 %v303
        %v329 = vunpack.c.l.b16 %v304
        %v330 = vunpack.c.l.b16 %v305
        %v331 = vpack.c.b16 %v324, %v323
        %v332 = vpack.c.b16 %v326, %v325
        %v333 = vpack.c.b16 %v328, %v327
        %v334 = vpack.c.b16 %v330, %v329
        %v347 = vunpack.c.l.b16 %v307
        %v348 = vunpack.c.l.b16 %v308
        %v349 = vunpack.c.l.b16 %v309
        %v350 = vunpack.c.l.b16 %v310
        %v351 = vunpack.c.l.b16 %v311
        %v352 = vunpack.c.l.b16 %v312
        %v353 = vunpack.c.l.b16 %v313
        %v354 = vunpack.c.l.b16 %v314
        %v355 = vpack.c.b16 %v348, %v347
        %v356 = vpack.c.b16 %v350, %v349
        %v357 = vpack.c.b16 %v352, %v351
        %v358 = vpack.c.b16 %v354, %v353
        %v363 = vld [vmem:[%s1] sm:$0xf]
        %v364 = vld [vmem:[%s1 + $0x4] sm:$0xf]
        %v365 = vld [vmem:[%s1 + $0x8] sm:$0xf]
        %v366 = vld [vmem:[%s1 + $0xc] sm:$0xf]
        %v367 = vld [vmem:[%s1 + $0x10] sm:$0xf]
        %v368 = vld [vmem:[%s1 + $0x14] sm:$0xf]
        %v369 = vld [vmem:[%s1 + $0x18] sm:$0xf]
        %v370 = vld [vmem:[%s1 + $0x1c] sm:$0xf]
        %v371 = vld [vmem:[%s1 + $0x20] sm:$0xf]
        %v372 = vld [vmem:[%s1 + $0x24] sm:$0xf]
        %v373 = vld [vmem:[%s1 + $0x28] sm:$0xf]
        %v374 = vld [vmem:[%s1 + $0x2c] sm:$0xf]
        %v375 = vld [vmem:[%s1 + $0x30] sm:$0xf]
        %v376 = vld [vmem:[%s1 + $0x34] sm:$0xf]
        %v377 = vld [vmem:[%s1 + $0x38] sm:$0xf]
        %v378 = vld [vmem:[%s1 + $0x3c] sm:$0xf]
        %v379 = vld [vmem:[%s1 + $0x40] sm:$0xf]
        %v380 = vld [vmem:[%s1 + $0x44] sm:$0xf]
        %v381 = vld [vmem:[%s1 + $0x48] sm:$0xf]
        %v382 = vld [vmem:[%s1 + $0x4c] sm:$0xf]
        %v383 = vld [vmem:[%s1 + $0x50] sm:$0xf]
        %v384 = vld [vmem:[%s1 + $0x54] sm:$0xf]
        %v385 = vld [vmem:[%s1 + $0x58] sm:$0xf]
        %v386 = vld [vmem:[%s1 + $0x5c] sm:$0xf]
        %v387 = vld [vmem:[%s1 + $0x60] sm:$0xf]
        %v388 = vld [vmem:[%s1 + $0x64] sm:$0xf]
        %v389 = vld [vmem:[%s1 + $0x68] sm:$0xf]
        %v390 = vld [vmem:[%s1 + $0x6c] sm:$0xf]
        %v391 = vld [vmem:[%s1 + $0x70] sm:$0xf]
        %v392 = vld [vmem:[%s1 + $0x74] sm:$0xf]
        %v393 = vld [vmem:[%s1 + $0x78] sm:$0xf]
        %v394 = vld [vmem:[%s1 + $0x7c] sm:$0xf]
        %v395 = vld [vmem:[%s295 + $0x4] sm:$0x1]
        %v396 = vld [vmem:[%s295 + $0xc] sm:$0x1]
        %v397 = vld [vmem:[%s295 + $0x14] sm:$0x1]
        %v398 = vld [vmem:[%s295 + $0x1c] sm:$0x1]
        %v399 = vld [vmem:[%s295 + $0x24] sm:$0x1]
        %v400 = vld [vmem:[%s295 + $0x2c] sm:$0x1]
        %v401 = vld [vmem:[%s295 + $0x34] sm:$0x1]
        %v402 = vld [vmem:[%s295 + $0x3c] sm:$0x1]
        %vm403 = vsmask.f32 3328
        %vm404 = vsmask.f32 7440
        %vm405 = vmor %vm403, %vm404
        %v407 = vshrl.u32 %v298, 16
        %v409 = vrot.slane %v407, 4
        %v410 = vshll.u32 %v298, 16
        %v412 = vrot.slane %v410, 5
        %v413 = vor.u32 %v409, %v412
        %v414 = vrot.slane %v413, 4
        %v416 = vshll.u32 %v395, 16
        %v418 = vrot.slane %v416, 5
        %v419 = vsel %vm405, %v414, %v418
        %v421 = vshrl.u32 %v299, 16
        %v423 = vrot.slane %v421, 4
        %v424 = vshll.u32 %v299, 16
        %v426 = vrot.slane %v424, 5
        %v427 = vor.u32 %v423, %v426
        %v428 = vrot.slane %v427, 4
        %v430 = vshll.u32 %v396, 16
        %v432 = vrot.slane %v430, 5
        %v433 = vsel %vm405, %v428, %v432
        %v435 = vshrl.u32 %v300, 16
        %v437 = vrot.slane %v435, 4
        %v438 = vshll.u32 %v300, 16
        %v440 = vrot.slane %v438, 5
        %v441 = vor.u32 %v437, %v440
        %v442 = vrot.slane %v441, 4
        %v444 = vshll.u32 %v397, 16
        %v446 = vrot.slane %v444, 5
        %v447 = vsel %vm405, %v442, %v446
        %v449 = vshrl.u32 %v301, 16
        %v451 = vrot.slane %v449, 4
        %v452 = vshll.u32 %v301, 16
        %v454 = vrot.slane %v452, 5
        %v455 = vor.u32 %v451, %v454
        %v456 = vrot.slane %v455, 4
        %v458 = vshll.u32 %v398, 16
        %v460 = vrot.slane %v458, 5
        %v461 = vsel %vm405, %v456, %v460
        %v463 = vshrl.u32 %v302, 16
        %v465 = vrot.slane %v463, 4
        %v466 = vshll.u32 %v302, 16
        %v468 = vrot.slane %v466, 5
        %v469 = vor.u32 %v465, %v468
        %v470 = vrot.slane %v469, 4
        %v472 = vshll.u32 %v399, 16
        %v474 = vrot.slane %v472, 5
        %v475 = vsel %vm405, %v470, %v474
        %v477 = vshrl.u32 %v303, 16
        %v479 = vrot.slane %v477, 4
        %v480 = vshll.u32 %v303, 16
        %v482 = vrot.slane %v480, 5
        %v483 = vor.u32 %v479, %v482
        %v484 = vrot.slane %v483, 4
        %v486 = vshll.u32 %v400, 16
        %v488 = vrot.slane %v486, 5
        %v489 = vsel %vm405, %v484, %v488
        %v491 = vshrl.u32 %v304, 16
        %v493 = vrot.slane %v491, 4
        %v494 = vshll.u32 %v304, 16
        %v496 = vrot.slane %v494, 5
        %v497 = vor.u32 %v493, %v496
        %v498 = vrot.slane %v497, 4
        %v500 = vshll.u32 %v401, 16
        %v502 = vrot.slane %v500, 5
        %v503 = vsel %vm405, %v498, %v502
        %v505 = vshrl.u32 %v305, 16
        %v507 = vrot.slane %v505, 4
        %v508 = vshll.u32 %v305, 16
        %v510 = vrot.slane %v508, 5
        %v511 = vor.u32 %v507, %v510
        %v512 = vrot.slane %v511, 4
        %v514 = vshll.u32 %v402, 16
        %v516 = vrot.slane %v514, 5
        %v517 = vsel %vm405, %v512, %v516
        %s518 = scalar_lea.vmem %s295, 144
        %v519 = vld [vmem:[%s518] sm:$0xf]
        %v520 = vld [vmem:[%s518 + $0x8] sm:$0xf]
        %v521 = vld [vmem:[%s518 + $0x10] sm:$0xf]
        %v522 = vld [vmem:[%s518 + $0x18] sm:$0xf]
        %v523 = vld [vmem:[%s518 + $0x20] sm:$0xf]
        %v524 = vld [vmem:[%s518 + $0x28] sm:$0xf]
        %v525 = vld [vmem:[%s518 + $0x30] sm:$0xf]
        %v526 = vld [vmem:[%s518 + $0x38] sm:$0xf]
        %v527 = vunpack.c.l.b16 %v419
        %v528 = vunpack.c.l.b16 %v433
        %v529 = vunpack.c.l.b16 %v447
        %v530 = vunpack.c.l.b16 %v461
        %v531 = vunpack.c.l.b16 %v475
        %v532 = vunpack.c.l.b16 %v489
        %v533 = vunpack.c.l.b16 %v503
        %v534 = vunpack.c.l.b16 %v517
        %v535 = vpack.c.b16 %v528, %v527
        %v536 = vpack.c.b16 %v530, %v529
        %v537 = vpack.c.b16 %v532, %v531
        %v538 = vpack.c.b16 %v534, %v533
        %v551 = vunpack.c.l.b16 %v519
        %v552 = vunpack.c.l.b16 %v520
        %v553 = vunpack.c.l.b16 %v521
        %v554 = vunpack.c.l.b16 %v522
        %v555 = vunpack.c.l.b16 %v523
        %v556 = vunpack.c.l.b16 %v524
        %v557 = vunpack.c.l.b16 %v525
        %v558 = vunpack.c.l.b16 %v526
        %v559 = vpack.c.b16 %v552, %v551
        %v560 = vpack.c.b16 %v554, %v553
        %v561 = vpack.c.b16 %v556, %v555
        %v562 = vpack.c.b16 %v558, %v557
        %v567 = vld [vmem:[%s1 + $0x80] sm:$0xf]
        %v568 = vld [vmem:[%s1 + $0x84] sm:$0xf]
        %v569 = vld [vmem:[%s1 + $0x88] sm:$0xf]
        %v570 = vld [vmem:[%s1 + $0x8c] sm:$0xf]
        %v571 = vld [vmem:[%s1 + $0x90] sm:$0xf]
        %v572 = vld [vmem:[%s1 + $0x94] sm:$0xf]
        %v573 = vld [vmem:[%s1 + $0x98] sm:$0xf]
        %v574 = vld [vmem:[%s1 + $0x9c] sm:$0xf]
        %v575 = vld [vmem:[%s1 + $0xa0] sm:$0xf]
        %v576 = vld [vmem:[%s1 + $0xa4] sm:$0xf]
        %v577 = vld [vmem:[%s1 + $0xa8] sm:$0xf]
        %v578 = vld [vmem:[%s1 + $0xac] sm:$0xf]
        %v579 = vld [vmem:[%s1 + $0xb0] sm:$0xf]
        %v580 = vld [vmem:[%s1 + $0xb4] sm:$0xf]
        %v581 = vld [vmem:[%s1 + $0xb8] sm:$0xf]
        %v582 = vld [vmem:[%s1 + $0xbc] sm:$0xf]
        %v583 = vld [vmem:[%s1 + $0xc0] sm:$0xf]
        %v584 = vld [vmem:[%s1 + $0xc4] sm:$0xf]
        %v585 = vld [vmem:[%s1 + $0xc8] sm:$0xf]
        %v586 = vld [vmem:[%s1 + $0xcc] sm:$0xf]
        %v587 = vld [vmem:[%s1 + $0xd0] sm:$0xf]
        %v588 = vld [vmem:[%s1 + $0xd4] sm:$0xf]
        %v589 = vld [vmem:[%s1 + $0xd8] sm:$0xf]
        %v590 = vld [vmem:[%s1 + $0xdc] sm:$0xf]
        %v591 = vld [vmem:[%s1 + $0xe0] sm:$0xf]
        %v592 = vld [vmem:[%s1 + $0xe4] sm:$0xf]
        %v593 = vld [vmem:[%s1 + $0xe8] sm:$0xf]
        %v594 = vld [vmem:[%s1 + $0xec] sm:$0xf]
        %v595 = vld [vmem:[%s1 + $0xf0] sm:$0xf]
        %v596 = vld [vmem:[%s1 + $0xf4] sm:$0xf]
        %v597 = vld [vmem:[%s1 + $0xf8] sm:$0xf]
        %v598 = vld [vmem:[%s1 + $0xfc] sm:$0xf]
        %v631 = vunpack.c.l.b16 %v567
        %v632 = vunpack.c.l.b16 %v568
        %v633 = vunpack.c.l.b16 %v569
        %v634 = vunpack.c.l.b16 %v570
        %v635 = vunpack.c.l.b16 %v571
        %v636 = vunpack.c.l.b16 %v572
        %v637 = vunpack.c.l.b16 %v573
        %v638 = vunpack.c.l.b16 %v574
        %v639 = vunpack.c.l.b16 %v575
        %v640 = vunpack.c.l.b16 %v576
        %v641 = vunpack.c.l.b16 %v577
        %v642 = vunpack.c.l.b16 %v578
        %v643 = vunpack.c.l.b16 %v579
        %v644 = vunpack.c.l.b16 %v580
        %v645 = vunpack.c.l.b16 %v581
        %v646 = vunpack.c.l.b16 %v582
        %v647 = vunpack.c.l.b16 %v583
        %v648 = vunpack.c.l.b16 %v584
        %v649 = vunpack.c.l.b16 %v585
        %v650 = vunpack.c.l.b16 %v586
        %v651 = vunpack.c.l.b16 %v587
        %v652 = vunpack.c.l.b16 %v588
        %v653 = vunpack.c.l.b16 %v589
        %v654 = vunpack.c.l.b16 %v590
        %v655 = vunpack.c.l.b16 %v591
        %v656 = vunpack.c.l.b16 %v592
        %v657 = vunpack.c.l.b16 %v593
        %v658 = vunpack.c.l.b16 %v594
        %v659 = vunpack.c.l.b16 %v595
        %v660 = vunpack.c.l.b16 %v596
        %v661 = vunpack.c.l.b16 %v597
        %v662 = vunpack.c.l.b16 %v598
        %v663 = vpack.c.b16 %v632, %v631
        %v664 = vpack.c.b16 %v634, %v633
        %v665 = vpack.c.b16 %v636, %v635
        %v666 = vpack.c.b16 %v638, %v637
        %v667 = vpack.c.b16 %v640, %v639
        %v668 = vpack.c.b16 %v642, %v641
        %v669 = vpack.c.b16 %v644, %v643
        %v670 = vpack.c.b16 %v646, %v645
        %v671 = vpack.c.b16 %v648, %v647
        %v672 = vpack.c.b16 %v650, %v649
        %v673 = vpack.c.b16 %v652, %v651
        %v674 = vpack.c.b16 %v654, %v653
        %v675 = vpack.c.b16 %v656, %v655
        %v676 = vpack.c.b16 %v658, %v657
        %v677 = vpack.c.b16 %v660, %v659
        %v678 = vpack.c.b16 %v662, %v661
        %695 = vmatprep.subr.bf16.mxu0 0
        %696 = vmatpush1.bf16.msra.mxu0 %v670
        %697 = vmatprep.subr.bf16.mxu0 0
        %698 = vmatpush1.bf16.msra.mxu0 %v669
        %699 = vmatprep.subr.bf16.mxu0 0
        %700 = vmatpush1.bf16.msra.mxu0 %v668
        %701 = vmatprep.subr.bf16.mxu0 0
        %702 = vmatpush1.bf16.msra.mxu0 %v667
        %703 = vmatprep.subr.bf16.mxu0 0
        %704 = vmatpush1.bf16.msra.mxu0 %v666
        %705 = vmatprep.subr.bf16.mxu0 0
        %706 = vmatpush1.bf16.msra.mxu0 %v665
        %707 = vmatprep.subr.bf16.mxu0 0
        %708 = vmatpush1.bf16.msra.mxu0 %v664
        %709 = vmatprep.subr.bf16.mxu0 0
        %710 = vmatpush1.bf16.msra.mxu0 %v663
        %711 = vmatprep.subr.bf16.mxu0 0
        %712 = vmatpush2.bf16.msra.mxu0 %v678
        %713 = vmatprep.subr.bf16.mxu0 0
        %714 = vmatpush2.bf16.msra.mxu0 %v677
        %715 = vmatprep.subr.bf16.mxu0 0
        %716 = vmatpush2.bf16.msra.mxu0 %v676
        %717 = vmatprep.subr.bf16.mxu0 0
        %718 = vmatpush2.bf16.msra.mxu0 %v675
        %719 = vmatprep.subr.bf16.mxu0 0
        %720 = vmatpush2.bf16.msra.mxu0 %v674
        %721 = vmatprep.subr.bf16.mxu0 0
        %722 = vmatpush2.bf16.msra.mxu0 %v673
        %723 = vmatprep.subr.bf16.mxu0 0
        %724 = vmatpush2.bf16.msra.mxu0 %v672
        %725 = vmatprep.subr.bf16.mxu0 0
        %726 = vmatpush2.bf16.msra.mxu0 %v671
        %727 = vmatprep.mubr.bf16.mxu0 %v559
        %728 = vmatmul.mubr.bf16.gmra.mxu0 %v535
        %v729 = vpop.f32.mrf.mxu0
        %v730 = vadd.f32 0.0, %v729
        %v731 = vpop.f32.mrf.mxu0
        %v732 = vpop.f32.mrf.mxu0
        %v733 = vadd.f32 0.0, %v732
        %v734 = vpop.f32.mrf.mxu0
        %735 = vmatprep.mubr.bf16.mxu0 %v560
        %736 = vmatmul.mubr.bf16.gmra.mxu0 %v536
        %v737 = vpop.f32.mrf.mxu0
        %v738 = vadd.f32 0.0, %v737
        %v739 = vpop.f32.mrf.mxu0
        %v740 = vpop.f32.mrf.mxu0
        %v741 = vadd.f32 0.0, %v740
        %v742 = vpop.f32.mrf.mxu0
        %743 = vmatprep.mubr.bf16.mxu0 %v561
        %744 = vmatmul.mubr.bf16.gmra.mxu0 %v537
        %v745 = vpop.f32.mrf.mxu0
        %v746 = vadd.f32 0.0, %v745
        %v747 = vpop.f32.mrf.mxu0
        %v748 = vpop.f32.mrf.mxu0
        %v749 = vadd.f32 0.0, %v748
        %v750 = vpop.f32.mrf.mxu0
        %751 = vmatprep.mubr.bf16.mxu0 %v562
        %752 = vmatmul.mubr.bf16.gmra.mxu0 %v538
        %v753 = vpop.f32.mrf.mxu0
        %v754 = vadd.f32 0.0, %v753
        %v755 = vpop.f32.mrf.mxu0
        %v756 = vpop.f32.mrf.mxu0
        %v757 = vadd.f32 0.0, %v756
        %v758 = vpop.f32.mrf.mxu0
        %759 = vdwg.mxu0
        %v792 = vunpack.c.l.b16 %v363
        %v793 = vunpack.c.l.b16 %v364
        %v794 = vunpack.c.l.b16 %v365
        %v795 = vunpack.c.l.b16 %v366
        %v796 = vunpack.c.l.b16 %v367
        %v797 = vunpack.c.l.b16 %v368
        %v798 = vunpack.c.l.b16 %v369
        %v799 = vunpack.c.l.b16 %v370
        %v800 = vunpack.c.l.b16 %v371
        %v801 = vunpack.c.l.b16 %v372
        %v802 = vunpack.c.l.b16 %v373
        %v803 = vunpack.c.l.b16 %v374
        %v804 = vunpack.c.l.b16 %v375
        %v805 = vunpack.c.l.b16 %v376
        %v806 = vunpack.c.l.b16 %v377
        %v807 = vunpack.c.l.b16 %v378
        %v808 = vunpack.c.l.b16 %v379
        %v809 = vunpack.c.l.b16 %v380
        %v810 = vunpack.c.l.b16 %v381
        %v811 = vunpack.c.l.b16 %v382
        %v812 = vunpack.c.l.b16 %v383
        %v813 = vunpack.c.l.b16 %v384
        %v814 = vunpack.c.l.b16 %v385
        %v815 = vunpack.c.l.b16 %v386
        %v816 = vunpack.c.l.b16 %v387
        %v817 = vunpack.c.l.b16 %v388
        %v818 = vunpack.c.l.b16 %v389
        %v819 = vunpack.c.l.b16 %v390
        %v820 = vunpack.c.l.b16 %v391
        %v821 = vunpack.c.l.b16 %v392
        %v822 = vunpack.c.l.b16 %v393
        %v823 = vunpack.c.l.b16 %v394
        %v824 = vpack.c.b16 %v793, %v792
        %v825 = vpack.c.b16 %v795, %v794
        %v826 = vpack.c.b16 %v797, %v796
        %v827 = vpack.c.b16 %v799, %v798
        %v828 = vpack.c.b16 %v801, %v800
        %v829 = vpack.c.b16 %v803, %v802
        %v830 = vpack.c.b16 %v805, %v804
        %v831 = vpack.c.b16 %v807, %v806
        %v832 = vpack.c.b16 %v809, %v808
        %v833 = vpack.c.b16 %v811, %v810
        %v834 = vpack.c.b16 %v813, %v812
        %v835 = vpack.c.b16 %v815, %v814
        %v836 = vpack.c.b16 %v817, %v816
        %v837 = vpack.c.b16 %v819, %v818
        %v838 = vpack.c.b16 %v821, %v820
        %v839 = vpack.c.b16 %v823, %v822
        %856 = vmatprep.subr.bf16.mxu0 0
        %857 = vmatpush1.bf16.msra.mxu0 %v831
        %858 = vmatprep.subr.bf16.mxu0 0
        %859 = vmatpush1.bf16.msra.mxu0 %v830
        %860 = vmatprep.subr.bf16.mxu0 0
        %861 = vmatpush1.bf16.msra.mxu0 %v829
        %862 = vmatprep.subr.bf16.mxu0 0
        %863 = vmatpush1.bf16.msra.mxu0 %v828
        %864 = vmatprep.subr.bf16.mxu0 0
        %865 = vmatpush1.bf16.msra.mxu0 %v827
        %866 = vmatprep.subr.bf16.mxu0 0
        %867 = vmatpush1.bf16.msra.mxu0 %v826
        %868 = vmatprep.subr.bf16.mxu0 0
        %869 = vmatpush1.bf16.msra.mxu0 %v825
        %870 = vmatprep.subr.bf16.mxu0 0
        %871 = vmatpush1.bf16.msra.mxu0 %v824
        %872 = vmatprep.subr.bf16.mxu0 0
        %873 = vmatpush2.bf16.msra.mxu0 %v839
        %874 = vmatprep.subr.bf16.mxu0 0
        %875 = vmatpush2.bf16.msra.mxu0 %v838
        %876 = vmatprep.subr.bf16.mxu0 0
        %877 = vmatpush2.bf16.msra.mxu0 %v837
        %878 = vmatprep.subr.bf16.mxu0 0
        %879 = vmatpush2.bf16.msra.mxu0 %v836
        %880 = vmatprep.subr.bf16.mxu0 0
        %881 = vmatpush2.bf16.msra.mxu0 %v835
        %882 = vmatprep.subr.bf16.mxu0 0
        %883 = vmatpush2.bf16.msra.mxu0 %v834
        %884 = vmatprep.subr.bf16.mxu0 0
        %885 = vmatpush2.bf16.msra.mxu0 %v833
        %886 = vmatprep.subr.bf16.mxu0 0
        %887 = vmatpush2.bf16.msra.mxu0 %v832
        %888 = vmatprep.mubr.bf16.mxu0 %v355
        %889 = vmatmul.mubr.bf16.gmra.mxu0 %v331
        %v890 = vpop.f32.mrf.mxu0
        %v891 = vadd.f32 %v730, %v890
        %v892 = vpop.f32.mrf.mxu0
        %v893 = vpop.f32.mrf.mxu0
        %v894 = vadd.f32 %v733, %v893
        %v895 = vpop.f32.mrf.mxu0
        %896 = vmatprep.mubr.bf16.mxu0 %v356
        %897 = vmatmul.mubr.bf16.gmra.mxu0 %v332
        %v898 = vpop.f32.mrf.mxu0
        %v899 = vadd.f32 %v738, %v898
        %v900 = vpop.f32.mrf.mxu0
        %v901 = vpop.f32.mrf.mxu0
        %v902 = vadd.f32 %v741, %v901
        %v903 = vpop.f32.mrf.mxu0
        %904 = vmatprep.mubr.bf16.mxu0 %v357
        %905 = vmatmul.mubr.bf16.gmra.mxu0 %v333
        %v906 = vpop.f32.mrf.mxu0
        %v907 = vadd.f32 %v746, %v906
        %v908 = vpop.f32.mrf.mxu0
        %v909 = vpop.f32.mrf.mxu0
        %v910 = vadd.f32 %v749, %v909
        %v911 = vpop.f32.mrf.mxu0
        %912 = vmatprep.mubr.bf16.mxu0 %v358
        %913 = vmatmul.mubr.bf16.gmra.mxu0 %v334
        %v914 = vpop.f32.mrf.mxu0
        %v915 = vadd.f32 %v754, %v914
        %v916 = vpop.f32.mrf.mxu0
        %v917 = vpop.f32.mrf.mxu0
        %v918 = vadd.f32 %v757, %v917
        %v919 = vpop.f32.mrf.mxu0
        %920 = vdwg.mxu0
        %s921 = scalar_lea.vmem %s295, 216
        %v922 = vld [vmem:[%s921] sm:$0xf]
        %v923 = vld [vmem:[%s921 + $0x8] sm:$0xf]
        %v924 = vld [vmem:[%s921 + $0x10] sm:$0xf]
        %v925 = vld [vmem:[%s921 + $0x18] sm:$0xf]
        %v926 = vld [vmem:[%s921 + $0x20] sm:$0xf]
        %v927 = vld [vmem:[%s921 + $0x28] sm:$0xf]
        %v928 = vld [vmem:[%s921 + $0x30] sm:$0xf]
        %v929 = vld [vmem:[%s921 + $0x38] sm:$0xf]
        %v930 = vld [vmem:[%s518] sm:$0xf]
        %v931 = vld [vmem:[%s518 + $0x4] sm:$0x1]
        %v932 = vld [vmem:[%s518 + $0x8] sm:$0xf]
        %v933 = vld [vmem:[%s518 + $0xc] sm:$0x1]
        %v934 = vld [vmem:[%s518 + $0x10] sm:$0xf]
        %v935 = vld [vmem:[%s518 + $0x14] sm:$0x1]
        %v936 = vld [vmem:[%s518 + $0x18] sm:$0xf]
        %v937 = vld [vmem:[%s518 + $0x1c] sm:$0x1]
        %v938 = vld [vmem:[%s518 + $0x20] sm:$0xf]
        %v939 = vld [vmem:[%s518 + $0x24] sm:$0x1]
        %v940 = vld [vmem:[%s518 + $0x28] sm:$0xf]
        %v941 = vld [vmem:[%s518 + $0x2c] sm:$0x1]
        %v942 = vld [vmem:[%s518 + $0x30] sm:$0xf]
        %v943 = vld [vmem:[%s518 + $0x34] sm:$0x1]
        %v944 = vld [vmem:[%s518 + $0x38] sm:$0xf]
        %v945 = vld [vmem:[%s518 + $0x3c] sm:$0x1]
        %v947 = vshrl.u32 %v930, 16
        %v949 = vrot.slane %v947, 4
        %v950 = vshll.u32 %v930, 16
        %v952 = vrot.slane %v950, 5
        %v953 = vor.u32 %v949, %v952
        %v954 = vrot.slane %v953, 4
        %v956 = vshll.u32 %v931, 16
        %v958 = vrot.slane %v956, 5
        %v959 = vsel %vm405, %v954, %v958
        %v961 = vshrl.u32 %v932, 16
        %v963 = vrot.slane %v961, 4
        %v964 = vshll.u32 %v932, 16
        %v966 = vrot.slane %v964, 5
        %v967 = vor.u32 %v963, %v966
        %v968 = vrot.slane %v967, 4
        %v970 = vshll.u32 %v933, 16
        %v972 = vrot.slane %v970, 5
        %v973 = vsel %vm405, %v968, %v972
        %v975 = vshrl.u32 %v934, 16
        %v977 = vrot.slane %v975, 4
        %v978 = vshll.u32 %v934, 16
        %v980 = vrot.slane %v978, 5
        %v981 = vor.u32 %v977, %v980
        %v982 = vrot.slane %v981, 4
        %v984 = vshll.u32 %v935, 16
        %v986 = vrot.slane %v984, 5
        %v987 = vsel %vm405, %v982, %v986
        %v989 = vshrl.u32 %v936, 16
        %v991 = vrot.slane %v989, 4
        %v992 = vshll.u32 %v936, 16
        %v994 = vrot.slane %v992, 5
        %v995 = vor.u32 %v991, %v994
        %v996 = vrot.slane %v995, 4
        %v998 = vshll.u32 %v937, 16
        %v1000 = vrot.slane %v998, 5
        %v1001 = vsel %vm405, %v996, %v1000
        %v1003 = vshrl.u32 %v938, 16
        %v1005 = vrot.slane %v1003, 4
        %v1006 = vshll.u32 %v938, 16
        %v1008 = vrot.slane %v1006, 5
        %v1009 = vor.u32 %v1005, %v1008
        %v1010 = vrot.slane %v1009, 4
        %v1012 = vshll.u32 %v939, 16
        %v1014 = vrot.slane %v1012, 5
        %v1015 = vsel %vm405, %v1010, %v1014
        %v1017 = vshrl.u32 %v940, 16
        %v1019 = vrot.slane %v1017, 4
        %v1020 = vshll.u32 %v940, 16
        %v1022 = vrot.slane %v1020, 5
        %v1023 = vor.u32 %v1019, %v1022
        %v1024 = vrot.slane %v1023, 4
        %v1026 = vshll.u32 %v941, 16
        %v1028 = vrot.slane %v1026, 5
        %v1029 = vsel %vm405, %v1024, %v1028
        %v1031 = vshrl.u32 %v942, 16
        %v1033 = vrot.slane %v1031, 4
        %v1034 = vshll.u32 %v942, 16
        %v1036 = vrot.slane %v1034, 5
        %v1037 = vor.u32 %v1033, %v1036
        %v1038 = vrot.slane %v1037, 4
        %v1040 = vshll.u32 %v943, 16
        %v1042 = vrot.slane %v1040, 5
        %v1043 = vsel %vm405, %v1038, %v1042
        %v1045 = vshrl.u32 %v944, 16
        %v1047 = vrot.slane %v1045, 4
        %v1048 = vshll.u32 %v944, 16
        %v1050 = vrot.slane %v1048, 5
        %v1051 = vor.u32 %v1047, %v1050
        %v1052 = vrot.slane %v1051, 4
        %v1054 = vshll.u32 %v945, 16
        %v1056 = vrot.slane %v1054, 5
        %v1057 = vsel %vm405, %v1052, %v1056
        %v1066 = vunpack.c.l.b16 %v922
        %v1067 = vunpack.c.l.b16 %v923
        %v1068 = vunpack.c.l.b16 %v924
        %v1069 = vunpack.c.l.b16 %v925
        %v1070 = vunpack.c.l.b16 %v926
        %v1071 = vunpack.c.l.b16 %v927
        %v1072 = vunpack.c.l.b16 %v928
        %v1073 = vunpack.c.l.b16 %v929
        %v1074 = vpack.c.b16 %v1067, %v1066
        %v1075 = vpack.c.b16 %v1069, %v1068
        %v1076 = vpack.c.b16 %v1071, %v1070
        %v1077 = vpack.c.b16 %v1073, %v1072
        %v1082 = vunpack.c.l.b16 %v959
        %v1083 = vunpack.c.l.b16 %v973
        %v1084 = vunpack.c.l.b16 %v987
        %v1085 = vunpack.c.l.b16 %v1001
        %v1086 = vunpack.c.l.b16 %v1015
        %v1087 = vunpack.c.l.b16 %v1029
        %v1088 = vunpack.c.l.b16 %v1043
        %v1089 = vunpack.c.l.b16 %v1057
        %v1090 = vpack.c.b16 %v1083, %v1082
        %v1091 = vpack.c.b16 %v1085, %v1084
        %v1092 = vpack.c.b16 %v1087, %v1086
        %v1093 = vpack.c.b16 %v1089, %v1088
        %v1098 = vld [vmem:[%s1 + $0x100] sm:$0xf]
        %v1099 = vld [vmem:[%s1 + $0x104] sm:$0xf]
        %v1100 = vld [vmem:[%s1 + $0x108] sm:$0xf]
        %v1101 = vld [vmem:[%s1 + $0x10c] sm:$0xf]
        %v1102 = vld [vmem:[%s1 + $0x110] sm:$0xf]
        %v1103 = vld [vmem:[%s1 + $0x114] sm:$0xf]
        %v1104 = vld [vmem:[%s1 + $0x118] sm:$0xf]
        %v1105 = vld [vmem:[%s1 + $0x11c] sm:$0xf]
        %v1106 = vld [vmem:[%s1 + $0x120] sm:$0xf]
        %v1107 = vld [vmem:[%s1 + $0x124] sm:$0xf]
        %v1108 = vld [vmem:[%s1 + $0x128] sm:$0xf]
        %v1109 = vld [vmem:[%s1 + $0x12c] sm:$0xf]
        %v1110 = vld [vmem:[%s1 + $0x130] sm:$0xf]
        %v1111 = vld [vmem:[%s1 + $0x134] sm:$0xf]
        %v1112 = vld [vmem:[%s1 + $0x138] sm:$0xf]
        %v1113 = vld [vmem:[%s1 + $0x13c] sm:$0xf]
        %v1114 = vld [vmem:[%s1 + $0x140] sm:$0xf]
        %v1115 = vld [vmem:[%s1 + $0x144] sm:$0xf]
        %v1116 = vld [vmem:[%s1 + $0x148] sm:$0xf]
        %v1117 = vld [vmem:[%s1 + $0x14c] sm:$0xf]
        %v1118 = vld [vmem:[%s1 + $0x150] sm:$0xf]
        %v1119 = vld [vmem:[%s1 + $0x154] sm:$0xf]
        %v1120 = vld [vmem:[%s1 + $0x158] sm:$0xf]
        %v1121 = vld [vmem:[%s1 + $0x15c] sm:$0xf]
        %v1122 = vld [vmem:[%s1 + $0x160] sm:$0xf]
        %v1123 = vld [vmem:[%s1 + $0x164] sm:$0xf]
        %v1124 = vld [vmem:[%s1 + $0x168] sm:$0xf]
        %v1125 = vld [vmem:[%s1 + $0x16c] sm:$0xf]
        %v1126 = vld [vmem:[%s1 + $0x170] sm:$0xf]
        %v1127 = vld [vmem:[%s1 + $0x174] sm:$0xf]
        %v1128 = vld [vmem:[%s1 + $0x178] sm:$0xf]
        %v1129 = vld [vmem:[%s1 + $0x17c] sm:$0xf]
        %v1162 = vunpack.c.l.b16 %v1098
        %v1163 = vunpack.c.l.b16 %v1099
        %v1164 = vunpack.c.l.b16 %v1100
        %v1165 = vunpack.c.l.b16 %v1101
        %v1166 = vunpack.c.l.b16 %v1102
        %v1167 = vunpack.c.l.b16 %v1103
        %v1168 = vunpack.c.l.b16 %v1104
        %v1169 = vunpack.c.l.b16 %v1105
        %v1170 = vunpack.c.l.b16 %v1106
        %v1171 = vunpack.c.l.b16 %v1107
        %v1172 = vunpack.c.l.b16 %v1108
        %v1173 = vunpack.c.l.b16 %v1109
        %v1174 = vunpack.c.l.b16 %v1110
        %v1175 = vunpack.c.l.b16 %v1111
        %v1176 = vunpack.c.l.b16 %v1112
        %v1177 = vunpack.c.l.b16 %v1113
        %v1178 = vunpack.c.l.b16 %v1114
        %v1179 = vunpack.c.l.b16 %v1115
        %v1180 = vunpack.c.l.b16 %v1116
        %v1181 = vunpack.c.l.b16 %v1117
        %v1182 = vunpack.c.l.b16 %v1118
        %v1183 = vunpack.c.l.b16 %v1119
        %v1184 = vunpack.c.l.b16 %v1120
        %v1185 = vunpack.c.l.b16 %v1121
        %v1186 = vunpack.c.l.b16 %v1122
        %v1187 = vunpack.c.l.b16 %v1123
        %v1188 = vunpack.c.l.b16 %v1124
        %v1189 = vunpack.c.l.b16 %v1125
        %v1190 = vunpack.c.l.b16 %v1126
        %v1191 = vunpack.c.l.b16 %v1127
        %v1192 = vunpack.c.l.b16 %v1128
        %v1193 = vunpack.c.l.b16 %v1129
        %v1194 = vpack.c.b16 %v1163, %v1162
        %v1195 = vpack.c.b16 %v1165, %v1164
        %v1196 = vpack.c.b16 %v1167, %v1166
        %v1197 = vpack.c.b16 %v1169, %v1168
        %v1198 = vpack.c.b16 %v1171, %v1170
        %v1199 = vpack.c.b16 %v1173, %v1172
        %v1200 = vpack.c.b16 %v1175, %v1174
        %v1201 = vpack.c.b16 %v1177, %v1176
        %v1202 = vpack.c.b16 %v1179, %v1178
        %v1203 = vpack.c.b16 %v1181, %v1180
        %v1204 = vpack.c.b16 %v1183, %v1182
        %v1205 = vpack.c.b16 %v1185, %v1184
        %v1206 = vpack.c.b16 %v1187, %v1186
        %v1207 = vpack.c.b16 %v1189, %v1188
        %v1208 = vpack.c.b16 %v1191, %v1190
        %v1209 = vpack.c.b16 %v1193, %v1192
        %1226 = vmatprep.subr.bf16.mxu0 0
        %1227 = vmatpush1.bf16.msra.mxu0 %v1201
        %1228 = vmatprep.subr.bf16.mxu0 0
        %1229 = vmatpush1.bf16.msra.mxu0 %v1200
        %1230 = vmatprep.subr.bf16.mxu0 0
        %1231 = vmatpush1.bf16.msra.mxu0 %v1199
        %1232 = vmatprep.subr.bf16.mxu0 0
        %1233 = vmatpush1.bf16.msra.mxu0 %v1198
        %1234 = vmatprep.subr.bf16.mxu0 0
        %1235 = vmatpush1.bf16.msra.mxu0 %v1197
        %1236 = vmatprep.subr.bf16.mxu0 0
        %1237 = vmatpush1.bf16.msra.mxu0 %v1196
        %1238 = vmatprep.subr.bf16.mxu0 0
        %1239 = vmatpush1.bf16.msra.mxu0 %v1195
        %1240 = vmatprep.subr.bf16.mxu0 0
        %1241 = vmatpush1.bf16.msra.mxu0 %v1194
        %1242 = vmatprep.subr.bf16.mxu0 0
        %1243 = vmatpush2.bf16.msra.mxu0 %v1209
        %1244 = vmatprep.subr.bf16.mxu0 0
        %1245 = vmatpush2.bf16.msra.mxu0 %v1208
        %1246 = vmatprep.subr.bf16.mxu0 0
        %1247 = vmatpush2.bf16.msra.mxu0 %v1207
        %1248 = vmatprep.subr.bf16.mxu0 0
        %1249 = vmatpush2.bf16.msra.mxu0 %v1206
        %1250 = vmatprep.subr.bf16.mxu0 0
        %1251 = vmatpush2.bf16.msra.mxu0 %v1205
        %1252 = vmatprep.subr.bf16.mxu0 0
        %1253 = vmatpush2.bf16.msra.mxu0 %v1204
        %1254 = vmatprep.subr.bf16.mxu0 0
        %1255 = vmatpush2.bf16.msra.mxu0 %v1203
        %1256 = vmatprep.subr.bf16.mxu0 0
        %1257 = vmatpush2.bf16.msra.mxu0 %v1202
        %1258 = vmatprep.mubr.bf16.mxu0 %v1090
        %1259 = vmatmul.mubr.bf16.gmra.mxu0 %v1074
        %v1260 = vpop.f32.mrf.mxu0
        %v1261 = vadd.f32 0.0, %v1260
        %v1262 = vpop.f32.mrf.mxu0
        %v1263 = vpop.f32.mrf.mxu0
        %v1264 = vadd.f32 0.0, %v1263
        %v1265 = vpop.f32.mrf.mxu0
        %1266 = vmatprep.mubr.bf16.mxu0 %v1091
        %1267 = vmatmul.mubr.bf16.gmra.mxu0 %v1075
        %v1268 = vpop.f32.mrf.mxu0
        %v1269 = vadd.f32 0.0, %v1268
        %v1270 = vpop.f32.mrf.mxu0
        %v1271 = vpop.f32.mrf.mxu0
        %v1272 = vadd.f32 0.0, %v1271
        %v1273 = vpop.f32.mrf.mxu0
        %1274 = vmatprep.mubr.bf16.mxu0 %v1092
        %1275 = vmatmul.mubr.bf16.gmra.mxu0 %v1076
        %v1276 = vpop.f32.mrf.mxu0
        %v1277 = vadd.f32 0.0, %v1276
        %v1278 = vpop.f32.mrf.mxu0
        %v1279 = vpop.f32.mrf.mxu0
        %v1280 = vadd.f32 0.0, %v1279
        %v1281 = vpop.f32.mrf.mxu0
        %1282 = vmatprep.mubr.bf16.mxu0 %v1093
        %1283 = vmatmul.mubr.bf16.gmra.mxu0 %v1077
        %v1284 = vpop.f32.mrf.mxu0
        %v1285 = vadd.f32 0.0, %v1284
        %v1286 = vpop.f32.mrf.mxu0
        %v1287 = vpop.f32.mrf.mxu0
        %v1288 = vadd.f32 0.0, %v1287
        %v1289 = vpop.f32.mrf.mxu0
        %1290 = vdwg.mxu0
        %v1291 = vadd.f32 %v891, %v1261
        %v1292 = vadd.f32 %v894, %v1264
        %v1293 = vadd.f32 %v899, %v1269
        %v1294 = vadd.f32 %v902, %v1272
        %v1295 = vadd.f32 %v907, %v1277
        %v1296 = vadd.f32 %v910, %v1280
        %v1297 = vadd.f32 %v915, %v1285
        %v1298 = vadd.f32 %v918, %v1288
        %s1299 = scalar_lea.vmem %s295, 8
        %v1300 = vld [vmem:[%s1299] sm:$0xf]
        %v1301 = vld [vmem:[%s1299 + $0x8] sm:$0xf]
        %v1302 = vld [vmem:[%s1299 + $0x10] sm:$0xf]
        %v1303 = vld [vmem:[%s1299 + $0x18] sm:$0xf]
        %v1304 = vld [vmem:[%s1299 + $0x20] sm:$0xf]
        %v1305 = vld [vmem:[%s1299 + $0x28] sm:$0xf]
        %v1306 = vld [vmem:[%s1299 + $0x30] sm:$0xf]
        %v1307 = vld [vmem:[%s1299 + $0x38] sm:$0xf]
        %s1308 = scalar_lea.vmem %s295, 80
        %v1309 = vld [vmem:[%s1308] sm:$0xf]
        %v1310 = vld [vmem:[%s1308 + $0x8] sm:$0xf]
        %v1311 = vld [vmem:[%s1308 + $0x10] sm:$0xf]
        %v1312 = vld [vmem:[%s1308 + $0x18] sm:$0xf]
        %v1313 = vld [vmem:[%s1308 + $0x20] sm:$0xf]
        %v1314 = vld [vmem:[%s1308 + $0x28] sm:$0xf]
        %v1315 = vld [vmem:[%s1308 + $0x30] sm:$0xf]
        %v1316 = vld [vmem:[%s1308 + $0x38] sm:$0xf]
        %v1325 = vunpack.c.l.b16 %v1300
        %v1326 = vunpack.c.l.b16 %v1301
        %v1327 = vunpack.c.l.b16 %v1302
        %v1328 = vunpack.c.l.b16 %v1303
        %v1329 = vunpack.c.l.b16 %v1304
        %v1330 = vunpack.c.l.b16 %v1305
        %v1331 = vunpack.c.l.b16 %v1306
        %v1332 = vunpack.c.l.b16 %v1307
        %v1333 = vpack.c.b16 %v1326, %v1325
        %v1334 = vpack.c.b16 %v1328, %v1327
        %v1335 = vpack.c.b16 %v1330, %v1329
        %v1336 = vpack.c.b16 %v1332, %v1331
        %v1349 = vunpack.c.l.b16 %v1309
        %v1350 = vunpack.c.l.b16 %v1310
        %v1351 = vunpack.c.l.b16 %v1311
        %v1352 = vunpack.c.l.b16 %v1312
        %v1353 = vunpack.c.l.b16 %v1313
        %v1354 = vunpack.c.l.b16 %v1314
        %v1355 = vunpack.c.l.b16 %v1315
        %v1356 = vunpack.c.l.b16 %v1316
        %v1357 = vpack.c.b16 %v1350, %v1349
        %v1358 = vpack.c.b16 %v1352, %v1351
        %v1359 = vpack.c.b16 %v1354, %v1353
        %v1360 = vpack.c.b16 %v1356, %v1355
        %v1365 = vld [vmem:[%s1 + $0x180] sm:$0xf]
        %v1366 = vld [vmem:[%s1 + $0x184] sm:$0xf]
        %v1367 = vld [vmem:[%s1 + $0x188] sm:$0xf]
        %v1368 = vld [vmem:[%s1 + $0x18c] sm:$0xf]
        %v1369 = vld [vmem:[%s1 + $0x190] sm:$0xf]
        %v1370 = vld [vmem:[%s1 + $0x194] sm:$0xf]
        %v1371 = vld [vmem:[%s1 + $0x198] sm:$0xf]
        %v1372 = vld [vmem:[%s1 + $0x19c] sm:$0xf]
        %v1373 = vld [vmem:[%s1 + $0x1a0] sm:$0xf]
        %v1374 = vld [vmem:[%s1 + $0x1a4] sm:$0xf]
        %v1375 = vld [vmem:[%s1 + $0x1a8] sm:$0xf]
        %v1376 = vld [vmem:[%s1 + $0x1ac] sm:$0xf]
        %v1377 = vld [vmem:[%s1 + $0x1b0] sm:$0xf]
        %v1378 = vld [vmem:[%s1 + $0x1b4] sm:$0xf]
        %v1379 = vld [vmem:[%s1 + $0x1b8] sm:$0xf]
        %v1380 = vld [vmem:[%s1 + $0x1bc] sm:$0xf]
        %v1381 = vld [vmem:[%s1 + $0x1c0] sm:$0xf]
        %v1382 = vld [vmem:[%s1 + $0x1c4] sm:$0xf]
        %v1383 = vld [vmem:[%s1 + $0x1c8] sm:$0xf]
        %v1384 = vld [vmem:[%s1 + $0x1cc] sm:$0xf]
        %v1385 = vld [vmem:[%s1 + $0x1d0] sm:$0xf]
        %v1386 = vld [vmem:[%s1 + $0x1d4] sm:$0xf]
        %v1387 = vld [vmem:[%s1 + $0x1d8] sm:$0xf]
        %v1388 = vld [vmem:[%s1 + $0x1dc] sm:$0xf]
        %v1389 = vld [vmem:[%s1 + $0x1e0] sm:$0xf]
        %v1390 = vld [vmem:[%s1 + $0x1e4] sm:$0xf]
        %v1391 = vld [vmem:[%s1 + $0x1e8] sm:$0xf]
        %v1392 = vld [vmem:[%s1 + $0x1ec] sm:$0xf]
        %v1393 = vld [vmem:[%s1 + $0x1f0] sm:$0xf]
        %v1394 = vld [vmem:[%s1 + $0x1f4] sm:$0xf]
        %v1395 = vld [vmem:[%s1 + $0x1f8] sm:$0xf]
        %v1396 = vld [vmem:[%s1 + $0x1fc] sm:$0xf]
        %v1429 = vunpack.c.l.b16 %v1365
        %v1430 = vunpack.c.l.b16 %v1366
        %v1431 = vunpack.c.l.b16 %v1367
        %v1432 = vunpack.c.l.b16 %v1368
        %v1433 = vunpack.c.l.b16 %v1369
        %v1434 = vunpack.c.l.b16 %v1370
        %v1435 = vunpack.c.l.b16 %v1371
        %v1436 = vunpack.c.l.b16 %v1372
        %v1437 = vunpack.c.l.b16 %v1373
        %v1438 = vunpack.c.l.b16 %v1374
        %v1439 = vunpack.c.l.b16 %v1375
        %v1440 = vunpack.c.l.b16 %v1376
        %v1441 = vunpack.c.l.b16 %v1377
        %v1442 = vunpack.c.l.b16 %v1378
        %v1443 = vunpack.c.l.b16 %v1379
        %v1444 = vunpack.c.l.b16 %v1380
        %v1445 = vunpack.c.l.b16 %v1381
        %v1446 = vunpack.c.l.b16 %v1382
        %v1447 = vunpack.c.l.b16 %v1383
        %v1448 = vunpack.c.l.b16 %v1384
        %v1449 = vunpack.c.l.b16 %v1385
        %v1450 = vunpack.c.l.b16 %v1386
        %v1451 = vunpack.c.l.b16 %v1387
        %v1452 = vunpack.c.l.b16 %v1388
        %v1453 = vunpack.c.l.b16 %v1389
        %v1454 = vunpack.c.l.b16 %v1390
        %v1455 = vunpack.c.l.b16 %v1391
        %v1456 = vunpack.c.l.b16 %v1392
        %v1457 = vunpack.c.l.b16 %v1393
        %v1458 = vunpack.c.l.b16 %v1394
        %v1459 = vunpack.c.l.b16 %v1395
        %v1460 = vunpack.c.l.b16 %v1396
        %v1461 = vpack.c.b16 %v1430, %v1429
        %v1462 = vpack.c.b16 %v1432, %v1431
        %v1463 = vpack.c.b16 %v1434, %v1433
        %v1464 = vpack.c.b16 %v1436, %v1435
        %v1465 = vpack.c.b16 %v1438, %v1437
        %v1466 = vpack.c.b16 %v1440, %v1439
        %v1467 = vpack.c.b16 %v1442, %v1441
        %v1468 = vpack.c.b16 %v1444, %v1443
        %v1469 = vpack.c.b16 %v1446, %v1445
        %v1470 = vpack.c.b16 %v1448, %v1447
        %v1471 = vpack.c.b16 %v1450, %v1449
        %v1472 = vpack.c.b16 %v1452, %v1451
        %v1473 = vpack.c.b16 %v1454, %v1453
        %v1474 = vpack.c.b16 %v1456, %v1455
        %v1475 = vpack.c.b16 %v1458, %v1457
        %v1476 = vpack.c.b16 %v1460, %v1459
        %1493 = vmatprep.subr.bf16.mxu0 0
        %1494 = vmatpush1.bf16.msra.mxu0 %v1468
        %1495 = vmatprep.subr.bf16.mxu0 0
        %1496 = vmatpush1.bf16.msra.mxu0 %v1467
        %1497 = vmatprep.subr.bf16.mxu0 0
        %1498 = vmatpush1.bf16.msra.mxu0 %v1466
        %1499 = vmatprep.subr.bf16.mxu0 0
        %1500 = vmatpush1.bf16.msra.mxu0 %v1465
        %1501 = vmatprep.subr.bf16.mxu0 0
        %1502 = vmatpush1.bf16.msra.mxu0 %v1464
        %1503 = vmatprep.subr.bf16.mxu0 0
        %1504 = vmatpush1.bf16.msra.mxu0 %v1463
        %1505 = vmatprep.subr.bf16.mxu0 0
        %1506 = vmatpush1.bf16.msra.mxu0 %v1462
        %1507 = vmatprep.subr.bf16.mxu0 0
        %1508 = vmatpush1.bf16.msra.mxu0 %v1461
        %1509 = vmatprep.subr.bf16.mxu0 0
        %1510 = vmatpush2.bf16.msra.mxu0 %v1476
        %1511 = vmatprep.subr.bf16.mxu0 0
        %1512 = vmatpush2.bf16.msra.mxu0 %v1475
        %1513 = vmatprep.subr.bf16.mxu0 0
        %1514 = vmatpush2.bf16.msra.mxu0 %v1474
        %1515 = vmatprep.subr.bf16.mxu0 0
        %1516 = vmatpush2.bf16.msra.mxu0 %v1473
        %1517 = vmatprep.subr.bf16.mxu0 0
        %1518 = vmatpush2.bf16.msra.mxu0 %v1472
        %1519 = vmatprep.subr.bf16.mxu0 0
        %1520 = vmatpush2.bf16.msra.mxu0 %v1471
        %1521 = vmatprep.subr.bf16.mxu0 0
        %1522 = vmatpush2.bf16.msra.mxu0 %v1470
        %1523 = vmatprep.subr.bf16.mxu0 0
        %1524 = vmatpush2.bf16.msra.mxu0 %v1469
        %1525 = vmatprep.mubr.bf16.mxu0 %v1357
        %1526 = vmatmul.mubr.bf16.gmra.mxu0 %v1333
        %v1527 = vpop.f32.mrf.mxu0
        %v1528 = vadd.f32 0.0, %v1527
        %v1529 = vpop.f32.mrf.mxu0
        %v1530 = vpop.f32.mrf.mxu0
        %v1531 = vadd.f32 0.0, %v1530
        %v1532 = vpop.f32.mrf.mxu0
        %1533 = vmatprep.mubr.bf16.mxu0 %v1358
        %1534 = vmatmul.mubr.bf16.gmra.mxu0 %v1334
        %v1535 = vpop.f32.mrf.mxu0
        %v1536 = vadd.f32 0.0, %v1535
        %v1537 = vpop.f32.mrf.mxu0
        %v1538 = vpop.f32.mrf.mxu0
        %v1539 = vadd.f32 0.0, %v1538
        %v1540 = vpop.f32.mrf.mxu0
        %1541 = vmatprep.mubr.bf16.mxu0 %v1359
        %1542 = vmatmul.mubr.bf16.gmra.mxu0 %v1335
        %v1543 = vpop.f32.mrf.mxu0
        %v1544 = vadd.f32 0.0, %v1543
        %v1545 = vpop.f32.mrf.mxu0
        %v1546 = vpop.f32.mrf.mxu0
        %v1547 = vadd.f32 0.0, %v1546
        %v1548 = vpop.f32.mrf.mxu0
        %1549 = vmatprep.mubr.bf16.mxu0 %v1360
        %1550 = vmatmul.mubr.bf16.gmra.mxu0 %v1336
        %v1551 = vpop.f32.mrf.mxu0
        %v1552 = vadd.f32 0.0, %v1551
        %v1553 = vpop.f32.mrf.mxu0
        %v1554 = vpop.f32.mrf.mxu0
        %v1555 = vadd.f32 0.0, %v1554
        %v1556 = vpop.f32.mrf.mxu0
        %1557 = vdwg.mxu0
        %v1558 = vadd.f32 %v1291, %v1528
        %v1559 = vadd.f32 %v1292, %v1531
        %v1560 = vadd.f32 %v1293, %v1536
        %v1561 = vadd.f32 %v1294, %v1539
        %v1562 = vadd.f32 %v1295, %v1544
        %v1563 = vadd.f32 %v1296, %v1547
        %v1564 = vadd.f32 %v1297, %v1552
        %v1565 = vadd.f32 %v1298, %v1555
        %v1566 = vld [vmem:[%s1299] sm:$0xf]
        %v1567 = vld [vmem:[%s1299 + $0x4] sm:$0x1]
        %v1568 = vld [vmem:[%s1299 + $0x8] sm:$0xf]
        %v1569 = vld [vmem:[%s1299 + $0xc] sm:$0x1]
        %v1570 = vld [vmem:[%s1299 + $0x10] sm:$0xf]
        %v1571 = vld [vmem:[%s1299 + $0x14] sm:$0x1]
        %v1572 = vld [vmem:[%s1299 + $0x18] sm:$0xf]
        %v1573 = vld [vmem:[%s1299 + $0x1c] sm:$0x1]
        %v1574 = vld [vmem:[%s1299 + $0x20] sm:$0xf]
        %v1575 = vld [vmem:[%s1299 + $0x24] sm:$0x1]
        %v1576 = vld [vmem:[%s1299 + $0x28] sm:$0xf]
        %v1577 = vld [vmem:[%s1299 + $0x2c] sm:$0x1]
        %v1578 = vld [vmem:[%s1299 + $0x30] sm:$0xf]
        %v1579 = vld [vmem:[%s1299 + $0x34] sm:$0x1]
        %v1580 = vld [vmem:[%s1299 + $0x38] sm:$0xf]
        %v1581 = vld [vmem:[%s1299 + $0x3c] sm:$0x1]
        %v1583 = vshrl.u32 %v1566, 16
        %v1585 = vrot.slane %v1583, 4
        %v1586 = vshll.u32 %v1566, 16
        %v1588 = vrot.slane %v1586, 5
        %v1589 = vor.u32 %v1585, %v1588
        %v1590 = vrot.slane %v1589, 4
        %v1592 = vshll.u32 %v1567, 16
        %v1594 = vrot.slane %v1592, 5
        %v1595 = vsel %vm405, %v1590, %v1594
        %v1597 = vshrl.u32 %v1568, 16
        %v1599 = vrot.slane %v1597, 4
        %v1600 = vshll.u32 %v1568, 16
        %v1602 = vrot.slane %v1600, 5
        %v1603 = vor.u32 %v1599, %v1602
        %v1604 = vrot.slane %v1603, 4
        %v1606 = vshll.u32 %v1569, 16
        %v1608 = vrot.slane %v1606, 5
        %v1609 = vsel %vm405, %v1604, %v1608
        %v1611 = vshrl.u32 %v1570, 16
        %v1613 = vrot.slane %v1611, 4
        %v1614 = vshll.u32 %v1570, 16
        %v1616 = vrot.slane %v1614, 5
        %v1617 = vor.u32 %v1613, %v1616
        %v1618 = vrot.slane %v1617, 4
        %v1620 = vshll.u32 %v1571, 16
        %v1622 = vrot.slane %v1620, 5
        %v1623 = vsel %vm405, %v1618, %v1622
        %v1625 = vshrl.u32 %v1572, 16
        %v1627 = vrot.slane %v1625, 4
        %v1628 = vshll.u32 %v1572, 16
        %v1630 = vrot.slane %v1628, 5
        %v1631 = vor.u32 %v1627, %v1630
        %v1632 = vrot.slane %v1631, 4
        %v1634 = vshll.u32 %v1573, 16
        %v1636 = vrot.slane %v1634, 5
        %v1637 = vsel %vm405, %v1632, %v1636
        %v1639 = vshrl.u32 %v1574, 16
        %v1641 = vrot.slane %v1639, 4
        %v1642 = vshll.u32 %v1574, 16
        %v1644 = vrot.slane %v1642, 5
        %v1645 = vor.u32 %v1641, %v1644
        %v1646 = vrot.slane %v1645, 4
        %v1648 = vshll.u32 %v1575, 16
        %v1650 = vrot.slane %v1648, 5
        %v1651 = vsel %vm405, %v1646, %v1650
        %v1653 = vshrl.u32 %v1576, 16
        %v1655 = vrot.slane %v1653, 4
        %v1656 = vshll.u32 %v1576, 16
        %v1658 = vrot.slane %v1656, 5
        %v1659 = vor.u32 %v1655, %v1658
        %v1660 = vrot.slane %v1659, 4
        %v1662 = vshll.u32 %v1577, 16
        %v1664 = vrot.slane %v1662, 5
        %v1665 = vsel %vm405, %v1660, %v1664
        %v1667 = vshrl.u32 %v1578, 16
        %v1669 = vrot.slane %v1667, 4
        %v1670 = vshll.u32 %v1578, 16
        %v1672 = vrot.slane %v1670, 5
        %v1673 = vor.u32 %v1669, %v1672
        %v1674 = vrot.slane %v1673, 4
        %v1676 = vshll.u32 %v1579, 16
        %v1678 = vrot.slane %v1676, 5
        %v1679 = vsel %vm405, %v1674, %v1678
        %v1681 = vshrl.u32 %v1580, 16
        %v1683 = vrot.slane %v1681, 4
        %v1684 = vshll.u32 %v1580, 16
        %v1686 = vrot.slane %v1684, 5
        %v1687 = vor.u32 %v1683, %v1686
        %v1688 = vrot.slane %v1687, 4
        %v1690 = vshll.u32 %v1581, 16
        %v1692 = vrot.slane %v1690, 5
        %v1693 = vsel %vm405, %v1688, %v1692
        %v1694 = vld [vmem:[%s1 + $0x200] sm:$0xf]
        %v1695 = vld [vmem:[%s1 + $0x204] sm:$0xf]
        %v1696 = vld [vmem:[%s1 + $0x208] sm:$0xf]
        %v1697 = vld [vmem:[%s1 + $0x20c] sm:$0xf]
        %v1698 = vld [vmem:[%s1 + $0x210] sm:$0xf]
        %v1699 = vld [vmem:[%s1 + $0x214] sm:$0xf]
        %v1700 = vld [vmem:[%s1 + $0x218] sm:$0xf]
        %v1701 = vld [vmem:[%s1 + $0x21c] sm:$0xf]
        %v1702 = vld [vmem:[%s1 + $0x220] sm:$0xf]
        %v1703 = vld [vmem:[%s1 + $0x224] sm:$0xf]
        %v1704 = vld [vmem:[%s1 + $0x228] sm:$0xf]
        %v1705 = vld [vmem:[%s1 + $0x22c] sm:$0xf]
        %v1706 = vld [vmem:[%s1 + $0x230] sm:$0xf]
        %v1707 = vld [vmem:[%s1 + $0x234] sm:$0xf]
        %v1708 = vld [vmem:[%s1 + $0x238] sm:$0xf]
        %v1709 = vld [vmem:[%s1 + $0x23c] sm:$0xf]
        %v1710 = vunpack.c.l.b16 %v1595
        %v1711 = vunpack.c.l.b16 %v1609
        %v1712 = vunpack.c.l.b16 %v1623
        %v1713 = vunpack.c.l.b16 %v1637
        %v1714 = vunpack.c.l.b16 %v1651
        %v1715 = vunpack.c.l.b16 %v1665
        %v1716 = vunpack.c.l.b16 %v1679
        %v1717 = vunpack.c.l.b16 %v1693
        %v1718 = vpack.c.b16 %v1711, %v1710
        %v1719 = vpack.c.b16 %v1713, %v1712
        %v1720 = vpack.c.b16 %v1715, %v1714
        %v1721 = vpack.c.b16 %v1717, %v1716
        %v1742 = vunpack.c.l.b16 %v1694
        %v1743 = vunpack.c.l.b16 %v1695
        %v1744 = vunpack.c.l.b16 %v1696
        %v1745 = vunpack.c.l.b16 %v1697
        %v1746 = vunpack.c.l.b16 %v1698
        %v1747 = vunpack.c.l.b16 %v1699
        %v1748 = vunpack.c.l.b16 %v1700
        %v1749 = vunpack.c.l.b16 %v1701
        %v1750 = vunpack.c.l.b16 %v1702
        %v1751 = vunpack.c.l.b16 %v1703
        %v1752 = vunpack.c.l.b16 %v1704
        %v1753 = vunpack.c.l.b16 %v1705
        %v1754 = vunpack.c.l.b16 %v1706
        %v1755 = vunpack.c.l.b16 %v1707
        %v1756 = vunpack.c.l.b16 %v1708
        %v1757 = vunpack.c.l.b16 %v1709
        %v1758 = vpack.c.b16 %v1743, %v1742
        %v1759 = vpack.c.b16 %v1745, %v1744
        %v1760 = vpack.c.b16 %v1747, %v1746
        %v1761 = vpack.c.b16 %v1749, %v1748
        %v1762 = vpack.c.b16 %v1751, %v1750
        %v1763 = vpack.c.b16 %v1753, %v1752
        %v1764 = vpack.c.b16 %v1755, %v1754
        %v1765 = vpack.c.b16 %v1757, %v1756
        %1774 = vmatprep.subr.bf16.mxu0 0
        %1775 = vmatpush1.bf16.msra.mxu0 %v1765
        %1776 = vmatprep.subr.bf16.mxu0 0
        %1777 = vmatpush1.bf16.msra.mxu0 %v1764
        %1778 = vmatprep.subr.bf16.mxu0 0
        %1779 = vmatpush1.bf16.msra.mxu0 %v1763
        %1780 = vmatprep.subr.bf16.mxu0 0
        %1781 = vmatpush1.bf16.msra.mxu0 %v1762
        %1782 = vmatprep.subr.bf16.mxu0 0
        %1783 = vmatpush1.bf16.msra.mxu0 %v1761
        %1784 = vmatprep.subr.bf16.mxu0 0
        %1785 = vmatpush1.bf16.msra.mxu0 %v1760
        %1786 = vmatprep.subr.bf16.mxu0 0
        %1787 = vmatpush1.bf16.msra.mxu0 %v1759
        %1788 = vmatprep.subr.bf16.mxu0 0
        %1789 = vmatpush1.bf16.msra.mxu0 %v1758
        %1790 = vmatprep.subr.bf16.mxu0 0
        %1791 = vmatpush2.bf16.msra.mxu0 0
        %1792 = vmatprep.subr.bf16.mxu0 0
        %1793 = vmatpush2.bf16.msra.mxu0 0
        %1794 = vmatprep.subr.bf16.mxu0 0
        %1795 = vmatpush2.bf16.msra.mxu0 0
        %1796 = vmatprep.subr.bf16.mxu0 0
        %1797 = vmatpush2.bf16.msra.mxu0 0
        %1798 = vmatprep.subr.bf16.mxu0 0
        %1799 = vmatpush2.bf16.msra.mxu0 0
        %1800 = vmatprep.subr.bf16.mxu0 0
        %1801 = vmatpush2.bf16.msra.mxu0 0
        %1802 = vmatprep.subr.bf16.mxu0 0
        %1803 = vmatpush2.bf16.msra.mxu0 0
        %1804 = vmatprep.subr.bf16.mxu0 0
        %1805 = vmatpush2.bf16.msra.mxu0 0
        %1806 = vmatprep.mubr.bf16.mxu0 0
        %1807 = vmatmul.mubr.bf16.gmra.mxu0 %v1718
        %v1808 = vpop.f32.mrf.mxu0
        %v1809 = vadd.f32 0.0, %v1808
        %v1810 = vpop.f32.mrf.mxu0
        %v1811 = vpop.f32.mrf.mxu0
        %v1812 = vadd.f32 0.0, %v1811
        %v1813 = vpop.f32.mrf.mxu0
        %1814 = vmatprep.mubr.bf16.mxu0 0
        %1815 = vmatmul.mubr.bf16.gmra.mxu0 %v1719
        %v1816 = vpop.f32.mrf.mxu0
        %v1817 = vadd.f32 0.0, %v1816
        %v1818 = vpop.f32.mrf.mxu0
        %v1819 = vpop.f32.mrf.mxu0
        %v1820 = vadd.f32 0.0, %v1819
        %v1821 = vpop.f32.mrf.mxu0
        %1822 = vmatprep.mubr.bf16.mxu0 0
        %1823 = vmatmul.mubr.bf16.gmra.mxu0 %v1720
        %v1824 = vpop.f32.mrf.mxu0
        %v1825 = vadd.f32 0.0, %v1824
        %v1826 = vpop.f32.mrf.mxu0
        %v1827 = vpop.f32.mrf.mxu0
        %v1828 = vadd.f32 0.0, %v1827
        %v1829 = vpop.f32.mrf.mxu0
        %1830 = vmatprep.mubr.bf16.mxu0 0
        %1831 = vmatmul.mubr.bf16.gmra.mxu0 %v1721
        %v1832 = vpop.f32.mrf.mxu0
        %v1833 = vadd.f32 0.0, %v1832
        %v1834 = vpop.f32.mrf.mxu0
        %v1835 = vpop.f32.mrf.mxu0
        %v1836 = vadd.f32 0.0, %v1835
        %v1837 = vpop.f32.mrf.mxu0
        %1838 = vdwg.mxu0
        %v1839 = vadd.f32 %v1558, %v1809
        %v1840 = vadd.f32 %v1559, %v1812
        %v1841 = vadd.f32 %v1560, %v1817
        %v1842 = vadd.f32 %v1561, %v1820
        %v1843 = vadd.f32 %v1562, %v1825
        %v1844 = vadd.f32 %v1563, %v1828
        %v1845 = vadd.f32 %v1564, %v1833
        %v1846 = vadd.f32 %v1565, %v1836
        %v1847 = vld [vmem:[%s2] sm:$0x1]
        %v1849 = vlaneseq
        %v1850 = vshrl.u32 %v1849, 7
        %v1851 = vsub.s32 0, %v1850
        %v1852 = vrot.slane %v1847, %v1851
        %v1854 = vadd.f32 %v1839, %v1852
        %v1855 = vadd.f32 %v1840, %v1852
        %v1856 = vadd.f32 %v1841, %v1852
        %v1857 = vadd.f32 %v1842, %v1852
        %v1858 = vadd.f32 %v1843, %v1852
        %v1859 = vadd.f32 %v1844, %v1852
        %v1860 = vadd.f32 %v1845, %v1852
        %v1861 = vadd.f32 %v1846, %v1852
        %v1862 = vmax.f32 %v1854, 0.0
        %v1863 = vmax.f32 %v1855, 0.0
        %v1864 = vmax.f32 %v1856, 0.0
        %v1865 = vmax.f32 %v1857, 0.0
        %v1866 = vmax.f32 %v1858, 0.0
        %v1867 = vmax.f32 %v1859, 0.0
        %v1868 = vmax.f32 %v1860, 0.0
        %v1869 = vmax.f32 %v1861, 0.0
        %v1870 = vpack.c.bf16 %v1862, %v1862
        %v1871 = vpack.c.bf16 %v1863, %v1863
        %v1872 = vpack.c.bf16 %v1864, %v1864
        %v1873 = vpack.c.bf16 %v1865, %v1865
        %v1874 = vpack.c.bf16 %v1866, %v1866
        %v1875 = vpack.c.bf16 %v1867, %v1867
        %v1876 = vpack.c.bf16 %v1868, %v1868
        %v1877 = vpack.c.bf16 %v1869, %v1869
        %1878 = vst [vmem:[#allocation2] sm:$0xf] 0
        %1879 = vst [vmem:[#allocation2 + $0x4] sm:$0x3] 0
        %s1880 = scalar_lea.vmem [#allocation2], 72
        %1881 = vst [vmem:[%s1880] sm:$0xf] 0
        %1882 = vst [vmem:[%s1880 + $0x4] sm:$0x3] 0
        %s1883 = scalar_lea.vmem [#allocation2], 8
        %1884 = vst [vmem:[%s1883] sm:$0x1] 0
        %1885 = vst [vmem:[%s1883 + $0x8] sm:$0x1] 0
        %1886 = vst [vmem:[%s1883 + $0x10] sm:$0x1] 0
        %1887 = vst [vmem:[%s1883 + $0x18] sm:$0x1] 0
        %1888 = vst [vmem:[%s1883 + $0x20] sm:$0x1] 0
        %1889 = vst [vmem:[%s1883 + $0x28] sm:$0x1] 0
        %1890 = vst [vmem:[%s1883 + $0x30] sm:$0x1] 0
        %1891 = vst [vmem:[%s1883 + $0x38] sm:$0x1] 0
        %1892 = vst [vmem:[%s1883 + $0x4] sm:$0x2] 0
        %1893 = vst [vmem:[%s1883 + $0xc] sm:$0x2] 0
        %1894 = vst [vmem:[%s1883 + $0x14] sm:$0x2] 0
        %1895 = vst [vmem:[%s1883 + $0x1c] sm:$0x2] 0
        %1896 = vst [vmem:[%s1883 + $0x24] sm:$0x2] 0
        %1897 = vst [vmem:[%s1883 + $0x2c] sm:$0x2] 0
        %1898 = vst [vmem:[%s1883 + $0x34] sm:$0x2] 0
        %1899 = vst [vmem:[%s1883 + $0x3c] sm:$0x2] 0
        %v1908 = vunpack.c.l.b16 %v1870
        %v1909 = vunpack.c.l.b16 %v1871
        %v1910 = vunpack.c.l.b16 %v1872
        %v1911 = vunpack.c.l.b16 %v1873
        %v1912 = vunpack.c.l.b16 %v1874
        %v1913 = vunpack.c.l.b16 %v1875
        %v1914 = vunpack.c.l.b16 %v1876
        %v1915 = vunpack.c.l.b16 %v1877
        %v1916 = vpack.c.b16 %v1908, %v1908
        %v1917 = vpack.c.b16 %v1909, %v1909
        %v1918 = vpack.c.b16 %v1910, %v1910
        %v1919 = vpack.c.b16 %v1911, %v1911
        %v1920 = vpack.c.b16 %v1912, %v1912
        %v1921 = vpack.c.b16 %v1913, %v1913
        %v1922 = vpack.c.b16 %v1914, %v1914
        %v1923 = vpack.c.b16 %v1915, %v1915
        %v1924 = vrot.slane %v1916, 7
        %v1925 = vrot.slane %v1924, 4
        %v1926 = vrot.slane %v1917, 7
        %v1927 = vrot.slane %v1926, 4
        %v1928 = vrot.slane %v1918, 7
        %v1929 = vrot.slane %v1928, 4
        %v1930 = vrot.slane %v1919, 7
        %v1931 = vrot.slane %v1930, 4
        %v1932 = vrot.slane %v1920, 7
        %v1933 = vrot.slane %v1932, 4
        %v1934 = vrot.slane %v1921, 7
        %v1935 = vrot.slane %v1934, 4
        %v1936 = vrot.slane %v1922, 7
        %v1937 = vrot.slane %v1936, 4
        %v1938 = vrot.slane %v1923, 7
        %v1939 = vrot.slane %v1938, 4
        %1956 = vst [vmem:[%s1883] sm:$0xe] %v1924
        %1957 = vst [vmem:[%s1883 + $0x4] sm:$0x1] %v1925
        %1958 = vst [vmem:[%s1883 + $0x8] sm:$0xe] %v1926
        %1959 = vst [vmem:[%s1883 + $0xc] sm:$0x1] %v1927
        %1960 = vst [vmem:[%s1883 + $0x10] sm:$0xe] %v1928
        %1961 = vst [vmem:[%s1883 + $0x14] sm:$0x1] %v1929
        %1962 = vst [vmem:[%s1883 + $0x18] sm:$0xe] %v1930
        %1963 = vst [vmem:[%s1883 + $0x1c] sm:$0x1] %v1931
        %1964 = vst [vmem:[%s1883 + $0x20] sm:$0xe] %v1932
        %1965 = vst [vmem:[%s1883 + $0x24] sm:$0x1] %v1933
        %1966 = vst [vmem:[%s1883 + $0x28] sm:$0xe] %v1934
        %1967 = vst [vmem:[%s1883 + $0x2c] sm:$0x1] %v1935
        %1968 = vst [vmem:[%s1883 + $0x30] sm:$0xe] %v1936
        %1969 = vst [vmem:[%s1883 + $0x34] sm:$0x1] %v1937
        %1970 = vst [vmem:[%s1883 + $0x38] sm:$0xe] %v1938
        %1971 = vst [vmem:[%s1883 + $0x3c] sm:$0x1] %v1939
        %v1972 = vld [vmem:[#allocation2] sm:$0xf]
        %v1973 = vld [vmem:[#allocation2 + $0x4] sm:$0x1]
        %v1974 = vld [vmem:[#allocation2 + $0x8] sm:$0xf]
        %v1975 = vld [vmem:[#allocation2 + $0xc] sm:$0x1]
        %v1976 = vld [vmem:[#allocation2 + $0x10] sm:$0xf]
        %v1977 = vld [vmem:[#allocation2 + $0x14] sm:$0x1]
        %v1978 = vld [vmem:[#allocation2 + $0x18] sm:$0xf]
        %v1979 = vld [vmem:[#allocation2 + $0x1c] sm:$0x1]
        %v1980 = vld [vmem:[#allocation2 + $0x20] sm:$0xf]
        %v1981 = vld [vmem:[#allocation2 + $0x24] sm:$0x1]
        %v1982 = vld [vmem:[#allocation2 + $0x28] sm:$0xf]
        %v1983 = vld [vmem:[#allocation2 + $0x2c] sm:$0x1]
        %v1984 = vld [vmem:[#allocation2 + $0x30] sm:$0xf]
        %v1985 = vld [vmem:[#allocation2 + $0x34] sm:$0x1]
        %v1986 = vld [vmem:[#allocation2 + $0x38] sm:$0xf]
        %v1987 = vld [vmem:[#allocation2 + $0x3c] sm:$0x1]
        %v1989 = vshrl.u32 %v1972, 16
        %v1991 = vrot.slane %v1989, 4
        %v1992 = vshll.u32 %v1972, 16
        %v1994 = vrot.slane %v1992, 5
        %v1995 = vor.u32 %v1991, %v1994
        %v1996 = vrot.slane %v1995, 4
        %v1998 = vshll.u32 %v1973, 16
        %v2000 = vrot.slane %v1998, 5
        %v2001 = vsel %vm405, %v1996, %v2000
        %v2003 = vshrl.u32 %v1974, 16
        %v2005 = vrot.slane %v2003, 4
        %v2006 = vshll.u32 %v1974, 16
        %v2008 = vrot.slane %v2006, 5
        %v2009 = vor.u32 %v2005, %v2008
        %v2010 = vrot.slane %v2009, 4
        %v2012 = vshll.u32 %v1975, 16
        %v2014 = vrot.slane %v2012, 5
        %v2015 = vsel %vm405, %v2010, %v2014
        %v2017 = vshrl.u32 %v1976, 16
        %v2019 = vrot.slane %v2017, 4
        %v2020 = vshll.u32 %v1976, 16
        %v2022 = vrot.slane %v2020, 5
        %v2023 = vor.u32 %v2019, %v2022
        %v2024 = vrot.slane %v2023, 4
        %v2026 = vshll.u32 %v1977, 16
        %v2028 = vrot.slane %v2026, 5
        %v2029 = vsel %vm405, %v2024, %v2028
        %v2031 = vshrl.u32 %v1978, 16
        %v2033 = vrot.slane %v2031, 4
        %v2034 = vshll.u32 %v1978, 16
        %v2036 = vrot.slane %v2034, 5
        %v2037 = vor.u32 %v2033, %v2036
        %v2038 = vrot.slane %v2037, 4
        %v2040 = vshll.u32 %v1979, 16
        %v2042 = vrot.slane %v2040, 5
        %v2043 = vsel %vm405, %v2038, %v2042
        %v2045 = vshrl.u32 %v1980, 16
        %v2047 = vrot.slane %v2045, 4
        %v2048 = vshll.u32 %v1980, 16
        %v2050 = vrot.slane %v2048, 5
        %v2051 = vor.u32 %v2047, %v2050
        %v2052 = vrot.slane %v2051, 4
        %v2054 = vshll.u32 %v1981, 16
        %v2056 = vrot.slane %v2054, 5
        %v2057 = vsel %vm405, %v2052, %v2056
        %v2059 = vshrl.u32 %v1982, 16
        %v2061 = vrot.slane %v2059, 4
        %v2062 = vshll.u32 %v1982, 16
        %v2064 = vrot.slane %v2062, 5
        %v2065 = vor.u32 %v2061, %v2064
        %v2066 = vrot.slane %v2065, 4
        %v2068 = vshll.u32 %v1983, 16
        %v2070 = vrot.slane %v2068, 5
        %v2071 = vsel %vm405, %v2066, %v2070
        %v2073 = vshrl.u32 %v1984, 16
        %v2075 = vrot.slane %v2073, 4
        %v2076 = vshll.u32 %v1984, 16
        %v2078 = vrot.slane %v2076, 5
        %v2079 = vor.u32 %v2075, %v2078
        %v2080 = vrot.slane %v2079, 4
        %v2082 = vshll.u32 %v1985, 16
        %v2084 = vrot.slane %v2082, 5
        %v2085 = vsel %vm405, %v2080, %v2084
        %v2087 = vshrl.u32 %v1986, 16
        %v2089 = vrot.slane %v2087, 4
        %v2090 = vshll.u32 %v1986, 16
        %v2092 = vrot.slane %v2090, 5
        %v2093 = vor.u32 %v2089, %v2092
        %v2094 = vrot.slane %v2093, 4
        %v2096 = vshll.u32 %v1987, 16
        %v2098 = vrot.slane %v2096, 5
        %v2099 = vsel %vm405, %v2094, %v2098
        %v2100 = vld [vmem:[#allocation2] sm:$0xe]
        %v2101 = vld [vmem:[#allocation2 + $0x8] sm:$0xe]
        %v2102 = vld [vmem:[#allocation2 + $0x10] sm:$0xe]
        %v2103 = vld [vmem:[#allocation2 + $0x18] sm:$0xe]
        %v2104 = vld [vmem:[#allocation2 + $0x20] sm:$0xe]
        %v2105 = vld [vmem:[#allocation2 + $0x28] sm:$0xe]
        %v2106 = vld [vmem:[#allocation2 + $0x30] sm:$0xe]
        %v2107 = vld [vmem:[#allocation2 + $0x38] sm:$0xe]
        %vm2124 = vcmask 1042432
        %vm2125 = vcmask 1046532
        %vm2126 = vmor %vm2124, %vm2125
        %v2127 = vrot.slane %v2100, 5
        %v2128 = vrot.slane %v2127, 4
        %v2129 = vrot.slane %v1973, 5
        %v2130 = vsel %vm2126, %v2128, %v2129
        %v2131 = vrot.slane %v2101, 5
        %v2132 = vrot.slane %v2131, 4
        %v2133 = vrot.slane %v1975, 5
        %v2134 = vsel %vm2126, %v2132, %v2133
        %v2135 = vrot.slane %v2102, 5
        %v2136 = vrot.slane %v2135, 4
        %v2137 = vrot.slane %v1977, 5
        %v2138 = vsel %vm2126, %v2136, %v2137
        %v2139 = vrot.slane %v2103, 5
        %v2140 = vrot.slane %v2139, 4
        %v2141 = vrot.slane %v1979, 5
        %v2142 = vsel %vm2126, %v2140, %v2141
        %v2143 = vrot.slane %v2104, 5
        %v2144 = vrot.slane %v2143, 4
        %v2145 = vrot.slane %v1981, 5
        %v2146 = vsel %vm2126, %v2144, %v2145
        %v2147 = vrot.slane %v2105, 5
        %v2148 = vrot.slane %v2147, 4
        %v2149 = vrot.slane %v1983, 5
        %v2150 = vsel %vm2126, %v2148, %v2149
        %v2151 = vrot.slane %v2106, 5
        %v2152 = vrot.slane %v2151, 4
        %v2153 = vrot.slane %v1985, 5
        %v2154 = vsel %vm2126, %v2152, %v2153
        %v2155 = vrot.slane %v2107, 5
        %v2156 = vrot.slane %v2155, 4
        %v2157 = vrot.slane %v1987, 5
        %v2158 = vsel %vm2126, %v2156, %v2157
        %v2159 = vunpack.c.l.b16 %v2001
        %v2160 = vunpack.c.l.b16 %v2015
        %v2161 = vunpack.c.l.b16 %v2029
        %v2162 = vunpack.c.l.b16 %v2043
        %v2163 = vunpack.c.l.b16 %v2057
        %v2164 = vunpack.c.l.b16 %v2071
        %v2165 = vunpack.c.l.b16 %v2085
        %v2166 = vunpack.c.l.b16 %v2099
        %v2167 = vpack.c.b16 %v2160, %v2159
        %v2168 = vpack.c.b16 %v2162, %v2161
        %v2169 = vpack.c.b16 %v2164, %v2163
        %v2170 = vpack.c.b16 %v2166, %v2165
        %v2175 = vunpack.c.l.b16 %v2130
        %v2176 = vunpack.c.l.b16 %v2134
        %v2177 = vunpack.c.l.b16 %v2138
        %v2178 = vunpack.c.l.b16 %v2142
        %v2179 = vunpack.c.l.b16 %v2146
        %v2180 = vunpack.c.l.b16 %v2150
        %v2181 = vunpack.c.l.b16 %v2154
        %v2182 = vunpack.c.l.b16 %v2158
        %v2183 = vpack.c.b16 %v2176, %v2175
        %v2184 = vpack.c.b16 %v2178, %v2177
        %v2185 = vpack.c.b16 %v2180, %v2179
        %v2186 = vpack.c.b16 %v2182, %v2181
        %v2191 = vld [vmem:[#allocation3] sm:$0xf]
        %v2192 = vld [vmem:[#allocation3 + $0x4] sm:$0xf]
        %v2193 = vld [vmem:[#allocation3 + $0x8] sm:$0xf]
        %v2194 = vld [vmem:[#allocation3 + $0xc] sm:$0xf]
        %v2195 = vld [vmem:[#allocation3 + $0x10] sm:$0xf]
        %v2196 = vld [vmem:[#allocation3 + $0x14] sm:$0xf]
        %v2197 = vld [vmem:[#allocation3 + $0x18] sm:$0xf]
        %v2198 = vld [vmem:[#allocation3 + $0x1c] sm:$0xf]
        %v2199 = vld [vmem:[#allocation3 + $0x20] sm:$0xf]
        %v2200 = vld [vmem:[#allocation3 + $0x24] sm:$0xf]
        %v2201 = vld [vmem:[#allocation3 + $0x28] sm:$0xf]
        %v2202 = vld [vmem:[#allocation3 + $0x2c] sm:$0xf]
        %v2203 = vld [vmem:[#allocation3 + $0x30] sm:$0xf]
        %v2204 = vld [vmem:[#allocation3 + $0x34] sm:$0xf]
        %v2205 = vld [vmem:[#allocation3 + $0x38] sm:$0xf]
        %v2206 = vld [vmem:[#allocation3 + $0x3c] sm:$0xf]
        %v2207 = vld [vmem:[#allocation3 + $0x40] sm:$0xf]
        %v2208 = vld [vmem:[#allocation3 + $0x44] sm:$0xf]
        %v2209 = vld [vmem:[#allocation3 + $0x48] sm:$0xf]
        %v2210 = vld [vmem:[#allocation3 + $0x4c] sm:$0xf]
        %v2211 = vld [vmem:[#allocation3 + $0x50] sm:$0xf]
        %v2212 = vld [vmem:[#allocation3 + $0x54] sm:$0xf]
        %v2213 = vld [vmem:[#allocation3 + $0x58] sm:$0xf]
        %v2214 = vld [vmem:[#allocation3 + $0x5c] sm:$0xf]
        %v2215 = vld [vmem:[#allocation3 + $0x60] sm:$0xf]
        %v2216 = vld [vmem:[#allocation3 + $0x64] sm:$0xf]
        %v2217 = vld [vmem:[#allocation3 + $0x68] sm:$0xf]
        %v2218 = vld [vmem:[#allocation3 + $0x6c] sm:$0xf]
        %v2219 = vld [vmem:[#allocation3 + $0x70] sm:$0xf]
        %v2220 = vld [vmem:[#allocation3 + $0x74] sm:$0xf]
        %v2221 = vld [vmem:[#allocation3 + $0x78] sm:$0xf]
        %v2222 = vld [vmem:[#allocation3 + $0x7c] sm:$0xf]
        %v2223 = vld [vmem:[#allocation2 + $0x4] sm:$0x3]
        %v2224 = vld [vmem:[#allocation2 + $0xc] sm:$0x3]
        %v2225 = vld [vmem:[#allocation2 + $0x14] sm:$0x3]
        %v2226 = vld [vmem:[#allocation2 + $0x1c] sm:$0x3]
        %v2227 = vld [vmem:[#allocation2 + $0x24] sm:$0x3]
        %v2228 = vld [vmem:[#allocation2 + $0x2c] sm:$0x3]
        %v2229 = vld [vmem:[#allocation2 + $0x34] sm:$0x3]
        %v2230 = vld [vmem:[#allocation2 + $0x3c] sm:$0x3]
        %vm2231 = vsmask.f32 2304
        %vm2232 = vsmask.f32 6416
        %vm2233 = vmor %vm2231, %vm2232
        %v2235 = vshrl.u32 %v2100, 16
        %v2237 = vrot.slane %v2235, 5
        %v2238 = vshll.u32 %v2100, 16
        %v2240 = vrot.slane %v2238, 6
        %v2241 = vor.u32 %v2237, %v2240
        %v2242 = vrot.slane %v2241, 4
        %v2244 = vshrl.u32 %v2223, 16
        %v2246 = vrot.slane %v2244, 5
        %v2247 = vshll.u32 %v2223, 16
        %v2249 = vrot.slane %v2247, 6
        %v2250 = vor.u32 %v2246, %v2249
        %v2251 = vsel %vm2233, %v2242, %v2250
        %v2253 = vshrl.u32 %v2101, 16
        %v2255 = vrot.slane %v2253, 5
        %v2256 = vshll.u32 %v2101, 16
        %v2258 = vrot.slane %v2256, 6
        %v2259 = vor.u32 %v2255, %v2258
        %v2260 = vrot.slane %v2259, 4
        %v2262 = vshrl.u32 %v2224, 16
        %v2264 = vrot.slane %v2262, 5
        %v2265 = vshll.u32 %v2224, 16
        %v2267 = vrot.slane %v2265, 6
        %v2268 = vor.u32 %v2264, %v2267
        %v2269 = vsel %vm2233, %v2260, %v2268
        %v2271 = vshrl.u32 %v2102, 16
        %v2273 = vrot.slane %v2271, 5
        %v2274 = vshll.u32 %v2102, 16
        %v2276 = vrot.slane %v2274, 6
        %v2277 = vor.u32 %v2273, %v2276
        %v2278 = vrot.slane %v2277, 4
        %v2280 = vshrl.u32 %v2225, 16
        %v2282 = vrot.slane %v2280, 5
        %v2283 = vshll.u32 %v2225, 16
        %v2285 = vrot.slane %v2283, 6
        %v2286 = vor.u32 %v2282, %v2285
        %v2287 = vsel %vm2233, %v2278, %v2286
        %v2289 = vshrl.u32 %v2103, 16
        %v2291 = vrot.slane %v2289, 5
        %v2292 = vshll.u32 %v2103, 16
        %v2294 = vrot.slane %v2292, 6
        %v2295 = vor.u32 %v2291, %v2294
        %v2296 = vrot.slane %v2295, 4
        %v2298 = vshrl.u32 %v2226, 16
        %v2300 = vrot.slane %v2298, 5
        %v2301 = vshll.u32 %v2226, 16
        %v2303 = vrot.slane %v2301, 6
        %v2304 = vor.u32 %v2300, %v2303
        %v2305 = vsel %vm2233, %v2296, %v2304
        %v2307 = vshrl.u32 %v2104, 16
        %v2309 = vrot.slane %v2307, 5
        %v2310 = vshll.u32 %v2104, 16
        %v2312 = vrot.slane %v2310, 6
        %v2313 = vor.u32 %v2309, %v2312
        %v2314 = vrot.slane %v2313, 4
        %v2316 = vshrl.u32 %v2227, 16
        %v2318 = vrot.slane %v2316, 5
        %v2319 = vshll.u32 %v2227, 16
        %v2321 = vrot.slane %v2319, 6
        %v2322 = vor.u32 %v2318, %v2321
        %v2323 = vsel %vm2233, %v2314, %v2322
        %v2325 = vshrl.u32 %v2105, 16
        %v2327 = vrot.slane %v2325, 5
        %v2328 = vshll.u32 %v2105, 16
        %v2330 = vrot.slane %v2328, 6
        %v2331 = vor.u32 %v2327, %v2330
        %v2332 = vrot.slane %v2331, 4
        %v2334 = vshrl.u32 %v2228, 16
        %v2336 = vrot.slane %v2334, 5
        %v2337 = vshll.u32 %v2228, 16
        %v2339 = vrot.slane %v2337, 6
        %v2340 = vor.u32 %v2336, %v2339
        %v2341 = vsel %vm2233, %v2332, %v2340
        %v2343 = vshrl.u32 %v2106, 16
        %v2345 = vrot.slane %v2343, 5
        %v2346 = vshll.u32 %v2106, 16
        %v2348 = vrot.slane %v2346, 6
        %v2349 = vor.u32 %v2345, %v2348
        %v2350 = vrot.slane %v2349, 4
        %v2352 = vshrl.u32 %v2229, 16
        %v2354 = vrot.slane %v2352, 5
        %v2355 = vshll.u32 %v2229, 16
        %v2357 = vrot.slane %v2355, 6
        %v2358 = vor.u32 %v2354, %v2357
        %v2359 = vsel %vm2233, %v2350, %v2358
        %v2361 = vshrl.u32 %v2107, 16
        %v2363 = vrot.slane %v2361, 5
        %v2364 = vshll.u32 %v2107, 16
        %v2366 = vrot.slane %v2364, 6
        %v2367 = vor.u32 %v2363, %v2366
        %v2368 = vrot.slane %v2367, 4
        %v2370 = vshrl.u32 %v2230, 16
        %v2372 = vrot.slane %v2370, 5
        %v2373 = vshll.u32 %v2230, 16
        %v2375 = vrot.slane %v2373, 6
        %v2376 = vor.u32 %v2372, %v2375
        %v2377 = vsel %vm2233, %v2368, %v2376
        %v2378 = vld [vmem:[%s1883] sm:$0xf]
        %v2379 = vld [vmem:[%s1883 + $0x4] sm:$0x1]
        %v2380 = vld [vmem:[%s1883 + $0x8] sm:$0xf]
        %v2381 = vld [vmem:[%s1883 + $0xc] sm:$0x1]
        %v2382 = vld [vmem:[%s1883 + $0x10] sm:$0xf]
        %v2383 = vld [vmem:[%s1883 + $0x14] sm:$0x1]
        %v2384 = vld [vmem:[%s1883 + $0x18] sm:$0xf]
        %v2385 = vld [vmem:[%s1883 + $0x1c] sm:$0x1]
        %v2386 = vld [vmem:[%s1883 + $0x20] sm:$0xf]
        %v2387 = vld [vmem:[%s1883 + $0x24] sm:$0x1]
        %v2388 = vld [vmem:[%s1883 + $0x28] sm:$0xf]
        %v2389 = vld [vmem:[%s1883 + $0x2c] sm:$0x1]
        %v2390 = vld [vmem:[%s1883 + $0x30] sm:$0xf]
        %v2391 = vld [vmem:[%s1883 + $0x34] sm:$0x1]
        %v2392 = vld [vmem:[%s1883 + $0x38] sm:$0xf]
        %v2393 = vld [vmem:[%s1883 + $0x3c] sm:$0x1]
        %v2395 = vshrl.u32 %v2378, 16
        %v2397 = vrot.slane %v2395, 4
        %v2398 = vshll.u32 %v2378, 16
        %v2400 = vrot.slane %v2398, 5
        %v2401 = vor.u32 %v2397, %v2400
        %v2402 = vrot.slane %v2401, 4
        %v2404 = vshll.u32 %v2379, 16
        %v2406 = vrot.slane %v2404, 5
        %v2407 = vsel %vm405, %v2402, %v2406
        %v2409 = vshrl.u32 %v2380, 16
        %v2411 = vrot.slane %v2409, 4
        %v2412 = vshll.u32 %v2380, 16
        %v2414 = vrot.slane %v2412, 5
        %v2415 = vor.u32 %v2411, %v2414
        %v2416 = vrot.slane %v2415, 4
        %v2418 = vshll.u32 %v2381, 16
        %v2420 = vrot.slane %v2418, 5
        %v2421 = vsel %vm405, %v2416, %v2420
        %v2423 = vshrl.u32 %v2382, 16
        %v2425 = vrot.slane %v2423, 4
        %v2426 = vshll.u32 %v2382, 16
        %v2428 = vrot.slane %v2426, 5
        %v2429 = vor.u32 %v2425, %v2428
        %v2430 = vrot.slane %v2429, 4
        %v2432 = vshll.u32 %v2383, 16
        %v2434 = vrot.slane %v2432, 5
        %v2435 = vsel %vm405, %v2430, %v2434
        %v2437 = vshrl.u32 %v2384, 16
        %v2439 = vrot.slane %v2437, 4
        %v2440 = vshll.u32 %v2384, 16
        %v2442 = vrot.slane %v2440, 5
        %v2443 = vor.u32 %v2439, %v2442
        %v2444 = vrot.slane %v2443, 4
        %v2446 = vshll.u32 %v2385, 16
        %v2448 = vrot.slane %v2446, 5
        %v2449 = vsel %vm405, %v2444, %v2448
        %v2451 = vshrl.u32 %v2386, 16
        %v2453 = vrot.slane %v2451, 4
        %v2454 = vshll.u32 %v2386, 16
        %v2456 = vrot.slane %v2454, 5
        %v2457 = vor.u32 %v2453, %v2456
        %v2458 = vrot.slane %v2457, 4
        %v2460 = vshll.u32 %v2387, 16
        %v2462 = vrot.slane %v2460, 5
        %v2463 = vsel %vm405, %v2458, %v2462
        %v2465 = vshrl.u32 %v2388, 16
        %v2467 = vrot.slane %v2465, 4
        %v2468 = vshll.u32 %v2388, 16
        %v2470 = vrot.slane %v2468, 5
        %v2471 = vor.u32 %v2467, %v2470
        %v2472 = vrot.slane %v2471, 4
        %v2474 = vshll.u32 %v2389, 16
        %v2476 = vrot.slane %v2474, 5
        %v2477 = vsel %vm405, %v2472, %v2476
        %v2479 = vshrl.u32 %v2390, 16
        %v2481 = vrot.slane %v2479, 4
        %v2482 = vshll.u32 %v2390, 16
        %v2484 = vrot.slane %v2482, 5
        %v2485 = vor.u32 %v2481, %v2484
        %v2486 = vrot.slane %v2485, 4
        %v2488 = vshll.u32 %v2391, 16
        %v2490 = vrot.slane %v2488, 5
        %v2491 = vsel %vm405, %v2486, %v2490
        %v2493 = vshrl.u32 %v2392, 16
        %v2495 = vrot.slane %v2493, 4
        %v2496 = vshll.u32 %v2392, 16
        %v2498 = vrot.slane %v2496, 5
        %v2499 = vor.u32 %v2495, %v2498
        %v2500 = vrot.slane %v2499, 4
        %v2502 = vshll.u32 %v2393, 16
        %v2504 = vrot.slane %v2502, 5
        %v2505 = vsel %vm405, %v2500, %v2504
        %v2506 = vunpack.c.l.b16 %v2251
        %v2507 = vunpack.c.l.b16 %v2269
        %v2508 = vunpack.c.l.b16 %v2287
        %v2509 = vunpack.c.l.b16 %v2305
        %v2510 = vunpack.c.l.b16 %v2323
        %v2511 = vunpack.c.l.b16 %v2341
        %v2512 = vunpack.c.l.b16 %v2359
        %v2513 = vunpack.c.l.b16 %v2377
        %v2514 = vpack.c.b16 %v2507, %v2506
        %v2515 = vpack.c.b16 %v2509, %v2508
        %v2516 = vpack.c.b16 %v2511, %v2510
        %v2517 = vpack.c.b16 %v2513, %v2512
        %v2522 = vunpack.c.l.b16 %v2407
        %v2523 = vunpack.c.l.b16 %v2421
        %v2524 = vunpack.c.l.b16 %v2435
        %v2525 = vunpack.c.l.b16 %v2449
        %v2526 = vunpack.c.l.b16 %v2463
        %v2527 = vunpack.c.l.b16 %v2477
        %v2528 = vunpack.c.l.b16 %v2491
        %v2529 = vunpack.c.l.b16 %v2505
        %v2530 = vpack.c.b16 %v2523, %v2522
        %v2531 = vpack.c.b16 %v2525, %v2524
        %v2532 = vpack.c.b16 %v2527, %v2526
        %v2533 = vpack.c.b16 %v2529, %v2528
        %v2538 = vld [vmem:[#allocation3 + $0x80] sm:$0xf]
        %v2539 = vld [vmem:[#allocation3 + $0x84] sm:$0xf]
        %v2540 = vld [vmem:[#allocation3 + $0x88] sm:$0xf]
        %v2541 = vld [vmem:[#allocation3 + $0x8c] sm:$0xf]
        %v2542 = vld [vmem:[#allocation3 + $0x90] sm:$0xf]
        %v2543 = vld [vmem:[#allocation3 + $0x94] sm:$0xf]
        %v2544 = vld [vmem:[#allocation3 + $0x98] sm:$0xf]
        %v2545 = vld [vmem:[#allocation3 + $0x9c] sm:$0xf]
        %v2546 = vld [vmem:[#allocation3 + $0xa0] sm:$0xf]
        %v2547 = vld [vmem:[#allocation3 + $0xa4] sm:$0xf]
        %v2548 = vld [vmem:[#allocation3 + $0xa8] sm:$0xf]
        %v2549 = vld [vmem:[#allocation3 + $0xac] sm:$0xf]
        %v2550 = vld [vmem:[#allocation3 + $0xb0] sm:$0xf]
        %v2551 = vld [vmem:[#allocation3 + $0xb4] sm:$0xf]
        %v2552 = vld [vmem:[#allocation3 + $0xb8] sm:$0xf]
        %v2553 = vld [vmem:[#allocation3 + $0xbc] sm:$0xf]
        %v2554 = vld [vmem:[#allocation3 + $0xc0] sm:$0xf]
        %v2555 = vld [vmem:[#allocation3 + $0xc4] sm:$0xf]
        %v2556 = vld [vmem:[#allocation3 + $0xc8] sm:$0xf]
        %v2557 = vld [vmem:[#allocation3 + $0xcc] sm:$0xf]
        %v2558 = vld [vmem:[#allocation3 + $0xd0] sm:$0xf]
        %v2559 = vld [vmem:[#allocation3 + $0xd4] sm:$0xf]
        %v2560 = vld [vmem:[#allocation3 + $0xd8] sm:$0xf]
        %v2561 = vld [vmem:[#allocation3 + $0xdc] sm:$0xf]
        %v2562 = vld [vmem:[#allocation3 + $0xe0] sm:$0xf]
        %v2563 = vld [vmem:[#allocation3 + $0xe4] sm:$0xf]
        %v2564 = vld [vmem:[#allocation3 + $0xe8] sm:$0xf]
        %v2565 = vld [vmem:[#allocation3 + $0xec] sm:$0xf]
        %v2566 = vld [vmem:[#allocation3 + $0xf0] sm:$0xf]
        %v2567 = vld [vmem:[#allocation3 + $0xf4] sm:$0xf]
        %v2568 = vld [vmem:[#allocation3 + $0xf8] sm:$0xf]
        %v2569 = vld [vmem:[#allocation3 + $0xfc] sm:$0xf]
        %v2602 = vunpack.c.l.b16 %v2538
        %v2603 = vunpack.c.l.b16 %v2539
        %v2604 = vunpack.c.l.b16 %v2540
        %v2605 = vunpack.c.l.b16 %v2541
        %v2606 = vunpack.c.l.b16 %v2542
        %v2607 = vunpack.c.l.b16 %v2543
        %v2608 = vunpack.c.l.b16 %v2544
        %v2609 = vunpack.c.l.b16 %v2545
        %v2610 = vunpack.c.l.b16 %v2546
        %v2611 = vunpack.c.l.b16 %v2547
        %v2612 = vunpack.c.l.b16 %v2548
        %v2613 = vunpack.c.l.b16 %v2549
        %v2614 = vunpack.c.l.b16 %v2550
        %v2615 = vunpack.c.l.b16 %v2551
        %v2616 = vunpack.c.l.b16 %v2552
        %v2617 = vunpack.c.l.b16 %v2553
        %v2618 = vunpack.c.l.b16 %v2554
        %v2619 = vunpack.c.l.b16 %v2555
        %v2620 = vunpack.c.l.b16 %v2556
        %v2621 = vunpack.c.l.b16 %v2557
        %v2622 = vunpack.c.l.b16 %v2558
        %v2623 = vunpack.c.l.b16 %v2559
        %v2624 = vunpack.c.l.b16 %v2560
        %v2625 = vunpack.c.l.b16 %v2561
        %v2626 = vunpack.c.l.b16 %v2562
        %v2627 = vunpack.c.l.b16 %v2563
        %v2628 = vunpack.c.l.b16 %v2564
        %v2629 = vunpack.c.l.b16 %v2565
        %v2630 = vunpack.c.l.b16 %v2566
        %v2631 = vunpack.c.l.b16 %v2567
        %v2632 = vunpack.c.l.b16 %v2568
        %v2633 = vunpack.c.l.b16 %v2569
        %v2634 = vpack.c.b16 %v2603, %v2602
        %v2635 = vpack.c.b16 %v2605, %v2604
        %v2636 = vpack.c.b16 %v2607, %v2606
        %v2637 = vpack.c.b16 %v2609, %v2608
        %v2638 = vpack.c.b16 %v2611, %v2610
        %v2639 = vpack.c.b16 %v2613, %v2612
        %v2640 = vpack.c.b16 %v2615, %v2614
        %v2641 = vpack.c.b16 %v2617, %v2616
        %v2642 = vpack.c.b16 %v2619, %v2618
        %v2643 = vpack.c.b16 %v2621, %v2620
        %v2644 = vpack.c.b16 %v2623, %v2622
        %v2645 = vpack.c.b16 %v2625, %v2624
        %v2646 = vpack.c.b16 %v2627, %v2626
        %v2647 = vpack.c.b16 %v2629, %v2628
        %v2648 = vpack.c.b16 %v2631, %v2630
        %v2649 = vpack.c.b16 %v2633, %v2632
        %2666 = vmatprep.subr.bf16.mxu0 0
        %2667 = vmatpush1.bf16.msra.mxu0 %v2641
        %2668 = vmatprep.subr.bf16.mxu0 0
        %2669 = vmatpush1.bf16.msra.mxu0 %v2640
        %2670 = vmatprep.subr.bf16.mxu0 0
        %2671 = vmatpush1.bf16.msra.mxu0 %v2639
        %2672 = vmatprep.subr.bf16.mxu0 0
        %2673 = vmatpush1.bf16.msra.mxu0 %v2638
        %2674 = vmatprep.subr.bf16.mxu0 0
        %2675 = vmatpush1.bf16.msra.mxu0 %v2637
        %2676 = vmatprep.subr.bf16.mxu0 0
        %2677 = vmatpush1.bf16.msra.mxu0 %v2636
        %2678 = vmatprep.subr.bf16.mxu0 0
        %2679 = vmatpush1.bf16.msra.mxu0 %v2635
        %2680 = vmatprep.subr.bf16.mxu0 0
        %2681 = vmatpush1.bf16.msra.mxu0 %v2634
        %2682 = vmatprep.subr.bf16.mxu0 0
        %2683 = vmatpush2.bf16.msra.mxu0 %v2649
        %2684 = vmatprep.subr.bf16.mxu0 0
        %2685 = vmatpush2.bf16.msra.mxu0 %v2648
        %2686 = vmatprep.subr.bf16.mxu0 0
        %2687 = vmatpush2.bf16.msra.mxu0 %v2647
        %2688 = vmatprep.subr.bf16.mxu0 0
        %2689 = vmatpush2.bf16.msra.mxu0 %v2646
        %2690 = vmatprep.subr.bf16.mxu0 0
        %2691 = vmatpush2.bf16.msra.mxu0 %v2645
        %2692 = vmatprep.subr.bf16.mxu0 0
        %2693 = vmatpush2.bf16.msra.mxu0 %v2644
        %2694 = vmatprep.subr.bf16.mxu0 0
        %2695 = vmatpush2.bf16.msra.mxu0 %v2643
        %2696 = vmatprep.subr.bf16.mxu0 0
        %2697 = vmatpush2.bf16.msra.mxu0 %v2642
        %2698 = vmatprep.mubr.bf16.mxu0 %v2530
        %2699 = vmatmul.mubr.bf16.gmra.mxu0 %v2514
        %v2700 = vpop.f32.mrf.mxu0
        %v2701 = vadd.f32 0.0, %v2700
        %v2702 = vpop.f32.mrf.mxu0
        %v2703 = vpop.f32.mrf.mxu0
        %v2704 = vadd.f32 0.0, %v2703
        %v2705 = vpop.f32.mrf.mxu0
        %2706 = vmatprep.mubr.bf16.mxu0 %v2531
        %2707 = vmatmul.mubr.bf16.gmra.mxu0 %v2515
        %v2708 = vpop.f32.mrf.mxu0
        %v2709 = vadd.f32 0.0, %v2708
        %v2710 = vpop.f32.mrf.mxu0
        %v2711 = vpop.f32.mrf.mxu0
        %v2712 = vadd.f32 0.0, %v2711
        %v2713 = vpop.f32.mrf.mxu0
        %2714 = vmatprep.mubr.bf16.mxu0 %v2532
        %2715 = vmatmul.mubr.bf16.gmra.mxu0 %v2516
        %v2716 = vpop.f32.mrf.mxu0
        %v2717 = vadd.f32 0.0, %v2716
        %v2718 = vpop.f32.mrf.mxu0
        %v2719 = vpop.f32.mrf.mxu0
        %v2720 = vadd.f32 0.0, %v2719
        %v2721 = vpop.f32.mrf.mxu0
        %2722 = vmatprep.mubr.bf16.mxu0 %v2533
        %2723 = vmatmul.mubr.bf16.gmra.mxu0 %v2517
        %v2724 = vpop.f32.mrf.mxu0
        %v2725 = vadd.f32 0.0, %v2724
        %v2726 = vpop.f32.mrf.mxu0
        %v2727 = vpop.f32.mrf.mxu0
        %v2728 = vadd.f32 0.0, %v2727
        %v2729 = vpop.f32.mrf.mxu0
        %2730 = vdwg.mxu0
        %v2763 = vunpack.c.l.b16 %v2191
        %v2764 = vunpack.c.l.b16 %v2192
        %v2765 = vunpack.c.l.b16 %v2193
        %v2766 = vunpack.c.l.b16 %v2194
        %v2767 = vunpack.c.l.b16 %v2195
        %v2768 = vunpack.c.l.b16 %v2196
        %v2769 = vunpack.c.l.b16 %v2197
        %v2770 = vunpack.c.l.b16 %v2198
        %v2771 = vunpack.c.l.b16 %v2199
        %v2772 = vunpack.c.l.b16 %v2200
        %v2773 = vunpack.c.l.b16 %v2201
        %v2774 = vunpack.c.l.b16 %v2202
        %v2775 = vunpack.c.l.b16 %v2203
        %v2776 = vunpack.c.l.b16 %v2204
        %v2777 = vunpack.c.l.b16 %v2205
        %v2778 = vunpack.c.l.b16 %v2206
        %v2779 = vunpack.c.l.b16 %v2207
        %v2780 = vunpack.c.l.b16 %v2208
        %v2781 = vunpack.c.l.b16 %v2209
        %v2782 = vunpack.c.l.b16 %v2210
        %v2783 = vunpack.c.l.b16 %v2211
        %v2784 = vunpack.c.l.b16 %v2212
        %v2785 = vunpack.c.l.b16 %v2213
        %v2786 = vunpack.c.l.b16 %v2214
        %v2787 = vunpack.c.l.b16 %v2215
        %v2788 = vunpack.c.l.b16 %v2216
        %v2789 = vunpack.c.l.b16 %v2217
        %v2790 = vunpack.c.l.b16 %v2218
        %v2791 = vunpack.c.l.b16 %v2219
        %v2792 = vunpack.c.l.b16 %v2220
        %v2793 = vunpack.c.l.b16 %v2221
        %v2794 = vunpack.c.l.b16 %v2222
        %v2795 = vpack.c.b16 %v2764, %v2763
        %v2796 = vpack.c.b16 %v2766, %v2765
        %v2797 = vpack.c.b16 %v2768, %v2767
        %v2798 = vpack.c.b16 %v2770, %v2769
        %v2799 = vpack.c.b16 %v2772, %v2771
        %v2800 = vpack.c.b16 %v2774, %v2773
        %v2801 = vpack.c.b16 %v2776, %v2775
        %v2802 = vpack.c.b16 %v2778, %v2777
        %v2803 = vpack.c.b16 %v2780, %v2779
        %v2804 = vpack.c.b16 %v2782, %v2781
        %v2805 = vpack.c.b16 %v2784, %v2783
        %v2806 = vpack.c.b16 %v2786, %v2785
        %v2807 = vpack.c.b16 %v2788, %v2787
        %v2808 = vpack.c.b16 %v2790, %v2789
        %v2809 = vpack.c.b16 %v2792, %v2791
        %v2810 = vpack.c.b16 %v2794, %v2793
        %2827 = vmatprep.subr.bf16.mxu0 0
        %2828 = vmatpush1.bf16.msra.mxu0 %v2802
        %2829 = vmatprep.subr.bf16.mxu0 0
        %2830 = vmatpush1.bf16.msra.mxu0 %v2801
        %2831 = vmatprep.subr.bf16.mxu0 0
        %2832 = vmatpush1.bf16.msra.mxu0 %v2800
        %2833 = vmatprep.subr.bf16.mxu0 0
        %2834 = vmatpush1.bf16.msra.mxu0 %v2799
        %2835 = vmatprep.subr.bf16.mxu0 0
        %2836 = vmatpush1.bf16.msra.mxu0 %v2798
        %2837 = vmatprep.subr.bf16.mxu0 0
        %2838 = vmatpush1.bf16.msra.mxu0 %v2797
        %2839 = vmatprep.subr.bf16.mxu0 0
        %2840 = vmatpush1.bf16.msra.mxu0 %v2796
        %2841 = vmatprep.subr.bf16.mxu0 0
        %2842 = vmatpush1.bf16.msra.mxu0 %v2795
        %2843 = vmatprep.subr.bf16.mxu0 0
        %2844 = vmatpush2.bf16.msra.mxu0 %v2810
        %2845 = vmatprep.subr.bf16.mxu0 0
        %2846 = vmatpush2.bf16.msra.mxu0 %v2809
        %2847 = vmatprep.subr.bf16.mxu0 0
        %2848 = vmatpush2.bf16.msra.mxu0 %v2808
        %2849 = vmatprep.subr.bf16.mxu0 0
        %2850 = vmatpush2.bf16.msra.mxu0 %v2807
        %2851 = vmatprep.subr.bf16.mxu0 0
        %2852 = vmatpush2.bf16.msra.mxu0 %v2806
        %2853 = vmatprep.subr.bf16.mxu0 0
        %2854 = vmatpush2.bf16.msra.mxu0 %v2805
        %2855 = vmatprep.subr.bf16.mxu0 0
        %2856 = vmatpush2.bf16.msra.mxu0 %v2804
        %2857 = vmatprep.subr.bf16.mxu0 0
        %2858 = vmatpush2.bf16.msra.mxu0 %v2803
        %2859 = vmatprep.mubr.bf16.mxu0 %v2183
        %2860 = vmatmul.mubr.bf16.gmra.mxu0 %v2167
        %v2861 = vpop.f32.mrf.mxu0
        %v2862 = vadd.f32 %v2701, %v2861
        %v2863 = vpop.f32.mrf.mxu0
        %v2864 = vpop.f32.mrf.mxu0
        %v2865 = vadd.f32 %v2704, %v2864
        %v2866 = vpop.f32.mrf.mxu0
        %2867 = vmatprep.mubr.bf16.mxu0 %v2184
        %2868 = vmatmul.mubr.bf16.gmra.mxu0 %v2168
        %v2869 = vpop.f32.mrf.mxu0
        %v2870 = vadd.f32 %v2709, %v2869
        %v2871 = vpop.f32.mrf.mxu0
        %v2872 = vpop.f32.mrf.mxu0
        %v2873 = vadd.f32 %v2712, %v2872
        %v2874 = vpop.f32.mrf.mxu0
        %2875 = vmatprep.mubr.bf16.mxu0 %v2185
        %2876 = vmatmul.mubr.bf16.gmra.mxu0 %v2169
        %v2877 = vpop.f32.mrf.mxu0
        %v2878 = vadd.f32 %v2717, %v2877
        %v2879 = vpop.f32.mrf.mxu0
        %v2880 = vpop.f32.mrf.mxu0
        %v2881 = vadd.f32 %v2720, %v2880
        %v2882 = vpop.f32.mrf.mxu0
        %2883 = vmatprep.mubr.bf16.mxu0 %v2186
        %2884 = vmatmul.mubr.bf16.gmra.mxu0 %v2170
        %v2885 = vpop.f32.mrf.mxu0
        %v2886 = vadd.f32 %v2725, %v2885
        %v2887 = vpop.f32.mrf.mxu0
        %v2888 = vpop.f32.mrf.mxu0
        %v2889 = vadd.f32 %v2728, %v2888
        %v2890 = vpop.f32.mrf.mxu0
        %2891 = vdwg.mxu0
        %v2892 = vld [vmem:[%s1883] sm:$0xe]
        %v2893 = vld [vmem:[%s1883 + $0x8] sm:$0xe]
        %v2894 = vld [vmem:[%s1883 + $0x10] sm:$0xe]
        %v2895 = vld [vmem:[%s1883 + $0x18] sm:$0xe]
        %v2896 = vld [vmem:[%s1883 + $0x20] sm:$0xe]
        %v2897 = vld [vmem:[%s1883 + $0x28] sm:$0xe]
        %v2898 = vld [vmem:[%s1883 + $0x30] sm:$0xe]
        %v2899 = vld [vmem:[%s1883 + $0x38] sm:$0xe]
        %v2916 = vrot.slane %v2892, 5
        %v2917 = vrot.slane %v2916, 4
        %v2918 = vrot.slane %v2379, 5
        %v2919 = vsel %vm2126, %v2917, %v2918
        %v2920 = vrot.slane %v2893, 5
        %v2921 = vrot.slane %v2920, 4
        %v2922 = vrot.slane %v2381, 5
        %v2923 = vsel %vm2126, %v2921, %v2922
        %v2924 = vrot.slane %v2894, 5
        %v2925 = vrot.slane %v2924, 4
        %v2926 = vrot.slane %v2383, 5
        %v2927 = vsel %vm2126, %v2925, %v2926
        %v2928 = vrot.slane %v2895, 5
        %v2929 = vrot.slane %v2928, 4
        %v2930 = vrot.slane %v2385, 5
        %v2931 = vsel %vm2126, %v2929, %v2930
        %v2932 = vrot.slane %v2896, 5
        %v2933 = vrot.slane %v2932, 4
        %v2934 = vrot.slane %v2387, 5
        %v2935 = vsel %vm2126, %v2933, %v2934
        %v2936 = vrot.slane %v2897, 5
        %v2937 = vrot.slane %v2936, 4
        %v2938 = vrot.slane %v2389, 5
        %v2939 = vsel %vm2126, %v2937, %v2938
        %v2940 = vrot.slane %v2898, 5
        %v2941 = vrot.slane %v2940, 4
        %v2942 = vrot.slane %v2391, 5
        %v2943 = vsel %vm2126, %v2941, %v2942
        %v2944 = vrot.slane %v2899, 5
        %v2945 = vrot.slane %v2944, 4
        %v2946 = vrot.slane %v2393, 5
        %v2947 = vsel %vm2126, %v2945, %v2946
        %v2948 = vld [vmem:[%s1883 + $0x4] sm:$0x3]
        %v2949 = vld [vmem:[%s1883 + $0xc] sm:$0x3]
        %v2950 = vld [vmem:[%s1883 + $0x14] sm:$0x3]
        %v2951 = vld [vmem:[%s1883 + $0x1c] sm:$0x3]
        %v2952 = vld [vmem:[%s1883 + $0x24] sm:$0x3]
        %v2953 = vld [vmem:[%s1883 + $0x2c] sm:$0x3]
        %v2954 = vld [vmem:[%s1883 + $0x34] sm:$0x3]
        %v2955 = vld [vmem:[%s1883 + $0x3c] sm:$0x3]
        %v2957 = vshrl.u32 %v2892, 16
        %v2959 = vrot.slane %v2957, 5
        %v2960 = vshll.u32 %v2892, 16
        %v2962 = vrot.slane %v2960, 6
        %v2963 = vor.u32 %v2959, %v2962
        %v2964 = vrot.slane %v2963, 4
        %v2966 = vshrl.u32 %v2948, 16
        %v2968 = vrot.slane %v2966, 5
        %v2969 = vshll.u32 %v2948, 16
        %v2971 = vrot.slane %v2969, 6
        %v2972 = vor.u32 %v2968, %v2971
        %v2973 = vsel %vm2233, %v2964, %v2972
        %v2975 = vshrl.u32 %v2893, 16
        %v2977 = vrot.slane %v2975, 5
        %v2978 = vshll.u32 %v2893, 16
        %v2980 = vrot.slane %v2978, 6
        %v2981 = vor.u32 %v2977, %v2980
        %v2982 = vrot.slane %v2981, 4
        %v2984 = vshrl.u32 %v2949, 16
        %v2986 = vrot.slane %v2984, 5
        %v2987 = vshll.u32 %v2949, 16
        %v2989 = vrot.slane %v2987, 6
        %v2990 = vor.u32 %v2986, %v2989
        %v2991 = vsel %vm2233, %v2982, %v2990
        %v2993 = vshrl.u32 %v2894, 16
        %v2995 = vrot.slane %v2993, 5
        %v2996 = vshll.u32 %v2894, 16
        %v2998 = vrot.slane %v2996, 6
        %v2999 = vor.u32 %v2995, %v2998
        %v3000 = vrot.slane %v2999, 4
        %v3002 = vshrl.u32 %v2950, 16
        %v3004 = vrot.slane %v3002, 5
        %v3005 = vshll.u32 %v2950, 16
        %v3007 = vrot.slane %v3005, 6
        %v3008 = vor.u32 %v3004, %v3007
        %v3009 = vsel %vm2233, %v3000, %v3008
        %v3011 = vshrl.u32 %v2895, 16
        %v3013 = vrot.slane %v3011, 5
        %v3014 = vshll.u32 %v2895, 16
        %v3016 = vrot.slane %v3014, 6
        %v3017 = vor.u32 %v3013, %v3016
        %v3018 = vrot.slane %v3017, 4
        %v3020 = vshrl.u32 %v2951, 16
        %v3022 = vrot.slane %v3020, 5
        %v3023 = vshll.u32 %v2951, 16
        %v3025 = vrot.slane %v3023, 6
        %v3026 = vor.u32 %v3022, %v3025
        %v3027 = vsel %vm2233, %v3018, %v3026
        %v3029 = vshrl.u32 %v2896, 16
        %v3031 = vrot.slane %v3029, 5
        %v3032 = vshll.u32 %v2896, 16
        %v3034 = vrot.slane %v3032, 6
        %v3035 = vor.u32 %v3031, %v3034
        %v3036 = vrot.slane %v3035, 4
        %v3038 = vshrl.u32 %v2952, 16
        %v3040 = vrot.slane %v3038, 5
        %v3041 = vshll.u32 %v2952, 16
        %v3043 = vrot.slane %v3041, 6
        %v3044 = vor.u32 %v3040, %v3043
        %v3045 = vsel %vm2233, %v3036, %v3044
        %v3047 = vshrl.u32 %v2897, 16
        %v3049 = vrot.slane %v3047, 5
        %v3050 = vshll.u32 %v2897, 16
        %v3052 = vrot.slane %v3050, 6
        %v3053 = vor.u32 %v3049, %v3052
        %v3054 = vrot.slane %v3053, 4
        %v3056 = vshrl.u32 %v2953, 16
        %v3058 = vrot.slane %v3056, 5
        %v3059 = vshll.u32 %v2953, 16
        %v3061 = vrot.slane %v3059, 6
        %v3062 = vor.u32 %v3058, %v3061
        %v3063 = vsel %vm2233, %v3054, %v3062
        %v3065 = vshrl.u32 %v2898, 16
        %v3067 = vrot.slane %v3065, 5
        %v3068 = vshll.u32 %v2898, 16
        %v3070 = vrot.slane %v3068, 6
        %v3071 = vor.u32 %v3067, %v3070
        %v3072 = vrot.slane %v3071, 4
        %v3074 = vshrl.u32 %v2954, 16
        %v3076 = vrot.slane %v3074, 5
        %v3077 = vshll.u32 %v2954, 16
        %v3079 = vrot.slane %v3077, 6
        %v3080 = vor.u32 %v3076, %v3079
        %v3081 = vsel %vm2233, %v3072, %v3080
        %v3083 = vshrl.u32 %v2899, 16
        %v3085 = vrot.slane %v3083, 5
        %v3086 = vshll.u32 %v2899, 16
        %v3088 = vrot.slane %v3086, 6
        %v3089 = vor.u32 %v3085, %v3088
        %v3090 = vrot.slane %v3089, 4
        %v3092 = vshrl.u32 %v2955, 16
        %v3094 = vrot.slane %v3092, 5
        %v3095 = vshll.u32 %v2955, 16
        %v3097 = vrot.slane %v3095, 6
        %v3098 = vor.u32 %v3094, %v3097
        %v3099 = vsel %vm2233, %v3090, %v3098
        %v3100 = vunpack.c.l.b16 %v2919
        %v3101 = vunpack.c.l.b16 %v2923
        %v3102 = vunpack.c.l.b16 %v2927
        %v3103 = vunpack.c.l.b16 %v2931
        %v3104 = vunpack.c.l.b16 %v2935
        %v3105 = vunpack.c.l.b16 %v2939
        %v3106 = vunpack.c.l.b16 %v2943
        %v3107 = vunpack.c.l.b16 %v2947
        %v3108 = vpack.c.b16 %v3101, %v3100
        %v3109 = vpack.c.b16 %v3103, %v3102
        %v3110 = vpack.c.b16 %v3105, %v3104
        %v3111 = vpack.c.b16 %v3107, %v3106
        %v3116 = vunpack.c.l.b16 %v2973
        %v3117 = vunpack.c.l.b16 %v2991
        %v3118 = vunpack.c.l.b16 %v3009
        %v3119 = vunpack.c.l.b16 %v3027
        %v3120 = vunpack.c.l.b16 %v3045
        %v3121 = vunpack.c.l.b16 %v3063
        %v3122 = vunpack.c.l.b16 %v3081
        %v3123 = vunpack.c.l.b16 %v3099
        %v3124 = vpack.c.b16 %v3117, %v3116
        %v3125 = vpack.c.b16 %v3119, %v3118
        %v3126 = vpack.c.b16 %v3121, %v3120
        %v3127 = vpack.c.b16 %v3123, %v3122
        %v3132 = vld [vmem:[#allocation3 + $0x100] sm:$0xf]
        %v3133 = vld [vmem:[#allocation3 + $0x104] sm:$0xf]
        %v3134 = vld [vmem:[#allocation3 + $0x108] sm:$0xf]
        %v3135 = vld [vmem:[#allocation3 + $0x10c] sm:$0xf]
        %v3136 = vld [vmem:[#allocation3 + $0x110] sm:$0xf]
        %v3137 = vld [vmem:[#allocation3 + $0x114] sm:$0xf]
        %v3138 = vld [vmem:[#allocation3 + $0x118] sm:$0xf]
        %v3139 = vld [vmem:[#allocation3 + $0x11c] sm:$0xf]
        %v3140 = vld [vmem:[#allocation3 + $0x120] sm:$0xf]
        %v3141 = vld [vmem:[#allocation3 + $0x124] sm:$0xf]
        %v3142 = vld [vmem:[#allocation3 + $0x128] sm:$0xf]
        %v3143 = vld [vmem:[#allocation3 + $0x12c] sm:$0xf]
        %v3144 = vld [vmem:[#allocation3 + $0x130] sm:$0xf]
        %v3145 = vld [vmem:[#allocation3 + $0x134] sm:$0xf]
        %v3146 = vld [vmem:[#allocation3 + $0x138] sm:$0xf]
        %v3147 = vld [vmem:[#allocation3 + $0x13c] sm:$0xf]
        %v3148 = vld [vmem:[#allocation3 + $0x140] sm:$0xf]
        %v3149 = vld [vmem:[#allocation3 + $0x144] sm:$0xf]
        %v3150 = vld [vmem:[#allocation3 + $0x148] sm:$0xf]
        %v3151 = vld [vmem:[#allocation3 + $0x14c] sm:$0xf]
        %v3152 = vld [vmem:[#allocation3 + $0x150] sm:$0xf]
        %v3153 = vld [vmem:[#allocation3 + $0x154] sm:$0xf]
        %v3154 = vld [vmem:[#allocation3 + $0x158] sm:$0xf]
        %v3155 = vld [vmem:[#allocation3 + $0x15c] sm:$0xf]
        %v3156 = vld [vmem:[#allocation3 + $0x160] sm:$0xf]
        %v3157 = vld [vmem:[#allocation3 + $0x164] sm:$0xf]
        %v3158 = vld [vmem:[#allocation3 + $0x168] sm:$0xf]
        %v3159 = vld [vmem:[#allocation3 + $0x16c] sm:$0xf]
        %v3160 = vld [vmem:[#allocation3 + $0x170] sm:$0xf]
        %v3161 = vld [vmem:[#allocation3 + $0x174] sm:$0xf]
        %v3162 = vld [vmem:[#allocation3 + $0x178] sm:$0xf]
        %v3163 = vld [vmem:[#allocation3 + $0x17c] sm:$0xf]
        %v3196 = vunpack.c.l.b16 %v3132
        %v3197 = vunpack.c.l.b16 %v3133
        %v3198 = vunpack.c.l.b16 %v3134
        %v3199 = vunpack.c.l.b16 %v3135
        %v3200 = vunpack.c.l.b16 %v3136
        %v3201 = vunpack.c.l.b16 %v3137
        %v3202 = vunpack.c.l.b16 %v3138
        %v3203 = vunpack.c.l.b16 %v3139
        %v3204 = vunpack.c.l.b16 %v3140
        %v3205 = vunpack.c.l.b16 %v3141
        %v3206 = vunpack.c.l.b16 %v3142
        %v3207 = vunpack.c.l.b16 %v3143
        %v3208 = vunpack.c.l.b16 %v3144
        %v3209 = vunpack.c.l.b16 %v3145
        %v3210 = vunpack.c.l.b16 %v3146
        %v3211 = vunpack.c.l.b16 %v3147
        %v3212 = vunpack.c.l.b16 %v3148
        %v3213 = vunpack.c.l.b16 %v3149
        %v3214 = vunpack.c.l.b16 %v3150
        %v3215 = vunpack.c.l.b16 %v3151
        %v3216 = vunpack.c.l.b16 %v3152
        %v3217 = vunpack.c.l.b16 %v3153
        %v3218 = vunpack.c.l.b16 %v3154
        %v3219 = vunpack.c.l.b16 %v3155
        %v3220 = vunpack.c.l.b16 %v3156
        %v3221 = vunpack.c.l.b16 %v3157
        %v3222 = vunpack.c.l.b16 %v3158
        %v3223 = vunpack.c.l.b16 %v3159
        %v3224 = vunpack.c.l.b16 %v3160
        %v3225 = vunpack.c.l.b16 %v3161
        %v3226 = vunpack.c.l.b16 %v3162
        %v3227 = vunpack.c.l.b16 %v3163
        %v3228 = vpack.c.b16 %v3197, %v3196
        %v3229 = vpack.c.b16 %v3199, %v3198
        %v3230 = vpack.c.b16 %v3201, %v3200
        %v3231 = vpack.c.b16 %v3203, %v3202
        %v3232 = vpack.c.b16 %v3205, %v3204
        %v3233 = vpack.c.b16 %v3207, %v3206
        %v3234 = vpack.c.b16 %v3209, %v3208
        %v3235 = vpack.c.b16 %v3211, %v3210
        %v3236 = vpack.c.b16 %v3213, %v3212
        %v3237 = vpack.c.b16 %v3215, %v3214
        %v3238 = vpack.c.b16 %v3217, %v3216
        %v3239 = vpack.c.b16 %v3219, %v3218
        %v3240 = vpack.c.b16 %v3221, %v3220
        %v3241 = vpack.c.b16 %v3223, %v3222
        %v3242 = vpack.c.b16 %v3225, %v3224
        %v3243 = vpack.c.b16 %v3227, %v3226
        %3260 = vmatprep.subr.bf16.mxu0 0
        %3261 = vmatpush1.bf16.msra.mxu0 %v3235
        %3262 = vmatprep.subr.bf16.mxu0 0
        %3263 = vmatpush1.bf16.msra.mxu0 %v3234
        %3264 = vmatprep.subr.bf16.mxu0 0
        %3265 = vmatpush1.bf16.msra.mxu0 %v3233
        %3266 = vmatprep.subr.bf16.mxu0 0
        %3267 = vmatpush1.bf16.msra.mxu0 %v3232
        %3268 = vmatprep.subr.bf16.mxu0 0
        %3269 = vmatpush1.bf16.msra.mxu0 %v3231
        %3270 = vmatprep.subr.bf16.mxu0 0
        %3271 = vmatpush1.bf16.msra.mxu0 %v3230
        %3272 = vmatprep.subr.bf16.mxu0 0
        %3273 = vmatpush1.bf16.msra.mxu0 %v3229
        %3274 = vmatprep.subr.bf16.mxu0 0
        %3275 = vmatpush1.bf16.msra.mxu0 %v3228
        %3276 = vmatprep.subr.bf16.mxu0 0
        %3277 = vmatpush2.bf16.msra.mxu0 %v3243
        %3278 = vmatprep.subr.bf16.mxu0 0
        %3279 = vmatpush2.bf16.msra.mxu0 %v3242
        %3280 = vmatprep.subr.bf16.mxu0 0
        %3281 = vmatpush2.bf16.msra.mxu0 %v3241
        %3282 = vmatprep.subr.bf16.mxu0 0
        %3283 = vmatpush2.bf16.msra.mxu0 %v3240
        %3284 = vmatprep.subr.bf16.mxu0 0
        %3285 = vmatpush2.bf16.msra.mxu0 %v3239
        %3286 = vmatprep.subr.bf16.mxu0 0
        %3287 = vmatpush2.bf16.msra.mxu0 %v3238
        %3288 = vmatprep.subr.bf16.mxu0 0
        %3289 = vmatpush2.bf16.msra.mxu0 %v3237
        %3290 = vmatprep.subr.bf16.mxu0 0
        %3291 = vmatpush2.bf16.msra.mxu0 %v3236
        %3292 = vmatprep.mubr.bf16.mxu0 %v3124
        %3293 = vmatmul.mubr.bf16.gmra.mxu0 %v3108
        %v3294 = vpop.f32.mrf.mxu0
        %v3295 = vadd.f32 0.0, %v3294
        %v3296 = vpop.f32.mrf.mxu0
        %v3297 = vpop.f32.mrf.mxu0
        %v3298 = vadd.f32 0.0, %v3297
        %v3299 = vpop.f32.mrf.mxu0
        %3300 = vmatprep.mubr.bf16.mxu0 %v3125
        %3301 = vmatmul.mubr.bf16.gmra.mxu0 %v3109
        %v3302 = vpop.f32.mrf.mxu0
        %v3303 = vadd.f32 0.0, %v3302
        %v3304 = vpop.f32.mrf.mxu0
        %v3305 = vpop.f32.mrf.mxu0
        %v3306 = vadd.f32 0.0, %v3305
        %v3307 = vpop.f32.mrf.mxu0
        %3308 = vmatprep.mubr.bf16.mxu0 %v3126
        %3309 = vmatmul.mubr.bf16.gmra.mxu0 %v3110
        %v3310 = vpop.f32.mrf.mxu0
        %v3311 = vadd.f32 0.0, %v3310
        %v3312 = vpop.f32.mrf.mxu0
        %v3313 = vpop.f32.mrf.mxu0
        %v3314 = vadd.f32 0.0, %v3313
        %v3315 = vpop.f32.mrf.mxu0
        %3316 = vmatprep.mubr.bf16.mxu0 %v3127
        %3317 = vmatmul.mubr.bf16.gmra.mxu0 %v3111
        %v3318 = vpop.f32.mrf.mxu0
        %v3319 = vadd.f32 0.0, %v3318
        %v3320 = vpop.f32.mrf.mxu0
        %v3321 = vpop.f32.mrf.mxu0
        %v3322 = vadd.f32 0.0, %v3321
        %v3323 = vpop.f32.mrf.mxu0
        %3324 = vdwg.mxu0
        %v3325 = vadd.f32 %v2862, %v3295
        %v3326 = vadd.f32 %v2865, %v3298
        %v3327 = vadd.f32 %v2870, %v3303
        %v3328 = vadd.f32 %v2873, %v3306
        %v3329 = vadd.f32 %v2878, %v3311
        %v3330 = vadd.f32 %v2881, %v3314
        %v3331 = vadd.f32 %v2886, %v3319
        %v3332 = vadd.f32 %v2889, %v3322
        %s3333 = scalar_lea.vmem [#allocation2], 16
        %v3334 = vld [vmem:[%s3333] sm:$0xf]
        %v3335 = vld [vmem:[%s3333 + $0x4] sm:$0x1]
        %v3336 = vld [vmem:[%s3333 + $0x8] sm:$0xf]
        %v3337 = vld [vmem:[%s3333 + $0xc] sm:$0x1]
        %v3338 = vld [vmem:[%s3333 + $0x10] sm:$0xf]
        %v3339 = vld [vmem:[%s3333 + $0x14] sm:$0x1]
        %v3340 = vld [vmem:[%s3333 + $0x18] sm:$0xf]
        %v3341 = vld [vmem:[%s3333 + $0x1c] sm:$0x1]
        %v3342 = vld [vmem:[%s3333 + $0x20] sm:$0xf]
        %v3343 = vld [vmem:[%s3333 + $0x24] sm:$0x1]
        %v3344 = vld [vmem:[%s3333 + $0x28] sm:$0xf]
        %v3345 = vld [vmem:[%s3333 + $0x2c] sm:$0x1]
        %v3346 = vld [vmem:[%s3333 + $0x30] sm:$0xf]
        %v3347 = vld [vmem:[%s3333 + $0x34] sm:$0x1]
        %v3348 = vld [vmem:[%s3333 + $0x38] sm:$0xf]
        %v3349 = vld [vmem:[%s3333 + $0x3c] sm:$0x1]
        %v3351 = vshrl.u32 %v3334, 16
        %v3353 = vrot.slane %v3351, 4
        %v3354 = vshll.u32 %v3334, 16
        %v3356 = vrot.slane %v3354, 5
        %v3357 = vor.u32 %v3353, %v3356
        %v3358 = vrot.slane %v3357, 4
        %v3360 = vshll.u32 %v3335, 16
        %v3362 = vrot.slane %v3360, 5
        %v3363 = vsel %vm405, %v3358, %v3362
        %v3365 = vshrl.u32 %v3336, 16
        %v3367 = vrot.slane %v3365, 4
        %v3368 = vshll.u32 %v3336, 16
        %v3370 = vrot.slane %v3368, 5
        %v3371 = vor.u32 %v3367, %v3370
        %v3372 = vrot.slane %v3371, 4
        %v3374 = vshll.u32 %v3337, 16
        %v3376 = vrot.slane %v3374, 5
        %v3377 = vsel %vm405, %v3372, %v3376
        %v3379 = vshrl.u32 %v3338, 16
        %v3381 = vrot.slane %v3379, 4
        %v3382 = vshll.u32 %v3338, 16
        %v3384 = vrot.slane %v3382, 5
        %v3385 = vor.u32 %v3381, %v3384
        %v3386 = vrot.slane %v3385, 4
        %v3388 = vshll.u32 %v3339, 16
        %v3390 = vrot.slane %v3388, 5
        %v3391 = vsel %vm405, %v3386, %v3390
        %v3393 = vshrl.u32 %v3340, 16
        %v3395 = vrot.slane %v3393, 4
        %v3396 = vshll.u32 %v3340, 16
        %v3398 = vrot.slane %v3396, 5
        %v3399 = vor.u32 %v3395, %v3398
        %v3400 = vrot.slane %v3399, 4
        %v3402 = vshll.u32 %v3341, 16
        %v3404 = vrot.slane %v3402, 5
        %v3405 = vsel %vm405, %v3400, %v3404
        %v3407 = vshrl.u32 %v3342, 16
        %v3409 = vrot.slane %v3407, 4
        %v3410 = vshll.u32 %v3342, 16
        %v3412 = vrot.slane %v3410, 5
        %v3413 = vor.u32 %v3409, %v3412
        %v3414 = vrot.slane %v3413, 4
        %v3416 = vshll.u32 %v3343, 16
        %v3418 = vrot.slane %v3416, 5
        %v3419 = vsel %vm405, %v3414, %v3418
        %v3421 = vshrl.u32 %v3344, 16
        %v3423 = vrot.slane %v3421, 4
        %v3424 = vshll.u32 %v3344, 16
        %v3426 = vrot.slane %v3424, 5
        %v3427 = vor.u32 %v3423, %v3426
        %v3428 = vrot.slane %v3427, 4
        %v3430 = vshll.u32 %v3345, 16
        %v3432 = vrot.slane %v3430, 5
        %v3433 = vsel %vm405, %v3428, %v3432
        %v3435 = vshrl.u32 %v3346, 16
        %v3437 = vrot.slane %v3435, 4
        %v3438 = vshll.u32 %v3346, 16
        %v3440 = vrot.slane %v3438, 5
        %v3441 = vor.u32 %v3437, %v3440
        %v3442 = vrot.slane %v3441, 4
        %v3444 = vshll.u32 %v3347, 16
        %v3446 = vrot.slane %v3444, 5
        %v3447 = vsel %vm405, %v3442, %v3446
        %v3449 = vshrl.u32 %v3348, 16
        %v3451 = vrot.slane %v3449, 4
        %v3452 = vshll.u32 %v3348, 16
        %v3454 = vrot.slane %v3452, 5
        %v3455 = vor.u32 %v3451, %v3454
        %v3456 = vrot.slane %v3455, 4
        %v3458 = vshll.u32 %v3349, 16
        %v3460 = vrot.slane %v3458, 5
        %v3461 = vsel %vm405, %v3456, %v3460
        %v3462 = vld [vmem:[%s3333] sm:$0xe]
        %v3463 = vld [vmem:[%s3333 + $0x8] sm:$0xe]
        %v3464 = vld [vmem:[%s3333 + $0x10] sm:$0xe]
        %v3465 = vld [vmem:[%s3333 + $0x18] sm:$0xe]
        %v3466 = vld [vmem:[%s3333 + $0x20] sm:$0xe]
        %v3467 = vld [vmem:[%s3333 + $0x28] sm:$0xe]
        %v3468 = vld [vmem:[%s3333 + $0x30] sm:$0xe]
        %v3469 = vld [vmem:[%s3333 + $0x38] sm:$0xe]
        %v3486 = vrot.slane %v3462, 5
        %v3487 = vrot.slane %v3486, 4
        %v3488 = vrot.slane %v3335, 5
        %v3489 = vsel %vm2126, %v3487, %v3488
        %v3490 = vrot.slane %v3463, 5
        %v3491 = vrot.slane %v3490, 4
        %v3492 = vrot.slane %v3337, 5
        %v3493 = vsel %vm2126, %v3491, %v3492
        %v3494 = vrot.slane %v3464, 5
        %v3495 = vrot.slane %v3494, 4
        %v3496 = vrot.slane %v3339, 5
        %v3497 = vsel %vm2126, %v3495, %v3496
        %v3498 = vrot.slane %v3465, 5
        %v3499 = vrot.slane %v3498, 4
        %v3500 = vrot.slane %v3341, 5
        %v3501 = vsel %vm2126, %v3499, %v3500
        %v3502 = vrot.slane %v3466, 5
        %v3503 = vrot.slane %v3502, 4
        %v3504 = vrot.slane %v3343, 5
        %v3505 = vsel %vm2126, %v3503, %v3504
        %v3506 = vrot.slane %v3467, 5
        %v3507 = vrot.slane %v3506, 4
        %v3508 = vrot.slane %v3345, 5
        %v3509 = vsel %vm2126, %v3507, %v3508
        %v3510 = vrot.slane %v3468, 5
        %v3511 = vrot.slane %v3510, 4
        %v3512 = vrot.slane %v3347, 5
        %v3513 = vsel %vm2126, %v3511, %v3512
        %v3514 = vrot.slane %v3469, 5
        %v3515 = vrot.slane %v3514, 4
        %v3516 = vrot.slane %v3349, 5
        %v3517 = vsel %vm2126, %v3515, %v3516
        %v3518 = vunpack.c.l.b16 %v3363
        %v3519 = vunpack.c.l.b16 %v3377
        %v3520 = vunpack.c.l.b16 %v3391
        %v3521 = vunpack.c.l.b16 %v3405
        %v3522 = vunpack.c.l.b16 %v3419
        %v3523 = vunpack.c.l.b16 %v3433
        %v3524 = vunpack.c.l.b16 %v3447
        %v3525 = vunpack.c.l.b16 %v3461
        %v3526 = vpack.c.b16 %v3519, %v3518
        %v3527 = vpack.c.b16 %v3521, %v3520
        %v3528 = vpack.c.b16 %v3523, %v3522
        %v3529 = vpack.c.b16 %v3525, %v3524
        %v3534 = vunpack.c.l.b16 %v3489
        %v3535 = vunpack.c.l.b16 %v3493
        %v3536 = vunpack.c.l.b16 %v3497
        %v3537 = vunpack.c.l.b16 %v3501
        %v3538 = vunpack.c.l.b16 %v3505
        %v3539 = vunpack.c.l.b16 %v3509
        %v3540 = vunpack.c.l.b16 %v3513
        %v3541 = vunpack.c.l.b16 %v3517
        %v3542 = vpack.c.b16 %v3535, %v3534
        %v3543 = vpack.c.b16 %v3537, %v3536
        %v3544 = vpack.c.b16 %v3539, %v3538
        %v3545 = vpack.c.b16 %v3541, %v3540
        %v3550 = vld [vmem:[#allocation3 + $0x180] sm:$0xf]
        %v3551 = vld [vmem:[#allocation3 + $0x184] sm:$0xf]
        %v3552 = vld [vmem:[#allocation3 + $0x188] sm:$0xf]
        %v3553 = vld [vmem:[#allocation3 + $0x18c] sm:$0xf]
        %v3554 = vld [vmem:[#allocation3 + $0x190] sm:$0xf]
        %v3555 = vld [vmem:[#allocation3 + $0x194] sm:$0xf]
        %v3556 = vld [vmem:[#allocation3 + $0x198] sm:$0xf]
        %v3557 = vld [vmem:[#allocation3 + $0x19c] sm:$0xf]
        %v3558 = vld [vmem:[#allocation3 + $0x1a0] sm:$0xf]
        %v3559 = vld [vmem:[#allocation3 + $0x1a4] sm:$0xf]
        %v3560 = vld [vmem:[#allocation3 + $0x1a8] sm:$0xf]
        %v3561 = vld [vmem:[#allocation3 + $0x1ac] sm:$0xf]
        %v3562 = vld [vmem:[#allocation3 + $0x1b0] sm:$0xf]
        %v3563 = vld [vmem:[#allocation3 + $0x1b4] sm:$0xf]
        %v3564 = vld [vmem:[#allocation3 + $0x1b8] sm:$0xf]
        %v3565 = vld [vmem:[#allocation3 + $0x1bc] sm:$0xf]
        %v3566 = vld [vmem:[#allocation3 + $0x1c0] sm:$0xf]
        %v3567 = vld [vmem:[#allocation3 + $0x1c4] sm:$0xf]
        %v3568 = vld [vmem:[#allocation3 + $0x1c8] sm:$0xf]
        %v3569 = vld [vmem:[#allocation3 + $0x1cc] sm:$0xf]
        %v3570 = vld [vmem:[#allocation3 + $0x1d0] sm:$0xf]
        %v3571 = vld [vmem:[#allocation3 + $0x1d4] sm:$0xf]
        %v3572 = vld [vmem:[#allocation3 + $0x1d8] sm:$0xf]
        %v3573 = vld [vmem:[#allocation3 + $0x1dc] sm:$0xf]
        %v3574 = vld [vmem:[#allocation3 + $0x1e0] sm:$0xf]
        %v3575 = vld [vmem:[#allocation3 + $0x1e4] sm:$0xf]
        %v3576 = vld [vmem:[#allocation3 + $0x1e8] sm:$0xf]
        %v3577 = vld [vmem:[#allocation3 + $0x1ec] sm:$0xf]
        %v3578 = vld [vmem:[#allocation3 + $0x1f0] sm:$0xf]
        %v3579 = vld [vmem:[#allocation3 + $0x1f4] sm:$0xf]
        %v3580 = vld [vmem:[#allocation3 + $0x1f8] sm:$0xf]
        %v3581 = vld [vmem:[#allocation3 + $0x1fc] sm:$0xf]
        %v3614 = vunpack.c.l.b16 %v3550
        %v3615 = vunpack.c.l.b16 %v3551
        %v3616 = vunpack.c.l.b16 %v3552
        %v3617 = vunpack.c.l.b16 %v3553
        %v3618 = vunpack.c.l.b16 %v3554
        %v3619 = vunpack.c.l.b16 %v3555
        %v3620 = vunpack.c.l.b16 %v3556
        %v3621 = vunpack.c.l.b16 %v3557
        %v3622 = vunpack.c.l.b16 %v3558
        %v3623 = vunpack.c.l.b16 %v3559
        %v3624 = vunpack.c.l.b16 %v3560
        %v3625 = vunpack.c.l.b16 %v3561
        %v3626 = vunpack.c.l.b16 %v3562
        %v3627 = vunpack.c.l.b16 %v3563
        %v3628 = vunpack.c.l.b16 %v3564
        %v3629 = vunpack.c.l.b16 %v3565
        %v3630 = vunpack.c.l.b16 %v3566
        %v3631 = vunpack.c.l.b16 %v3567
        %v3632 = vunpack.c.l.b16 %v3568
        %v3633 = vunpack.c.l.b16 %v3569
        %v3634 = vunpack.c.l.b16 %v3570
        %v3635 = vunpack.c.l.b16 %v3571
        %v3636 = vunpack.c.l.b16 %v3572
        %v3637 = vunpack.c.l.b16 %v3573
        %v3638 = vunpack.c.l.b16 %v3574
        %v3639 = vunpack.c.l.b16 %v3575
        %v3640 = vunpack.c.l.b16 %v3576
        %v3641 = vunpack.c.l.b16 %v3577
        %v3642 = vunpack.c.l.b16 %v3578
        %v3643 = vunpack.c.l.b16 %v3579
        %v3644 = vunpack.c.l.b16 %v3580
        %v3645 = vunpack.c.l.b16 %v3581
        %v3646 = vpack.c.b16 %v3615, %v3614
        %v3647 = vpack.c.b16 %v3617, %v3616
        %v3648 = vpack.c.b16 %v3619, %v3618
        %v3649 = vpack.c.b16 %v3621, %v3620
        %v3650 = vpack.c.b16 %v3623, %v3622
        %v3651 = vpack.c.b16 %v3625, %v3624
        %v3652 = vpack.c.b16 %v3627, %v3626
        %v3653 = vpack.c.b16 %v3629, %v3628
        %v3654 = vpack.c.b16 %v3631, %v3630
        %v3655 = vpack.c.b16 %v3633, %v3632
        %v3656 = vpack.c.b16 %v3635, %v3634
        %v3657 = vpack.c.b16 %v3637, %v3636
        %v3658 = vpack.c.b16 %v3639, %v3638
        %v3659 = vpack.c.b16 %v3641, %v3640
        %v3660 = vpack.c.b16 %v3643, %v3642
        %v3661 = vpack.c.b16 %v3645, %v3644
        %3678 = vmatprep.subr.bf16.mxu0 0
        %3679 = vmatpush1.bf16.msra.mxu0 %v3653
        %3680 = vmatprep.subr.bf16.mxu0 0
        %3681 = vmatpush1.bf16.msra.mxu0 %v3652
        %3682 = vmatprep.subr.bf16.mxu0 0
        %3683 = vmatpush1.bf16.msra.mxu0 %v3651
        %3684 = vmatprep.subr.bf16.mxu0 0
        %3685 = vmatpush1.bf16.msra.mxu0 %v3650
        %3686 = vmatprep.subr.bf16.mxu0 0
        %3687 = vmatpush1.bf16.msra.mxu0 %v3649
        %3688 = vmatprep.subr.bf16.mxu0 0
        %3689 = vmatpush1.bf16.msra.mxu0 %v3648
        %3690 = vmatprep.subr.bf16.mxu0 0
        %3691 = vmatpush1.bf16.msra.mxu0 %v3647
        %3692 = vmatprep.subr.bf16.mxu0 0
        %3693 = vmatpush1.bf16.msra.mxu0 %v3646
        %3694 = vmatprep.subr.bf16.mxu0 0
        %3695 = vmatpush2.bf16.msra.mxu0 %v3661
        %3696 = vmatprep.subr.bf16.mxu0 0
        %3697 = vmatpush2.bf16.msra.mxu0 %v3660
        %3698 = vmatprep.subr.bf16.mxu0 0
        %3699 = vmatpush2.bf16.msra.mxu0 %v3659
        %3700 = vmatprep.subr.bf16.mxu0 0
        %3701 = vmatpush2.bf16.msra.mxu0 %v3658
        %3702 = vmatprep.subr.bf16.mxu0 0
        %3703 = vmatpush2.bf16.msra.mxu0 %v3657
        %3704 = vmatprep.subr.bf16.mxu0 0
        %3705 = vmatpush2.bf16.msra.mxu0 %v3656
        %3706 = vmatprep.subr.bf16.mxu0 0
        %3707 = vmatpush2.bf16.msra.mxu0 %v3655
        %3708 = vmatprep.subr.bf16.mxu0 0
        %3709 = vmatpush2.bf16.msra.mxu0 %v3654
        %3710 = vmatprep.mubr.bf16.mxu0 %v3542
        %3711 = vmatmul.mubr.bf16.gmra.mxu0 %v3526
        %v3712 = vpop.f32.mrf.mxu0
        %v3713 = vadd.f32 0.0, %v3712
        %v3714 = vpop.f32.mrf.mxu0
        %v3715 = vpop.f32.mrf.mxu0
        %v3716 = vadd.f32 0.0, %v3715
        %v3717 = vpop.f32.mrf.mxu0
        %3718 = vmatprep.mubr.bf16.mxu0 %v3543
        %3719 = vmatmul.mubr.bf16.gmra.mxu0 %v3527
        %v3720 = vpop.f32.mrf.mxu0
        %v3721 = vadd.f32 0.0, %v3720
        %v3722 = vpop.f32.mrf.mxu0
        %v3723 = vpop.f32.mrf.mxu0
        %v3724 = vadd.f32 0.0, %v3723
        %v3725 = vpop.f32.mrf.mxu0
        %3726 = vmatprep.mubr.bf16.mxu0 %v3544
        %3727 = vmatmul.mubr.bf16.gmra.mxu0 %v3528
        %v3728 = vpop.f32.mrf.mxu0
        %v3729 = vadd.f32 0.0, %v3728
        %v3730 = vpop.f32.mrf.mxu0
        %v3731 = vpop.f32.mrf.mxu0
        %v3732 = vadd.f32 0.0, %v3731
        %v3733 = vpop.f32.mrf.mxu0
        %3734 = vmatprep.mubr.bf16.mxu0 %v3545
        %3735 = vmatmul.mubr.bf16.gmra.mxu0 %v3529
        %v3736 = vpop.f32.mrf.mxu0
        %v3737 = vadd.f32 0.0, %v3736
        %v3738 = vpop.f32.mrf.mxu0
        %v3739 = vpop.f32.mrf.mxu0
        %v3740 = vadd.f32 0.0, %v3739
        %v3741 = vpop.f32.mrf.mxu0
        %3742 = vdwg.mxu0
        %v3743 = vadd.f32 %v3325, %v3713
        %v3744 = vadd.f32 %v3326, %v3716
        %v3745 = vadd.f32 %v3327, %v3721
        %v3746 = vadd.f32 %v3328, %v3724
        %v3747 = vadd.f32 %v3329, %v3729
        %v3748 = vadd.f32 %v3330, %v3732
        %v3749 = vadd.f32 %v3331, %v3737
        %v3750 = vadd.f32 %v3332, %v3740
        %v3751 = vld [vmem:[%s3333 + $0x4] sm:$0x3]
        %v3752 = vld [vmem:[%s3333 + $0xc] sm:$0x3]
        %v3753 = vld [vmem:[%s3333 + $0x14] sm:$0x3]
        %v3754 = vld [vmem:[%s3333 + $0x1c] sm:$0x3]
        %v3755 = vld [vmem:[%s3333 + $0x24] sm:$0x3]
        %v3756 = vld [vmem:[%s3333 + $0x2c] sm:$0x3]
        %v3757 = vld [vmem:[%s3333 + $0x34] sm:$0x3]
        %v3758 = vld [vmem:[%s3333 + $0x3c] sm:$0x3]
        %v3760 = vshrl.u32 %v3462, 16
        %v3762 = vrot.slane %v3760, 5
        %v3763 = vshll.u32 %v3462, 16
        %v3765 = vrot.slane %v3763, 6
        %v3766 = vor.u32 %v3762, %v3765
        %v3767 = vrot.slane %v3766, 4
        %v3769 = vshrl.u32 %v3751, 16
        %v3771 = vrot.slane %v3769, 5
        %v3772 = vshll.u32 %v3751, 16
        %v3774 = vrot.slane %v3772, 6
        %v3775 = vor.u32 %v3771, %v3774
        %v3776 = vsel %vm2233, %v3767, %v3775
        %v3778 = vshrl.u32 %v3463, 16
        %v3780 = vrot.slane %v3778, 5
        %v3781 = vshll.u32 %v3463, 16
        %v3783 = vrot.slane %v3781, 6
        %v3784 = vor.u32 %v3780, %v3783
        %v3785 = vrot.slane %v3784, 4
        %v3787 = vshrl.u32 %v3752, 16
        %v3789 = vrot.slane %v3787, 5
        %v3790 = vshll.u32 %v3752, 16
        %v3792 = vrot.slane %v3790, 6
        %v3793 = vor.u32 %v3789, %v3792
        %v3794 = vsel %vm2233, %v3785, %v3793
        %v3796 = vshrl.u32 %v3464, 16
        %v3798 = vrot.slane %v3796, 5
        %v3799 = vshll.u32 %v3464, 16
        %v3801 = vrot.slane %v3799, 6
        %v3802 = vor.u32 %v3798, %v3801
        %v3803 = vrot.slane %v3802, 4
        %v3805 = vshrl.u32 %v3753, 16
        %v3807 = vrot.slane %v3805, 5
        %v3808 = vshll.u32 %v3753, 16
        %v3810 = vrot.slane %v3808, 6
        %v3811 = vor.u32 %v3807, %v3810
        %v3812 = vsel %vm2233, %v3803, %v3811
        %v3814 = vshrl.u32 %v3465, 16
        %v3816 = vrot.slane %v3814, 5
        %v3817 = vshll.u32 %v3465, 16
        %v3819 = vrot.slane %v3817, 6
        %v3820 = vor.u32 %v3816, %v3819
        %v3821 = vrot.slane %v3820, 4
        %v3823 = vshrl.u32 %v3754, 16
        %v3825 = vrot.slane %v3823, 5
        %v3826 = vshll.u32 %v3754, 16
        %v3828 = vrot.slane %v3826, 6
        %v3829 = vor.u32 %v3825, %v3828
        %v3830 = vsel %vm2233, %v3821, %v3829
        %v3832 = vshrl.u32 %v3466, 16
        %v3834 = vrot.slane %v3832, 5
        %v3835 = vshll.u32 %v3466, 16
        %v3837 = vrot.slane %v3835, 6
        %v3838 = vor.u32 %v3834, %v3837
        %v3839 = vrot.slane %v3838, 4
        %v3841 = vshrl.u32 %v3755, 16
        %v3843 = vrot.slane %v3841, 5
        %v3844 = vshll.u32 %v3755, 16
        %v3846 = vrot.slane %v3844, 6
        %v3847 = vor.u32 %v3843, %v3846
        %v3848 = vsel %vm2233, %v3839, %v3847
        %v3850 = vshrl.u32 %v3467, 16
        %v3852 = vrot.slane %v3850, 5
        %v3853 = vshll.u32 %v3467, 16
        %v3855 = vrot.slane %v3853, 6
        %v3856 = vor.u32 %v3852, %v3855
        %v3857 = vrot.slane %v3856, 4
        %v3859 = vshrl.u32 %v3756, 16
        %v3861 = vrot.slane %v3859, 5
        %v3862 = vshll.u32 %v3756, 16
        %v3864 = vrot.slane %v3862, 6
        %v3865 = vor.u32 %v3861, %v3864
        %v3866 = vsel %vm2233, %v3857, %v3865
        %v3868 = vshrl.u32 %v3468, 16
        %v3870 = vrot.slane %v3868, 5
        %v3871 = vshll.u32 %v3468, 16
        %v3873 = vrot.slane %v3871, 6
        %v3874 = vor.u32 %v3870, %v3873
        %v3875 = vrot.slane %v3874, 4
        %v3877 = vshrl.u32 %v3757, 16
        %v3879 = vrot.slane %v3877, 5
        %v3880 = vshll.u32 %v3757, 16
        %v3882 = vrot.slane %v3880, 6
        %v3883 = vor.u32 %v3879, %v3882
        %v3884 = vsel %vm2233, %v3875, %v3883
        %v3886 = vshrl.u32 %v3469, 16
        %v3888 = vrot.slane %v3886, 5
        %v3889 = vshll.u32 %v3469, 16
        %v3891 = vrot.slane %v3889, 6
        %v3892 = vor.u32 %v3888, %v3891
        %v3893 = vrot.slane %v3892, 4
        %v3895 = vshrl.u32 %v3758, 16
        %v3897 = vrot.slane %v3895, 5
        %v3898 = vshll.u32 %v3758, 16
        %v3900 = vrot.slane %v3898, 6
        %v3901 = vor.u32 %v3897, %v3900
        %v3902 = vsel %vm2233, %v3893, %v3901
        %v3903 = vld [vmem:[#allocation3 + $0x200] sm:$0xf]
        %v3904 = vld [vmem:[#allocation3 + $0x204] sm:$0xf]
        %v3905 = vld [vmem:[#allocation3 + $0x208] sm:$0xf]
        %v3906 = vld [vmem:[#allocation3 + $0x20c] sm:$0xf]
        %v3907 = vld [vmem:[#allocation3 + $0x210] sm:$0xf]
        %v3908 = vld [vmem:[#allocation3 + $0x214] sm:$0xf]
        %v3909 = vld [vmem:[#allocation3 + $0x218] sm:$0xf]
        %v3910 = vld [vmem:[#allocation3 + $0x21c] sm:$0xf]
        %v3911 = vld [vmem:[#allocation3 + $0x220] sm:$0xf]
        %v3912 = vld [vmem:[#allocation3 + $0x224] sm:$0xf]
        %v3913 = vld [vmem:[#allocation3 + $0x228] sm:$0xf]
        %v3914 = vld [vmem:[#allocation3 + $0x22c] sm:$0xf]
        %v3915 = vld [vmem:[#allocation3 + $0x230] sm:$0xf]
        %v3916 = vld [vmem:[#allocation3 + $0x234] sm:$0xf]
        %v3917 = vld [vmem:[#allocation3 + $0x238] sm:$0xf]
        %v3918 = vld [vmem:[#allocation3 + $0x23c] sm:$0xf]
        %v3919 = vunpack.c.l.b16 %v3776
        %v3920 = vunpack.c.l.b16 %v3794
        %v3921 = vunpack.c.l.b16 %v3812
        %v3922 = vunpack.c.l.b16 %v3830
        %v3923 = vunpack.c.l.b16 %v3848
        %v3924 = vunpack.c.l.b16 %v3866
        %v3925 = vunpack.c.l.b16 %v3884
        %v3926 = vunpack.c.l.b16 %v3902
        %v3927 = vpack.c.b16 %v3920, %v3919
        %v3928 = vpack.c.b16 %v3922, %v3921
        %v3929 = vpack.c.b16 %v3924, %v3923
        %v3930 = vpack.c.b16 %v3926, %v3925
        %v3951 = vunpack.c.l.b16 %v3903
        %v3952 = vunpack.c.l.b16 %v3904
        %v3953 = vunpack.c.l.b16 %v3905
        %v3954 = vunpack.c.l.b16 %v3906
        %v3955 = vunpack.c.l.b16 %v3907
        %v3956 = vunpack.c.l.b16 %v3908
        %v3957 = vunpack.c.l.b16 %v3909
        %v3958 = vunpack.c.l.b16 %v3910
        %v3959 = vunpack.c.l.b16 %v3911
        %v3960 = vunpack.c.l.b16 %v3912
        %v3961 = vunpack.c.l.b16 %v3913
        %v3962 = vunpack.c.l.b16 %v3914
        %v3963 = vunpack.c.l.b16 %v3915
        %v3964 = vunpack.c.l.b16 %v3916
        %v3965 = vunpack.c.l.b16 %v3917
        %v3966 = vunpack.c.l.b16 %v3918
        %v3967 = vpack.c.b16 %v3952, %v3951
        %v3968 = vpack.c.b16 %v3954, %v3953
        %v3969 = vpack.c.b16 %v3956, %v3955
        %v3970 = vpack.c.b16 %v3958, %v3957
        %v3971 = vpack.c.b16 %v3960, %v3959
        %v3972 = vpack.c.b16 %v3962, %v3961
        %v3973 = vpack.c.b16 %v3964, %v3963
        %v3974 = vpack.c.b16 %v3966, %v3965
        %3983 = vmatprep.subr.bf16.mxu0 0
        %3984 = vmatpush1.bf16.msra.mxu0 %v3974
        %3985 = vmatprep.subr.bf16.mxu0 0
        %3986 = vmatpush1.bf16.msra.mxu0 %v3973
        %3987 = vmatprep.subr.bf16.mxu0 0
        %3988 = vmatpush1.bf16.msra.mxu0 %v3972
        %3989 = vmatprep.subr.bf16.mxu0 0
        %3990 = vmatpush1.bf16.msra.mxu0 %v3971
        %3991 = vmatprep.subr.bf16.mxu0 0
        %3992 = vmatpush1.bf16.msra.mxu0 %v3970
        %3993 = vmatprep.subr.bf16.mxu0 0
        %3994 = vmatpush1.bf16.msra.mxu0 %v3969
        %3995 = vmatprep.subr.bf16.mxu0 0
        %3996 = vmatpush1.bf16.msra.mxu0 %v3968
        %3997 = vmatprep.subr.bf16.mxu0 0
        %3998 = vmatpush1.bf16.msra.mxu0 %v3967
        %3999 = vmatprep.subr.bf16.mxu0 0
        %4000 = vmatpush2.bf16.msra.mxu0 0
        %4001 = vmatprep.subr.bf16.mxu0 0
        %4002 = vmatpush2.bf16.msra.mxu0 0
        %4003 = vmatprep.subr.bf16.mxu0 0
        %4004 = vmatpush2.bf16.msra.mxu0 0
        %4005 = vmatprep.subr.bf16.mxu0 0
        %4006 = vmatpush2.bf16.msra.mxu0 0
        %4007 = vmatprep.subr.bf16.mxu0 0
        %4008 = vmatpush2.bf16.msra.mxu0 0
        %4009 = vmatprep.subr.bf16.mxu0 0
        %4010 = vmatpush2.bf16.msra.mxu0 0
        %4011 = vmatprep.subr.bf16.mxu0 0
        %4012 = vmatpush2.bf16.msra.mxu0 0
        %4013 = vmatprep.subr.bf16.mxu0 0
        %4014 = vmatpush2.bf16.msra.mxu0 0
        %4015 = vmatprep.mubr.bf16.mxu0 0
        %4016 = vmatmul.mubr.bf16.gmra.mxu0 %v3927
        %v4017 = vpop.f32.mrf.mxu0
        %v4018 = vadd.f32 0.0, %v4017
        %v4019 = vpop.f32.mrf.mxu0
        %v4020 = vpop.f32.mrf.mxu0
        %v4021 = vadd.f32 0.0, %v4020
        %v4022 = vpop.f32.mrf.mxu0
        %4023 = vmatprep.mubr.bf16.mxu0 0
        %4024 = vmatmul.mubr.bf16.gmra.mxu0 %v3928
        %v4025 = vpop.f32.mrf.mxu0
        %v4026 = vadd.f32 0.0, %v4025
        %v4027 = vpop.f32.mrf.mxu0
        %v4028 = vpop.f32.mrf.mxu0
        %v4029 = vadd.f32 0.0, %v4028
        %v4030 = vpop.f32.mrf.mxu0
        %4031 = vmatprep.mubr.bf16.mxu0 0
        %4032 = vmatmul.mubr.bf16.gmra.mxu0 %v3929
        %v4033 = vpop.f32.mrf.mxu0
        %v4034 = vadd.f32 0.0, %v4033
        %v4035 = vpop.f32.mrf.mxu0
        %v4036 = vpop.f32.mrf.mxu0
        %v4037 = vadd.f32 0.0, %v4036
        %v4038 = vpop.f32.mrf.mxu0
        %4039 = vmatprep.mubr.bf16.mxu0 0
        %4040 = vmatmul.mubr.bf16.gmra.mxu0 %v3930
        %v4041 = vpop.f32.mrf.mxu0
        %v4042 = vadd.f32 0.0, %v4041
        %v4043 = vpop.f32.mrf.mxu0
        %v4044 = vpop.f32.mrf.mxu0
        %v4045 = vadd.f32 0.0, %v4044
        %v4046 = vpop.f32.mrf.mxu0
        %4047 = vdwg.mxu0
        %v4048 = vadd.f32 %v3743, %v4018
        %v4049 = vadd.f32 %v3744, %v4021
        %v4050 = vadd.f32 %v3745, %v4026
        %v4051 = vadd.f32 %v3746, %v4029
        %v4052 = vadd.f32 %v3747, %v4034
        %v4053 = vadd.f32 %v3748, %v4037
        %v4054 = vadd.f32 %v3749, %v4042
        %v4055 = vadd.f32 %v3750, %v4045
        %v4056 = vld [vmem:[%s4] sm:$0x1]
        %v4058 = vlaneseq
        %v4059 = vshrl.u32 %v4058, 7
        %v4060 = vsub.s32 0, %v4059
        %v4061 = vrot.slane %v4056, %v4060
        %v4063 = vadd.f32 %v4048, %v4061
        %v4064 = vadd.f32 %v4049, %v4061
        %v4065 = vadd.f32 %v4050, %v4061
        %v4066 = vadd.f32 %v4051, %v4061
        %v4067 = vadd.f32 %v4052, %v4061
        %v4068 = vadd.f32 %v4053, %v4061
        %v4069 = vadd.f32 %v4054, %v4061
        %v4070 = vadd.f32 %v4055, %v4061
        %v4071 = vld [vmem:[%s921] sm:$0xf]
        %v4072 = vld [vmem:[%s921 + $0x8] sm:$0xf]
        %v4073 = vld [vmem:[%s921 + $0x10] sm:$0xf]
        %v4074 = vld [vmem:[%s921 + $0x18] sm:$0xf]
        %v4075 = vld [vmem:[%s921 + $0x20] sm:$0xf]
        %v4076 = vld [vmem:[%s921 + $0x28] sm:$0xf]
        %v4077 = vld [vmem:[%s921 + $0x30] sm:$0xf]
        %v4078 = vld [vmem:[%s921 + $0x38] sm:$0xf]
        %v4079 = vld [vmem:[%s5] sm:$0xf]
        %v4080 = vld [vmem:[%s5 + $0x4] sm:$0xf]
        %v4081 = vld [vmem:[%s5 + $0x8] sm:$0xf]
        %v4082 = vld [vmem:[%s5 + $0xc] sm:$0xf]
        %v4083 = vld [vmem:[%s5 + $0x10] sm:$0xf]
        %v4084 = vld [vmem:[%s5 + $0x14] sm:$0xf]
        %v4085 = vld [vmem:[%s5 + $0x18] sm:$0xf]
        %v4086 = vld [vmem:[%s5 + $0x1c] sm:$0xf]
        %v4087 = vld [vmem:[%s5 + $0x20] sm:$0xf]
        %v4088 = vld [vmem:[%s5 + $0x24] sm:$0xf]
        %v4089 = vld [vmem:[%s5 + $0x28] sm:$0xf]
        %v4090 = vld [vmem:[%s5 + $0x2c] sm:$0xf]
        %v4091 = vld [vmem:[%s5 + $0x30] sm:$0xf]
        %v4092 = vld [vmem:[%s5 + $0x34] sm:$0xf]
        %v4093 = vld [vmem:[%s5 + $0x38] sm:$0xf]
        %v4094 = vld [vmem:[%s5 + $0x3c] sm:$0xf]
        %v4095 = vld [vmem:[%s6] sm:$0x1]
        %v4097 = vlaneseq
        %v4098 = vshrl.u32 %v4097, 7
        %v4099 = vsub.s32 0, %v4098
        %v4100 = vrot.slane %v4095, %v4099
        %v4110 = vunpack.c.l.b16 %v4071
        %v4111 = vunpack.c.l.b16 %v4072
        %v4112 = vunpack.c.l.b16 %v4073
        %v4113 = vunpack.c.l.b16 %v4074
        %v4114 = vunpack.c.l.b16 %v4075
        %v4115 = vunpack.c.l.b16 %v4076
        %v4116 = vunpack.c.l.b16 %v4077
        %v4117 = vunpack.c.l.b16 %v4078
        %v4118 = vpack.c.b16 %v4111, %v4110
        %v4119 = vpack.c.b16 %v4113, %v4112
        %v4120 = vpack.c.b16 %v4115, %v4114
        %v4121 = vpack.c.b16 %v4117, %v4116
        %v4142 = vunpack.c.l.b16 %v4079
        %v4143 = vunpack.c.l.b16 %v4080
        %v4144 = vunpack.c.l.b16 %v4081
        %v4145 = vunpack.c.l.b16 %v4082
        %v4146 = vunpack.c.l.b16 %v4083
        %v4147 = vunpack.c.l.b16 %v4084
        %v4148 = vunpack.c.l.b16 %v4085
        %v4149 = vunpack.c.l.b16 %v4086
        %v4150 = vunpack.c.l.b16 %v4087
        %v4151 = vunpack.c.l.b16 %v4088
        %v4152 = vunpack.c.l.b16 %v4089
        %v4153 = vunpack.c.l.b16 %v4090
        %v4154 = vunpack.c.l.b16 %v4091
        %v4155 = vunpack.c.l.b16 %v4092
        %v4156 = vunpack.c.l.b16 %v4093
        %v4157 = vunpack.c.l.b16 %v4094
        %v4158 = vpack.c.b16 %v4143, %v4142
        %v4159 = vpack.c.b16 %v4145, %v4144
        %v4160 = vpack.c.b16 %v4147, %v4146
        %v4161 = vpack.c.b16 %v4149, %v4148
        %v4162 = vpack.c.b16 %v4151, %v4150
        %v4163 = vpack.c.b16 %v4153, %v4152
        %v4164 = vpack.c.b16 %v4155, %v4154
        %v4165 = vpack.c.b16 %v4157, %v4156
        %4174 = vmatprep.subr.bf16.mxu0 0
        %4175 = vmatpush1.bf16.msra.mxu0 %v4165
        %4176 = vmatprep.subr.bf16.mxu0 0
        %4177 = vmatpush1.bf16.msra.mxu0 %v4164
        %4178 = vmatprep.subr.bf16.mxu0 0
        %4179 = vmatpush1.bf16.msra.mxu0 %v4163
        %4180 = vmatprep.subr.bf16.mxu0 0
        %4181 = vmatpush1.bf16.msra.mxu0 %v4162
        %4182 = vmatprep.subr.bf16.mxu0 0
        %4183 = vmatpush1.bf16.msra.mxu0 %v4161
        %4184 = vmatprep.subr.bf16.mxu0 0
        %4185 = vmatpush1.bf16.msra.mxu0 %v4160
        %4186 = vmatprep.subr.bf16.mxu0 0
        %4187 = vmatpush1.bf16.msra.mxu0 %v4159
        %4188 = vmatprep.subr.bf16.mxu0 0
        %4189 = vmatpush1.bf16.msra.mxu0 %v4158
        %4190 = vmatprep.subr.bf16.mxu0 0
        %4191 = vmatpush2.bf16.msra.mxu0 0
        %4192 = vmatprep.subr.bf16.mxu0 0
        %4193 = vmatpush2.bf16.msra.mxu0 0
        %4194 = vmatprep.subr.bf16.mxu0 0
        %4195 = vmatpush2.bf16.msra.mxu0 0
        %4196 = vmatprep.subr.bf16.mxu0 0
        %4197 = vmatpush2.bf16.msra.mxu0 0
        %4198 = vmatprep.subr.bf16.mxu0 0
        %4199 = vmatpush2.bf16.msra.mxu0 0
        %4200 = vmatprep.subr.bf16.mxu0 0
        %4201 = vmatpush2.bf16.msra.mxu0 0
        %4202 = vmatprep.subr.bf16.mxu0 0
        %4203 = vmatpush2.bf16.msra.mxu0 0
        %4204 = vmatprep.subr.bf16.mxu0 0
        %4205 = vmatpush2.bf16.msra.mxu0 0
        %4206 = vmatprep.mubr.bf16.mxu0 0
        %4207 = vmatmul.mubr.bf16.gmra.mxu0 %v4118
        %v4208 = vpop.f32.mrf.mxu0
        %v4209 = vadd.f32 %v4100, %v4208
        %v4210 = vpop.f32.mrf.mxu0
        %v4211 = vpop.f32.mrf.mxu0
        %v4212 = vadd.f32 %v4100, %v4211
        %v4213 = vpop.f32.mrf.mxu0
        %4214 = vmatprep.mubr.bf16.mxu0 0
        %4215 = vmatmul.mubr.bf16.gmra.mxu0 %v4119
        %v4216 = vpop.f32.mrf.mxu0
        %v4217 = vadd.f32 %v4100, %v4216
        %v4218 = vpop.f32.mrf.mxu0
        %v4219 = vpop.f32.mrf.mxu0
        %v4220 = vadd.f32 %v4100, %v4219
        %v4221 = vpop.f32.mrf.mxu0
        %4222 = vmatprep.mubr.bf16.mxu0 0
        %4223 = vmatmul.mubr.bf16.gmra.mxu0 %v4120
        %v4224 = vpop.f32.mrf.mxu0
        %v4225 = vadd.f32 %v4100, %v4224
        %v4226 = vpop.f32.mrf.mxu0
        %v4227 = vpop.f32.mrf.mxu0
        %v4228 = vadd.f32 %v4100, %v4227
        %v4229 = vpop.f32.mrf.mxu0
        %4230 = vmatprep.mubr.bf16.mxu0 0
        %4231 = vmatmul.mubr.bf16.gmra.mxu0 %v4121
        %v4232 = vpop.f32.mrf.mxu0
        %v4233 = vadd.f32 %v4100, %v4232
        %v4234 = vpop.f32.mrf.mxu0
        %v4235 = vpop.f32.mrf.mxu0
        %v4236 = vadd.f32 %v4100, %v4235
        %v4237 = vpop.f32.mrf.mxu0
        %4238 = vdwg.mxu0
        %v4239 = vadd.f32 %v4063, %v4209
        %v4240 = vadd.f32 %v4064, %v4212
        %v4241 = vadd.f32 %v4065, %v4217
        %v4242 = vadd.f32 %v4066, %v4220
        %v4243 = vadd.f32 %v4067, %v4225
        %v4244 = vadd.f32 %v4068, %v4228
        %v4245 = vadd.f32 %v4069, %v4233
        %v4246 = vadd.f32 %v4070, %v4236
        %v4247 = vmax.f32 %v4239, 0.0
        %v4248 = vmax.f32 %v4240, 0.0
        %v4249 = vmax.f32 %v4241, 0.0
        %v4250 = vmax.f32 %v4242, 0.0
        %v4251 = vmax.f32 %v4243, 0.0
        %v4252 = vmax.f32 %v4244, 0.0
        %v4253 = vmax.f32 %v4245, 0.0
        %v4254 = vmax.f32 %v4246, 0.0
        %v4255 = vpack.c.bf16 %v4247, %v4247
        %v4256 = vpack.c.bf16 %v4248, %v4248
        %v4257 = vpack.c.bf16 %v4249, %v4249
        %v4258 = vpack.c.bf16 %v4250, %v4250
        %v4259 = vpack.c.bf16 %v4251, %v4251
        %v4260 = vpack.c.bf16 %v4252, %v4252
        %v4261 = vpack.c.bf16 %v4253, %v4253
        %v4262 = vpack.c.bf16 %v4254, %v4254
        %4263 = vst [vmem:[%s289] sm:$0xf] %v4255
        %4264 = vst [vmem:[%s289 + $0x4] sm:$0xf] %v4256
        %4265 = vst [vmem:[%s289 + $0x8] sm:$0xf] %v4257
        %4266 = vst [vmem:[%s289 + $0xc] sm:$0xf] %v4258
        %4267 = vst [vmem:[%s289 + $0x10] sm:$0xf] %v4259
        %4268 = vst [vmem:[%s289 + $0x14] sm:$0xf] %v4260
        %4269 = vst [vmem:[%s289 + $0x18] sm:$0xf] %v4261
        %4270 = vst [vmem:[%s289 + $0x1c] sm:$0xf] %v4262
        %s4271 = sand.u32 %s182, 1
        %s4272 = scalar_lea.sflag [#allocation5], %s4271
        %s4273 = sand.u32 %s182, 1
        %s4274 = smul.addr %s4273, 32
        %s4275 = scalar_lea.vmem [#allocation6], %s4274
        // Predicated region
        $region53: #{tpu_custom_call.1} parent=47 // pred_check
          %p4276 = pneg %p192
        $region54: #{tpu_custom_call.1} parent=47 // pred_check_branch
          %4278 = sbr.rel (%p4276) target = $region56
        $region55: #{tpu_custom_call.1} parent=47 // pred_region
          %s4280 = ssub.s32 512, 512
          %4281 = vsyncadd %s4272, %s4280
          %s4282 = smul.addr %s22, 8
          %s4283 = smul.addr %s4282, 64
          %s4284 = scalar_lea.hbm %s7, %s4283
          %s4285 = sshll.u32 %s4275, 4
          %s4286 = int_to_ptr.vmem [resolvable:$true] %s4285
          %4291 = dma.vmem_to_hbm [thread:$0]  %s4286, 512, %s4284, %s4272, 64, 64, 4
        $region56: #{tpu_custom_call.1} parent=47 // pred_fallthru
          _
      $region48: #{tpu_custom_call.1} parent=5 // pred_fallthru
        _
      %p4292 = scmp.le.s32.totalorder 2, %s17
      // Predicated region
      $region57: #{tpu_custom_call.1} parent=5 // pred_check
        %p4293 = pneg %p4292
      $region58: #{tpu_custom_call.1} parent=5 // pred_check_branch
        %4295 = sbr.rel (%p4293) target = $region60
      $region59: #{tpu_custom_call.1} parent=5 // pred_region
        %s4296 = ssub.s32 %s17, 2
        // Predicated region
        $region61: #{tpu_custom_call.1} parent=59 // pred_check
          %p4297 = pneg %p198
        $region62: #{tpu_custom_call.1} parent=59 // pred_check_branch
          %4299 = sbr.rel (%p4297) target = $region64
        $region63: #{tpu_custom_call.1} parent=59 // pred_region
          %s4300 = sand.u32 %s183, 1
          %s4301 = scalar_lea.sflag [#allocation5], %s4300
          %s4302 = sand.u32 %s183, 1
          %s4303 = smul.addr %s4302, 32
          %s4304 = scalar_lea.vmem [#allocation6], %s4303
          %4305 = dma.done %s4301, 512
        $region64: #{tpu_custom_call.1} parent=59 // pred_fallthru
          _
      $region60: #{tpu_custom_call.1} parent=5 // pred_fallthru
        _
    $region6: #{tpu_custom_call.1} parent=1 // loop_footer
      %s21 = sadd.s32 1, %s17
    $region7: #{tpu_custom_call.1} parent=1 // loop_footer_branch
      %16 = sbr.rel target = $region3
    $region8: #{tpu_custom_call.1} parent=1 // loop_exit
      _
    %4306 = vsyncpa [#allocation4], 1
    %s4307 = scalar_lea.sflag [#allocation4], 1
    %4308 = vsyncpa %s4307, 1
    %4309 = vsyncpa [#allocation5], 1
    %s4310 = scalar_lea.sflag [#allocation5], 1
    %4311 = vsyncpa %s4310, 1

</llo_original>
